<compile_context>
chip_gen: v7x
topology: tpu7x:2x2x1
jax: 0.10.0
libtpu: 0.0.40
codegen_flags: <defaults>
</compile_context>

<pallas_src>
import functools

import numpy as np
import jax
import jax.numpy as jnp
from jax import lax
from jax.experimental import pallas as pl
from jax.experimental.pallas import tpu as pltpu


# --------------------------------------------------------------------------
# Fused Pallas kernel.  Slab convention: an (N, C, H, W) activation is a 2-D
# array with rows = (batch, y) and cols = (x, channel), channel fastest.
# Each grid step processes `tb` samples; all intermediates stay in VMEM.
# --------------------------------------------------------------------------
def _net4group4_kernel(slab1_ref, aux_ref, bw1_ref, bw2_ref, bw3_ref,
                       bw4_ref, bw5_ref, bias_ref, o_ref, *, tb):
    dot = functools.partial(jnp.dot, preferred_element_type=jnp.float32)
    n4 = tb * 4                                        # rows in this tile (y = 0..3 / sample)
    row = lax.broadcasted_iota(jnp.int32, (n4, 128), 0)
    y0 = (row % 4) == 0                                # first row of each sample
    y3 = (row % 4) == 3                                # last row of each sample

    # ---- stage 1: Conv2d(3,16,k=2,p=1) + MaxPool2d(2) + ReLU  (one fused dot) ---------
    # slab1 rows hold [x_row(2i-1) | x_row(2i) | x_row(2i+1)]; bw1 columns hold
    # [conv rows 2i | conv rows 2i+1], each with conv-col order (0,2,4,6,1,3,5,7),
    # so the whole 2x2 max-pool is two blocked lane maxes.
    c1 = dot(slab1_ref[...], bw1_ref[...])                       # (n4, 256)
    t = jnp.maximum(c1[:, 0:128], c1[:, 128:256])                # pool over row parity
    pooled = jnp.maximum(t[:, 0:64], t[:, 64:128])               # pool over col parity
    h1 = jnp.maximum(pooled + bias_ref[0:1, 0:64], 0.0)          # (n4, 64)

    # ---- stage 2: Conv2d(16,32,k=3,p=1) + folded BN1 + ReLU ---------------------------
    p = dot(h1, bw2_ref[...])                                    # (n4, 384) = [tap-1|tap0|tap+1]
    top = jnp.where(y0, 0.0, pltpu.roll(p[:, 0:128], 1, axis=0))        # row r <- p0[r-1]
    bot = jnp.where(y3, 0.0, pltpu.roll(p[:, 256:384], n4 - 1, axis=0))  # row r <- p2[r+1]
    h2 = jnp.maximum(p[:, 128:256] + top + bot + bias_ref[1:2, 0:128], 0.0)   # (n4, 128)

    # ---- stage 3: channel concat + (ConvTranspose2d(64,64,1,s=2) folded into conv3) ----
    # Upsample parity folded into 1x1 weights; even/odd output rows kept in separate
    # lane blocks (the 7x7 / 6x6 interleaved maps are never built).
    cat = jnp.concatenate([h2, aux_ref[...]], axis=1)            # (n4, 256)
    z = jnp.maximum(dot(cat, bw3_ref[...]) + bias_ref[2:3, 0:768], 0.0)   # [z_even | z_odd]

    # ---- stage 4: Conv2d(64,64,k=2) + folded BN2 + ReLU, even/odd rows separate -------
    q_e = dot(z[:, 0:384], bw4_ref[...])                         # (n4, 768) = [tap0 | tap1]
    q_o = dot(z[:, 384:768], bw4_ref[...])
    b4 = bias_ref[3:4, 0:384]
    h4_e = jnp.maximum(
        q_e[:, 0:384] + pltpu.roll(q_o[:, 384:768], n4 - 1, axis=0) + b4, 0.0)
    h4_u = jnp.maximum(q_o[:, 0:384] + q_e[:, 384:768] + b4, 0.0)   # odd rows, un-shifted

    # ---- stage 5: Conv2d(64,3,k=2) + Sigmoid; even/odd interleave deferred to wrapper --
    r_e = dot(h4_e, bw5_ref[...])                                # (n4, 256) = [tap0 | tap1]
    r_u = dot(h4_u, bw5_ref[...])
    b5 = bias_ref[4:5, 0:128]
    o_ref[:, 0:128] = jax.nn.sigmoid(
        r_e[:, 0:128] + pltpu.roll(r_u[:, 128:256], n4 - 1, axis=0) + b5)   # even out rows
    o_ref[:, 128:256] = jax.nn.sigmoid(
        pltpu.roll(r_u[:, 0:128] + r_e[:, 128:256], n4 - 1, axis=0) + b5)   # odd out rows


def net4group4_forward(prep, x, keypoints, embeddings):
    """Net4Group4.forward (eval-mode BN).  NCHW in / NCHW out, like PyTorch."""
    n = x.shape[0]
    tb = (n + (n % 2)) if n <= 16 else 32             # even batch tile (>=2)
    tb = max(tb, 2)
    n_pad = ((n + tb - 1) // tb) * tb
    if n_pad != n:
        padb = ((0, n_pad - n), (0, 0), (0, 0), (0, 0))
        x = jnp.pad(x, padb)
        keypoints = jnp.pad(keypoints, padb)
        embeddings = jnp.pad(embeddings, padb)

    # Stage-1 input slab built in HLO: per pooled row i of each sample the row holds
    # [x_row(2i-1) | x_row(2i) | x_row(2i+1)] (row -1 = zero pad), lane-padded 72 -> 128.
    xh = x.transpose(0, 2, 3, 1).reshape(n_pad, 8, 24)
    xp = jnp.pad(xh, ((0, 0), (1, 0), (0, 0)))                   # (n_pad, 9, 24)
    slab1 = jnp.concatenate([xp[:, 0:8:2], xp[:, 1:9:2], xp[:, 2:9:2]], axis=-1)
    slab1 = jnp.pad(slab1, ((0, 0), (0, 0), (0, 56))).reshape(n_pad * 4, 128)

    aux = jnp.concatenate([keypoints, embeddings], axis=1)       # (n_pad, 32, 4, 4)
    aux_slab = aux.transpose(0, 2, 3, 1).reshape(n_pad * 4, 128)

    r4 = tb * 4
    act_spec = lambda w: pl.BlockSpec((r4, w), lambda b: (b, 0))
    wgt_spec = lambda s: pl.BlockSpec(s, lambda b: (0, 0))        # VMEM-resident weights

    out = pl.pallas_call(
        functools.partial(_net4group4_kernel, tb=tb),
        out_shape=jax.ShapeDtypeStruct((n_pad * 4, 256), jnp.float32),
        grid=(n_pad // tb,),
        in_specs=[act_spec(128), act_spec(128),
                  wgt_spec(prep["bw1"].shape), wgt_spec(prep["bw2"].shape),
                  wgt_spec(prep["bw3"].shape), wgt_spec(prep["bw4"].shape),
                  wgt_spec(prep["bw5"].shape), wgt_spec(prep["bias"].shape)],
        out_specs=pl.BlockSpec((r4, 256), lambda b: (b, 0)),
        compiler_params=pltpu.CompilerParams(dimension_semantics=("parallel",)),
    )(slab1, aux_slab, prep["bw1"], prep["bw2"], prep["bw3"], prep["bw4"],
      prep["bw5"], prep["bias"])

    # De-interleave even/odd output rows and drop lane padding (pure HLO layout work).
    out = out.reshape(n_pad, 4, 2, 128)[:n, :2, :, :12]           # (n, m, parity, 4*3)
    return out.reshape(n, 4, 4, 3).transpose(0, 3, 1, 2)          # (n, 3, 4, 4)


# --------------------------------------------------------------------------
# One-time parameter preparation (outside the jitted forward).
# --------------------------------------------------------------------------
def _bn_fold(w, b, gamma, beta, mean, var, eps=1e-5):
    scale = gamma / np.sqrt(var + eps)
    return w * scale[:, None, None, None], (b - mean) * scale + beta


def prepare_params(raw):
    g = lambda k: np.asarray(raw[k], dtype=np.float32)

    w1, b1 = g("c1_w"), g("c1_b")                                  # (16,3,2,2)
    w2, b2 = _bn_fold(g("c2_w"), g("c2_b"), g("bn1_gamma"), g("bn1_beta"),
                      g("bn1_mean"), g("bn1_var"))                 # (32,16,3,3)
    wup, bup = g("up_w")[:, :, 0, 0], g("up_b")                    # (64 in, 64 out)
    w3, b3 = g("c3_w"), g("c3_b")                                  # (64,64,2,2)
    w4, b4 = _bn_fold(g("c4_w"), g("c4_b"), g("bn2_gamma"), g("bn2_beta"),
                      g("bn2_mean"), g("bn2_var"))                 # (64,64,2,2)
    w5, b5 = g("c5_w"), g("c5_b")                                  # (3,64,2,2)

    # Stage 1: one weight for the fused conv1+pool dot.
    #   rows: [A | B | C] input-row blocks (24 = 8 width * 3 ch each), padded 72 -> 128
    #   cols: [conv rows 2i | conv rows 2i+1] with conv-col order (0,2,4,6,1,3,5,7)
    ow_order = (0, 2, 4, 6, 1, 3, 5, 7)
    bw1 = np.zeros((128, 256), np.float32)
    for pos, ow in enumerate(ow_order):
        for dj in range(2):
            wi = ow + dj - 1
            if 0 <= wi < 8:
                ce, co = pos * 16, 128 + pos * 16
                bw1[wi * 3:wi * 3 + 3, ce:ce + 16] = w1[:, :, 0, dj].T            # A, di=0
                bw1[24 + wi * 3:24 + wi * 3 + 3, ce:ce + 16] = w1[:, :, 1, dj].T  # B, di=1
                bw1[24 + wi * 3:24 + wi * 3 + 3, co:co + 16] = w1[:, :, 0, dj].T  # B, di=0
                bw1[48 + wi * 3:48 + wi * 3 + 3, co:co + 16] = w1[:, :, 1, dj].T  # C, di=1

    # Stage 2: three width-banded row-taps packed along columns -> (64, 384).
    bw2 = np.zeros((64, 384), np.float32)
    for di in range(3):
        for wo in range(4):
            for dj in range(3):
                wi = wo + dj - 1
                if 0 <= wi < 4:
                    bw2[wi * 16:(wi + 1) * 16,
                        di * 128 + wo * 32:di * 128 + (wo + 1) * 32] = w2[:, :, di, dj].T

    # Stage 3: ConvTranspose2d(64,64,1,s=2) folded into conv3 -> parity 1x1 weights.
    m = np.zeros((2, 2, 64, 64), np.float32)
    for a in range(2):
        for pp in range(2):
            m[a, pp] = wup @ w3[:, :, a, pp].T                     # (cin_global, cout)
    b3eff = b3.copy()
    for a in range(2):
        for pp in range(2):
            b3eff = b3eff + w3[:, :, a, pp] @ bup
    # rows: cat slab cols [h2: j*32+c | aux: 128 + j*32 + (c-32)]
    # cols: [even output rows (a=0) | odd output rows (a=1)], each 6 x-pos * 64 ch.
    bw3 = np.zeros((256, 768), np.float32)
    for a in range(2):
        for q in range(6):
            blk = m[a, q % 2]
            j = (q + 1) // 2
            c0 = a * 384 + q * 64
            bw3[j * 32:(j + 1) * 32, c0:c0 + 64] = blk[0:32]
            bw3[128 + j * 32:128 + (j + 1) * 32, c0:c0 + 64] = blk[32:64]

    # Stage 4: two width-banded row-taps packed along columns, each padded 320 -> 384.
    bw4 = np.zeros((384, 768), np.float32)
    for di in range(2):
        for wo in range(5):
            for dj in range(2):
                wi = wo + dj
                bw4[wi * 64:(wi + 1) * 64,
                    di * 384 + wo * 64:di * 384 + (wo + 1) * 64] = w4[:, :, di, dj].T

    # Stage 5: two row-taps packed; 12 valid cols inside each 128-lane block (lane-dense).
    bw5 = np.zeros((384, 256), np.float32)
    for di in range(2):
        for wo in range(4):
            for dj in range(2):
                wi = wo + dj
                bw5[wi * 64:(wi + 1) * 64,
                    di * 128 + wo * 3:di * 128 + (wo + 1) * 3] = w5[:, :, di, dj].T

    # Single packed bias operand: one row per stage, tiled over width positions.
    bias = np.zeros((8, 768), np.float32)
    bias[0, :64] = np.tile(b1, 4)
    bias[1, :128] = np.tile(b2, 4)
    bias[2, :768] = np.tile(b3eff, 12)
    bias[3, :320] = np.tile(b4, 5)
    bias[4, :12] = np.tile(b5, 4)

    return {k: jnp.asarray(v, dtype=jnp.float32) for k, v in
            dict(bw1=bw1, bw2=bw2, bw3=bw3, bw4=bw4, bw5=bw5, bias=bias).items()}


# --------------------------------------------------------------------------
# Raw parameters (deterministic synthetic init, PyTorch-like uniform bounds)
# --------------------------------------------------------------------------
def init_params(key):
    def conv_init(k, o, c, kh, kw):
        k1, k2 = jax.random.split(k)
        bound = 1.0 / jnp.sqrt(c * kh * kw)
        w = jax.random.uniform(k1, (o, c, kh, kw), jnp.float32, -bound, bound)
        b = jax.random.uniform(k2, (o,), jnp.float32, -bound, bound)
        return w, b

    ks = jax.random.split(key, 16)
    p = {}
    p["c1_w"], p["c1_b"] = conv_init(ks[0], 16, 3, 2, 2)     # Conv2d(3,16,k=2,p=1)
    p["c2_w"], p["c2_b"] = conv_init(ks[1], 32, 16, 3, 3)    # Conv2d(16,32,k=3,p=1)
    p["bn1_gamma"] = 1.0 + 0.1 * jax.random.normal(ks[2], (32,), jnp.float32)
    p["bn1_beta"] = 0.1 * jax.random.normal(ks[3], (32,), jnp.float32)
    p["bn1_mean"] = 0.05 * jax.random.normal(ks[4], (32,), jnp.float32)
    p["bn1_var"] = jnp.abs(1.0 + 0.1 * jax.random.normal(ks[5], (32,), jnp.float32))
    bound = 1.0 / jnp.sqrt(64.0)                             # ConvTranspose2d(64,64,1,s=2)
    p["up_w"] = jax.random.uniform(ks[6], (64, 64, 1, 1), jnp.float32, -bound, bound)
    p["up_b"] = jax.random.uniform(ks[7], (64,), jnp.float32, -bound, bound)
    p["c3_w"], p["c3_b"] = conv_init(ks[8], 64, 64, 2, 2)    # Conv2d(64,64,k=2)
    p["c4_w"], p["c4_b"] = conv_init(ks[9], 64, 64, 2, 2)    # Conv2d(64,64,k=2)
    p["bn2_gamma"] = 1.0 + 0.1 * jax.random.normal(ks[10], (64,), jnp.float32)
    p["bn2_beta"] = 0.1 * jax.random.normal(ks[11], (64,), jnp.float32)
    p["bn2_mean"] = 0.05 * jax.random.normal(ks[12], (64,), jnp.float32)
    p["bn2_var"] = jnp.abs(1.0 + 0.1 * jax.random.normal(ks[13], (64,), jnp.float32))
    p["c5_w"], p["c5_b"] = conv_init(ks[14], 3, 64, 2, 2)    # Conv2d(64,3,k=2)
    return p


# --------------------------------------------------------------------------
# Pure-JAX reference (mirrors the PyTorch module op-for-op) for validation.
# --------------------------------------------------------------------------
def reference_forward(p, x, keypoints, embeddings):
    dn = ("NCHW", "OIHW", "NCHW")
    hp = lax.Precision.HIGHEST
    eps = 1e-5
    conv = lambda v, w, pad: lax.conv_general_dilated(
        v, w, (1, 1), pad, dimension_numbers=dn, precision=hp)
    h = conv(x, p["c1_w"], ((1, 1), (1, 1))) + p["c1_b"].reshape(1, -1, 1, 1)
    h = lax.reduce_window(h, -jnp.inf, lax.max, (1, 1, 2, 2), (1, 1, 2, 2), "VALID")
    h = jnp.maximum(h, 0.0)
    h = conv(h, p["c2_w"], ((1, 1), (1, 1))) + p["c2_b"].reshape(1, -1, 1, 1)
    h = ((h - p["bn1_mean"].reshape(1, -1, 1, 1))
         / jnp.sqrt(p["bn1_var"].reshape(1, -1, 1, 1) + eps)
         * p["bn1_gamma"].reshape(1, -1, 1, 1) + p["bn1_beta"].reshape(1, -1, 1, 1))
    h = jnp.maximum(h, 0.0)
    u = jnp.concatenate([h, keypoints, embeddings], axis=1)                 # (N,64,4,4)
    n = x.shape[0]
    wup = p["up_w"][:, :, 0, 0]
    core = jnp.einsum("nchw,co->nohw", u, wup, precision=hp) + p["up_b"].reshape(1, -1, 1, 1)
    up = jnp.broadcast_to(p["up_b"].reshape(1, -1, 1, 1), (n, 64, 7, 7))
    up = up.at[:, :, ::2, ::2].set(core)
    h = conv(up, p["c3_w"], "VALID")
    h = jnp.maximum(h + p["c3_b"].reshape(1, -1, 1, 1), 0.0)
    h = conv(h, p["c4_w"], "VALID") + p["c4_b"].reshape(1, -1, 1, 1)
    h = ((h - p["bn2_mean"].reshape(1, -1, 1, 1))
         / jnp.sqrt(p["bn2_var"].reshape(1, -1, 1, 1) + eps)
         * p["bn2_gamma"].reshape(1, -1, 1, 1) + p["bn2_beta"].reshape(1, -1, 1, 1))
    h = jnp.maximum(h, 0.0)
    h = conv(h, p["c5_w"], "VALID")
    return jax.nn.sigmoid(h + p["c5_b"].reshape(1, -1, 1, 1))


if __name__ == "__main__":
    key = jax.random.PRNGKey(0)
    kx, kk, ke, kparam = jax.random.split(key, 4)
    N = 2
    x = jax.random.normal(kx, (N, 3, 8, 8), jnp.float32)
    keypoints = jax.random.normal(kk, (N, 16, 4, 4), jnp.float32)
    embeddings = jax.random.normal(ke, (N, 16, 4, 4), jnp.float32)

    raw = init_params(kparam)
    prep = prepare_params(raw)          # one-time: BN fold + packed block-banded weights

    fwd = jax.jit(net4group4_forward)
    out = jax.block_until_ready(fwd(prep, x, keypoints, embeddings))

    ref = jax.block_until_ready(jax.jit(reference_forward)(raw, x, keypoints, embeddings))

    assert out.shape == (N, 3, 4, 4), out.shape
    assert out.dtype == jnp.float32
    assert bool(jnp.all(jnp.isfinite(out)))
    assert bool(jnp.all((out >= 0.0) & (out <= 1.0)))      # sigmoid range
    max_err = float(jnp.max(jnp.abs(out - ref)))
    assert max_err < 1e-4, f"kernel/reference mismatch: {max_err}"
    print("KERNEL_OK")
</pallas_src>

<mosaic_0001>
module attributes {stable_mosaic.version = 11 : i64} {
  func.func @_net4group4_kernel(%arg0: i32, %arg1: memref<8x128xf32, #tpu.memory_space<vmem>>, %arg2: memref<8x128xf32, #tpu.memory_space<vmem>>, %arg3: memref<128x256xf32, #tpu.memory_space<vmem>>, %arg4: memref<64x384xf32, #tpu.memory_space<vmem>>, %arg5: memref<256x768xf32, #tpu.memory_space<vmem>>, %arg6: memref<384x768xf32, #tpu.memory_space<vmem>>, %arg7: memref<384x256xf32, #tpu.memory_space<vmem>>, %arg8: memref<8x768xf32, #tpu.memory_space<vmem>>, %arg9: memref<8x256xf32, #tpu.memory_space<vmem>>) attributes {dimension_semantics = [#tpu.dimension_semantics<parallel>], iteration_bounds = array<i64: 1>, scalar_prefetch = 0 : i64, scratch_operands = 0 : i64, tpu.core_type = #tpu.core_type<tc>, window_params = [{transform_indices = @transform_0, window_bounds = array<i64: 8, 128>}, {transform_indices = @transform_1, window_bounds = array<i64: 8, 128>}, {pipeline_mode = #tpu.pipeline_mode<synchronous>, transform_indices = @transform_2, window_bounds = array<i64: 128, 256>}, {pipeline_mode = #tpu.pipeline_mode<synchronous>, transform_indices = @transform_3, window_bounds = array<i64: 64, 384>}, {pipeline_mode = #tpu.pipeline_mode<synchronous>, transform_indices = @transform_4, window_bounds = array<i64: 256, 768>}, {pipeline_mode = #tpu.pipeline_mode<synchronous>, transform_indices = @transform_5, window_bounds = array<i64: 384, 768>}, {pipeline_mode = #tpu.pipeline_mode<synchronous>, transform_indices = @transform_6, window_bounds = array<i64: 384, 256>}, {pipeline_mode = #tpu.pipeline_mode<synchronous>, transform_indices = @transform_7, window_bounds = array<i64: 8, 768>}, {transform_indices = @transform_8, window_bounds = array<i64: 8, 256>}]} {
    %0 = tpu.iota {dimensions = array<i32: 0>} : vector<8x128xi32>
    %c4_i32 = arith.constant 4 : i32
    %c0_i32 = arith.constant 0 : i32
    %1 = arith.cmpi eq, %c4_i32, %c0_i32 : i32
    %c1_i32 = arith.constant 1 : i32
    %2 = arith.select %1, %c1_i32, %c4_i32 : i32
    %3 = vector.broadcast %2 : i32 to vector<8x128xi32>
    %4 = arith.remsi %0, %3 : vector<8x128xi32>
    %c0_i32_0 = arith.constant 0 : i32
    %5 = vector.broadcast %c0_i32_0 : i32 to vector<8x128xi32>
    %6 = arith.cmpi ne, %4, %5 : vector<8x128xi32>
    %c0_i32_1 = arith.constant 0 : i32
    %7 = vector.broadcast %c0_i32_1 : i32 to vector<8x128xi32>
    %8 = arith.cmpi slt, %4, %7 : vector<8x128xi32>
    %c0_i32_2 = arith.constant 0 : i32
    %9 = arith.cmpi slt, %2, %c0_i32_2 : i32
    %10 = vector.broadcast %9 : i1 to vector<8x128xi1>
    %11 = vector.broadcast %10 : vector<8x128xi1> to vector<8x128xi1>
    %12 = arith.xori %8, %11 : vector<8x128xi1>
    %13 = arith.andi %12, %6 : vector<8x128xi1>
    %14 = vector.broadcast %2 : i32 to vector<8x128xi32>
    %15 = arith.addi %4, %14 : vector<8x128xi32>
    %16 = arith.select %13, %15, %4 : vector<8x128xi1>, vector<8x128xi32>
    %c0_i32_3 = arith.constant 0 : i32
    %17 = vector.broadcast %c0_i32_3 : i32 to vector<8x128xi32>
    %18 = arith.cmpi eq, %16, %17 : vector<8x128xi32>
    %c4_i32_4 = arith.constant 4 : i32
    %c0_i32_5 = arith.constant 0 : i32
    %19 = arith.cmpi eq, %c4_i32_4, %c0_i32_5 : i32
    %c1_i32_6 = arith.constant 1 : i32
    %20 = arith.select %19, %c1_i32_6, %c4_i32_4 : i32
    %21 = vector.broadcast %20 : i32 to vector<8x128xi32>
    %22 = arith.remsi %0, %21 : vector<8x128xi32>
    %c0_i32_7 = arith.constant 0 : i32
    %23 = vector.broadcast %c0_i32_7 : i32 to vector<8x128xi32>
    %24 = arith.cmpi ne, %22, %23 : vector<8x128xi32>
    %c0_i32_8 = arith.constant 0 : i32
    %25 = vector.broadcast %c0_i32_8 : i32 to vector<8x128xi32>
    %26 = arith.cmpi slt, %22, %25 : vector<8x128xi32>
    %c0_i32_9 = arith.constant 0 : i32
    %27 = arith.cmpi slt, %20, %c0_i32_9 : i32
    %28 = vector.broadcast %27 : i1 to vector<8x128xi1>
    %29 = vector.broadcast %28 : vector<8x128xi1> to vector<8x128xi1>
    %30 = arith.xori %26, %29 : vector<8x128xi1>
    %31 = arith.andi %30, %24 : vector<8x128xi1>
    %32 = vector.broadcast %20 : i32 to vector<8x128xi32>
    %33 = arith.addi %22, %32 : vector<8x128xi32>
    %34 = arith.select %31, %33, %22 : vector<8x128xi1>, vector<8x128xi32>
    %c3_i32 = arith.constant 3 : i32
    %35 = vector.broadcast %c3_i32 : i32 to vector<8x128xi32>
    %36 = arith.cmpi eq, %34, %35 : vector<8x128xi32>
    %c0 = arith.constant 0 : index
    %c0_10 = arith.constant 0 : index
    %37 = vector.load %arg1[%c0, %c0_10] : memref<8x128xf32, #tpu.memory_space<vmem>>, vector<8x128xf32>
    %c0_11 = arith.constant 0 : index
    %c0_12 = arith.constant 0 : index
    %38 = vector.load %arg3[%c0_11, %c0_12] : memref<128x256xf32, #tpu.memory_space<vmem>>, vector<128x256xf32>
    %cst = arith.constant dense<0.000000e+00> : vector<8x256xf32>
    %39 = tpu.matmul %37, %38, %cst {dimension_numbers = #tpu.dot_dimension_numbers<[1], [0], [0], [1], [0, 0, 1, 1], [], []>} : vector<8x128xf32>, vector<128x256xf32>, vector<8x256xf32> -> vector<8x256xf32>
    %40 = vector.extract_strided_slice %39 {offsets = [0, 0], sizes = [8, 128], strides = [1, 1]} : vector<8x256xf32> to vector<8x128xf32>
    %41 = vector.extract_strided_slice %39 {offsets = [0, 128], sizes = [8, 128], strides = [1, 1]} : vector<8x256xf32> to vector<8x128xf32>
    %42 = arith.maximumf %40, %41 : vector<8x128xf32>
    %43 = vector.extract_strided_slice %42 {offsets = [0, 0], sizes = [8, 64], strides = [1, 1]} : vector<8x128xf32> to vector<8x64xf32>
    %44 = vector.extract_strided_slice %42 {offsets = [0, 64], sizes = [8, 64], strides = [1, 1]} : vector<8x128xf32> to vector<8x64xf32>
    %45 = arith.maximumf %43, %44 : vector<8x64xf32>
    %c0_13 = arith.constant 0 : index
    %c0_14 = arith.constant 0 : index
    %46 = vector.load %arg8[%c0_13, %c0_14] : memref<8x768xf32, #tpu.memory_space<vmem>>, vector<1x64xf32>
    %47 = vector.broadcast %46 : vector<1x64xf32> to vector<8x64xf32>
    %48 = arith.addf %45, %47 : vector<8x64xf32>
    %cst_15 = arith.constant 0.000000e+00 : f32
    %49 = vector.broadcast %cst_15 : f32 to vector<8x64xf32>
    %50 = arith.maximumf %48, %49 : vector<8x64xf32>
    %c0_16 = arith.constant 0 : index
    %c0_17 = arith.constant 0 : index
    %51 = vector.load %arg4[%c0_16, %c0_17] : memref<64x384xf32, #tpu.memory_space<vmem>>, vector<64x384xf32>
    %cst_18 = arith.constant dense<0.000000e+00> : vector<8x384xf32>
    %52 = tpu.matmul %50, %51, %cst_18 {dimension_numbers = #tpu.dot_dimension_numbers<[1], [0], [0], [1], [0, 0, 1, 1], [], []>} : vector<8x64xf32>, vector<64x384xf32>, vector<8x384xf32> -> vector<8x384xf32>
    %53 = vector.extract_strided_slice %52 {offsets = [0, 0], sizes = [8, 128], strides = [1, 1]} : vector<8x384xf32> to vector<8x128xf32>
    %c1_i32_19 = arith.constant 1 : i32
    %54 = tpu.dynamic_rotate %53 by %c1_i32_19 dim 0 : vector<8x128xf32>, i32 -> vector<8x128xf32>
    %cst_20 = arith.constant 0.000000e+00 : f32
    %55 = vector.broadcast %cst_20 : f32 to vector<8x128xf32>
    %56 = arith.select %18, %55, %54 : vector<8x128xi1>, vector<8x128xf32>
    %57 = vector.extract_strided_slice %52 {offsets = [0, 256], sizes = [8, 128], strides = [1, 1]} : vector<8x384xf32> to vector<8x128xf32>
    %c7_i32 = arith.constant 7 : i32
    %58 = tpu.dynamic_rotate %57 by %c7_i32 dim 0 : vector<8x128xf32>, i32 -> vector<8x128xf32>
    %cst_21 = arith.constant 0.000000e+00 : f32
    %59 = vector.broadcast %cst_21 : f32 to vector<8x128xf32>
    %60 = arith.select %36, %59, %58 : vector<8x128xi1>, vector<8x128xf32>
    %61 = vector.extract_strided_slice %52 {offsets = [0, 128], sizes = [8, 128], strides = [1, 1]} : vector<8x384xf32> to vector<8x128xf32>
    %62 = arith.addf %61, %56 : vector<8x128xf32>
    %63 = arith.addf %62, %60 : vector<8x128xf32>
    %c1 = arith.constant 1 : index
    %c0_22 = arith.constant 0 : index
    %64 = vector.load %arg8[%c1, %c0_22] : memref<8x768xf32, #tpu.memory_space<vmem>>, vector<1x128xf32>
    %65 = vector.broadcast %64 : vector<1x128xf32> to vector<8x128xf32>
    %66 = arith.addf %63, %65 : vector<8x128xf32>
    %cst_23 = arith.constant 0.000000e+00 : f32
    %67 = vector.broadcast %cst_23 : f32 to vector<8x128xf32>
    %68 = arith.maximumf %66, %67 : vector<8x128xf32>
    %c0_24 = arith.constant 0 : index
    %c0_25 = arith.constant 0 : index
    %69 = vector.load %arg2[%c0_24, %c0_25] : memref<8x128xf32, #tpu.memory_space<vmem>>, vector<8x128xf32>
    %70 = tpu.concatenate %68, %69 in 1 : vector<8x128xf32>, vector<8x128xf32> -> vector<8x256xf32>
    %c0_26 = arith.constant 0 : index
    %c0_27 = arith.constant 0 : index
    %71 = vector.load %arg5[%c0_26, %c0_27] : memref<256x768xf32, #tpu.memory_space<vmem>>, vector<256x768xf32>
    %cst_28 = arith.constant dense<0.000000e+00> : vector<8x768xf32>
    %72 = tpu.matmul %70, %71, %cst_28 {dimension_numbers = #tpu.dot_dimension_numbers<[1], [0], [0], [1], [0, 0, 1, 1], [], []>} : vector<8x256xf32>, vector<256x768xf32>, vector<8x768xf32> -> vector<8x768xf32>
    %c2 = arith.constant 2 : index
    %c0_29 = arith.constant 0 : index
    %73 = vector.load %arg8[%c2, %c0_29] : memref<8x768xf32, #tpu.memory_space<vmem>>, vector<1x768xf32>
    %74 = vector.broadcast %73 : vector<1x768xf32> to vector<8x768xf32>
    %75 = arith.addf %72, %74 : vector<8x768xf32>
    %cst_30 = arith.constant 0.000000e+00 : f32
    %76 = vector.broadcast %cst_30 : f32 to vector<8x768xf32>
    %77 = arith.maximumf %75, %76 : vector<8x768xf32>
    %78 = vector.extract_strided_slice %77 {offsets = [0, 0], sizes = [8, 384], strides = [1, 1]} : vector<8x768xf32> to vector<8x384xf32>
    %c0_31 = arith.constant 0 : index
    %c0_32 = arith.constant 0 : index
    %79 = vector.load %arg6[%c0_31, %c0_32] : memref<384x768xf32, #tpu.memory_space<vmem>>, vector<384x768xf32>
    %cst_33 = arith.constant dense<0.000000e+00> : vector<8x768xf32>
    %80 = tpu.matmul %78, %79, %cst_33 {dimension_numbers = #tpu.dot_dimension_numbers<[1], [0], [0], [1], [0, 0, 1, 1], [], []>} : vector<8x384xf32>, vector<384x768xf32>, vector<8x768xf32> -> vector<8x768xf32>
    %81 = vector.extract_strided_slice %77 {offsets = [0, 384], sizes = [8, 384], strides = [1, 1]} : vector<8x768xf32> to vector<8x384xf32>
    %c0_34 = arith.constant 0 : index
    %c0_35 = arith.constant 0 : index
    %82 = vector.load %arg6[%c0_34, %c0_35] : memref<384x768xf32, #tpu.memory_space<vmem>>, vector<384x768xf32>
    %cst_36 = arith.constant dense<0.000000e+00> : vector<8x768xf32>
    %83 = tpu.matmul %81, %82, %cst_36 {dimension_numbers = #tpu.dot_dimension_numbers<[1], [0], [0], [1], [0, 0, 1, 1], [], []>} : vector<8x384xf32>, vector<384x768xf32>, vector<8x768xf32> -> vector<8x768xf32>
    %c3 = arith.constant 3 : index
    %c0_37 = arith.constant 0 : index
    %84 = vector.load %arg8[%c3, %c0_37] : memref<8x768xf32, #tpu.memory_space<vmem>>, vector<1x384xf32>
    %85 = vector.extract_strided_slice %80 {offsets = [0, 0], sizes = [8, 384], strides = [1, 1]} : vector<8x768xf32> to vector<8x384xf32>
    %86 = vector.extract_strided_slice %83 {offsets = [0, 384], sizes = [8, 384], strides = [1, 1]} : vector<8x768xf32> to vector<8x384xf32>
    %c7_i32_38 = arith.constant 7 : i32
    %87 = tpu.dynamic_rotate %86 by %c7_i32_38 dim 0 : vector<8x384xf32>, i32 -> vector<8x384xf32>
    %88 = arith.addf %85, %87 : vector<8x384xf32>
    %89 = vector.broadcast %84 : vector<1x384xf32> to vector<8x384xf32>
    %90 = arith.addf %88, %89 : vector<8x384xf32>
    %cst_39 = arith.constant 0.000000e+00 : f32
    %91 = vector.broadcast %cst_39 : f32 to vector<8x384xf32>
    %92 = arith.maximumf %90, %91 : vector<8x384xf32>
    %93 = vector.extract_strided_slice %83 {offsets = [0, 0], sizes = [8, 384], strides = [1, 1]} : vector<8x768xf32> to vector<8x384xf32>
    %94 = vector.extract_strided_slice %80 {offsets = [0, 384], sizes = [8, 384], strides = [1, 1]} : vector<8x768xf32> to vector<8x384xf32>
    %95 = arith.addf %93, %94 : vector<8x384xf32>
    %96 = vector.broadcast %84 : vector<1x384xf32> to vector<8x384xf32>
    %97 = arith.addf %95, %96 : vector<8x384xf32>
    %cst_40 = arith.constant 0.000000e+00 : f32
    %98 = vector.broadcast %cst_40 : f32 to vector<8x384xf32>
    %99 = arith.maximumf %97, %98 : vector<8x384xf32>
    %c0_41 = arith.constant 0 : index
    %c0_42 = arith.constant 0 : index
    %100 = vector.load %arg7[%c0_41, %c0_42] : memref<384x256xf32, #tpu.memory_space<vmem>>, vector<384x256xf32>
    %cst_43 = arith.constant dense<0.000000e+00> : vector<8x256xf32>
    %101 = tpu.matmul %92, %100, %cst_43 {dimension_numbers = #tpu.dot_dimension_numbers<[1], [0], [0], [1], [0, 0, 1, 1], [], []>} : vector<8x384xf32>, vector<384x256xf32>, vector<8x256xf32> -> vector<8x256xf32>
    %c0_44 = arith.constant 0 : index
    %c0_45 = arith.constant 0 : index
    %102 = vector.load %arg7[%c0_44, %c0_45] : memref<384x256xf32, #tpu.memory_space<vmem>>, vector<384x256xf32>
    %cst_46 = arith.constant dense<0.000000e+00> : vector<8x256xf32>
    %103 = tpu.matmul %99, %102, %cst_46 {dimension_numbers = #tpu.dot_dimension_numbers<[1], [0], [0], [1], [0, 0, 1, 1], [], []>} : vector<8x384xf32>, vector<384x256xf32>, vector<8x256xf32> -> vector<8x256xf32>
    %c4 = arith.constant 4 : index
    %c0_47 = arith.constant 0 : index
    %104 = vector.load %arg8[%c4, %c0_47] : memref<8x768xf32, #tpu.memory_space<vmem>>, vector<1x128xf32>
    %105 = vector.extract_strided_slice %101 {offsets = [0, 0], sizes = [8, 128], strides = [1, 1]} : vector<8x256xf32> to vector<8x128xf32>
    %106 = vector.extract_strided_slice %103 {offsets = [0, 128], sizes = [8, 128], strides = [1, 1]} : vector<8x256xf32> to vector<8x128xf32>
    %c7_i32_48 = arith.constant 7 : i32
    %107 = tpu.dynamic_rotate %106 by %c7_i32_48 dim 0 : vector<8x128xf32>, i32 -> vector<8x128xf32>
    %108 = arith.addf %105, %107 : vector<8x128xf32>
    %109 = vector.broadcast %104 : vector<1x128xf32> to vector<8x128xf32>
    %110 = arith.addf %108, %109 : vector<8x128xf32>
    %111 = arith.negf %110 : vector<8x128xf32>
    %112 = math.exp %111 : vector<8x128xf32>
    %cst_49 = arith.constant 1.000000e+00 : f32
    %113 = vector.broadcast %cst_49 : f32 to vector<8x128xf32>
    %114 = arith.addf %113, %112 : vector<8x128xf32>
    %115 = arith.divf %113, %114 : vector<8x128xf32>
    %c0_50 = arith.constant 0 : index
    %c0_51 = arith.constant 0 : index
    %116 = vector.load %arg9[%c0_50, %c0_51] : memref<8x256xf32, #tpu.memory_space<vmem>>, vector<8x128xf32>
    tpu.vector_store %arg9[%c0_50, %c0_51], %115 {strides = array<i32>} : memref<8x256xf32, #tpu.memory_space<vmem>>, vector<8x128xf32>,
    %117 = vector.extract_strided_slice %103 {offsets = [0, 0], sizes = [8, 128], strides = [1, 1]} : vector<8x256xf32> to vector<8x128xf32>
    %118 = vector.extract_strided_slice %101 {offsets = [0, 128], sizes = [8, 128], strides = [1, 1]} : vector<8x256xf32> to vector<8x128xf32>
    %119 = arith.addf %117, %118 : vector<8x128xf32>
    %c7_i32_52 = arith.constant 7 : i32
    %120 = tpu.dynamic_rotate %119 by %c7_i32_52 dim 0 : vector<8x128xf32>, i32 -> vector<8x128xf32>
    %121 = vector.broadcast %104 : vector<1x128xf32> to vector<8x128xf32>
    %122 = arith.addf %120, %121 : vector<8x128xf32>
    %123 = arith.negf %122 : vector<8x128xf32>
    %124 = math.exp %123 : vector<8x128xf32>
    %cst_53 = arith.constant 1.000000e+00 : f32
    %125 = vector.broadcast %cst_53 : f32 to vector<8x128xf32>
    %126 = arith.addf %125, %124 : vector<8x128xf32>
    %127 = arith.divf %125, %126 : vector<8x128xf32>
    %c0_54 = arith.constant 0 : index
    %c128 = arith.constant 128 : index
    %128 = vector.load %arg9[%c0_54, %c128] : memref<8x256xf32, #tpu.memory_space<vmem>>, vector<8x128xf32>
    tpu.vector_store %arg9[%c0_54, %c128], %127 {strides = array<i32>} : memref<8x256xf32, #tpu.memory_space<vmem>>, vector<8x128xf32>,
    return
  }
  func.func @transform_0(%arg0: i32) -> (i32, i32) {
    %c0_i32 = arith.constant 0 : i32
    %c0_i32_0 = arith.constant 0 : i32
    return %arg0, %c0_i32 : i32, i32
  }
  func.func @transform_1(%arg0: i32) -> (i32, i32) {
    %c0_i32 = arith.constant 0 : i32
    %c0_i32_0 = arith.constant 0 : i32
    return %arg0, %c0_i32 : i32, i32
  }
  func.func @transform_2(%arg0: i32) -> (i32, i32) {
    %c0_i32 = arith.constant 0 : i32
    %c0_i32_0 = arith.constant 0 : i32
    %c0_i32_1 = arith.constant 0 : i32
    return %c0_i32, %c0_i32_0 : i32, i32
  }
  func.func @transform_3(%arg0: i32) -> (i32, i32) {
    %c0_i32 = arith.constant 0 : i32
    %c0_i32_0 = arith.constant 0 : i32
    %c0_i32_1 = arith.constant 0 : i32
    return %c0_i32, %c0_i32_0 : i32, i32
  }
  func.func @transform_4(%arg0: i32) -> (i32, i32) {
    %c0_i32 = arith.constant 0 : i32
    %c0_i32_0 = arith.constant 0 : i32
    %c0_i32_1 = arith.constant 0 : i32
    return %c0_i32, %c0_i32_0 : i32, i32
  }
  func.func @transform_5(%arg0: i32) -> (i32, i32) {
    %c0_i32 = arith.constant 0 : i32
    %c0_i32_0 = arith.constant 0 : i32
    %c0_i32_1 = arith.constant 0 : i32
    return %c0_i32, %c0_i32_0 : i32, i32
  }
  func.func @transform_6(%arg0: i32) -> (i32, i32) {
    %c0_i32 = arith.constant 0 : i32
    %c0_i32_0 = arith.constant 0 : i32
    %c0_i32_1 = arith.constant 0 : i32
    return %c0_i32, %c0_i32_0 : i32, i32
  }
  func.func @transform_7(%arg0: i32) -> (i32, i32) {
    %c0_i32 = arith.constant 0 : i32
    %c0_i32_0 = arith.constant 0 : i32
    %c0_i32_1 = arith.constant 0 : i32
    return %c0_i32, %c0_i32_0 : i32, i32
  }
  func.func @transform_8(%arg0: i32) -> (i32, i32) {
    %c0_i32 = arith.constant 0 : i32
    %c0_i32_0 = arith.constant 0 : i32
    return %arg0, %c0_i32 : i32, i32
  }
}

</mosaic_0001>

<llo_original>
// kernel: net4group4_forward.1
$region0: #{net4group4_forward.1}
  #allocation0 [shape = 'u32[]', space=smem, size = 0x4, offset = 0x4, fixed_abs, tag = 'smem constant byte address 0x4 - core index']
  #allocation1 [shape = 'u32[144,128]{1,0:T(1,128)}', space=vmem, size = 0x12000, scoped, tag = 'internal scratch']
  %s0 = inlined_call_operand.vmem [shape: f32[8,128], index: 0, kind: input, shape index: {}]
  %s1 = inlined_call_operand.vmem [shape: f32[8,128], index: 1, kind: input, shape index: {}]
  %s2 = inlined_call_operand.hbm [shape: f32[128,256], index: 2, kind: input, shape index: {}]
  %s3 = inlined_call_operand.hbm [shape: f32[64,384], index: 3, kind: input, shape index: {}]
  %s4 = inlined_call_operand.hbm [shape: f32[256,768], index: 4, kind: input, shape index: {}]
  %s5 = inlined_call_operand.hbm [shape: f32[384,768], index: 5, kind: input, shape index: {}]
  %s6 = inlined_call_operand.hbm [shape: f32[384,256], index: 6, kind: input, shape index: {}]
  %s7 = inlined_call_operand.hbm [shape: f32[8,768], index: 7, kind: input, shape index: {}]
  %s8 = inlined_call_operand.vmem [shape: f32[8,256], index: 8, kind: output, shape index: {}]
  %s9 = sld [smem:[#allocation0]]
  $region66: #{net4group4_forward.1} parent=0
    _
  %s11 = ssub.s32 1, %s9
  %s12 = scalar_select 0, %s11, %s9
  $region1: #{net4group4_forward.1} parent=0
    #allocation2 [shape = 'u8[131072]{0}', space=vmem, size = 0x20000, scoped, tag = 'input window, operand 2, single buffered']
    #allocation3 [shape = 's32[1]{0}', space=sflag, size = 0x4, scoped, tag = 'scoped memory for net4group4_forward.1']
    #allocation4 [shape = 'u8[98304]{0}', space=vmem, size = 0x18000, scoped, tag = 'input window, operand 3, single buffered']
    #allocation5 [shape = 's32[1]{0}', space=sflag, size = 0x4, scoped, tag = 'scoped memory for net4group4_forward.1']
    #allocation6 [shape = 'u8[786432]{0}', space=vmem, size = 0xc0000, scoped, tag = 'input window, operand 4, single buffered']
    #allocation7 [shape = 'u8[1179648]{0}', space=vmem, size = 0x120000, scoped, tag = 'input window, operand 5, single buffered']
    #allocation8 [shape = 's32[1]{0}', space=sflag, size = 0x4, scoped, tag = 'scoped memory for net4group4_forward.1']
    #allocation9 [shape = 'u8[393216]{0}', space=vmem, size = 0x60000, scoped, tag = 'input window, operand 6, single buffered']
    #allocation10 [shape = 'u8[24576]{0}', space=vmem, size = 0x6000, scoped, tag = 'input window, operand 7, single buffered']
    #allocation11 [shape = 's32[1]{0}', space=sflag, size = 0x4, scoped, tag = 'scoped memory for net4group4_forward.1']
    %13 = vsyncpa [#allocation3], 0
    %14 = vsyncpa [#allocation5], 0
    %15 = vsyncpa [#allocation8], 0
    %16 = vsyncpa [#allocation11], 0
    // Predicated region
    $region2: #{net4group4_forward.1} parent=1 // pred_check
      _
    $region3: #{net4group4_forward.1} parent=1 // pred_check_branch
      %18 = sbr.rel (0) target = $region5
    $region4: #{net4group4_forward.1} parent=1 // pred_region
      _
    $region5: #{net4group4_forward.1} parent=1 // pred_fallthru
      _
    // Predicated region
    $region6: #{net4group4_forward.1} parent=1 // pred_check
      _
    $region7: #{net4group4_forward.1} parent=1 // pred_check_branch
      %20 = sbr.rel (0) target = $region9
    $region8: #{net4group4_forward.1} parent=1 // pred_region
      _
    $region9: #{net4group4_forward.1} parent=1 // pred_fallthru
      _
    // Predicated region
    $region10: #{net4group4_forward.1} parent=1 // pred_check
      _
    $region11: #{net4group4_forward.1} parent=1 // pred_check_branch
      %22 = sbr.rel (0) target = $region13
    $region12: #{net4group4_forward.1} parent=1 // pred_region
      %s24 = ssub.s32 4096, 4096
      %25 = vsyncadd [#allocation3], %s24
      %s26 = sshll.u32 [#allocation2], 4
      %s27 = int_to_ptr.vmem [resolvable:$true] %s26
      %32 = dma.hbm_to_vmem [thread:$0]  %s2, 4096, %s27, [#allocation3], 256, 256, 16
    $region13: #{net4group4_forward.1} parent=1 // pred_fallthru
      _
    // Predicated region
    $region14: #{net4group4_forward.1} parent=1 // pred_check
      _
    $region15: #{net4group4_forward.1} parent=1 // pred_check_branch
      %34 = sbr.rel (0) target = $region17
    $region16: #{net4group4_forward.1} parent=1 // pred_region
      %s36 = ssub.s32 3072, 3072
      %37 = vsyncadd [#allocation5], %s36
      %s38 = sshll.u32 [#allocation4], 4
      %s39 = int_to_ptr.vmem [resolvable:$true] %s38
      %44 = dma.hbm_to_vmem [thread:$0]  %s3, 3072, %s39, [#allocation5], 384, 384, 24
    $region17: #{net4group4_forward.1} parent=1 // pred_fallthru
      _
    // Predicated region
    $region18: #{net4group4_forward.1} parent=1 // pred_check
      _
    $region19: #{net4group4_forward.1} parent=1 // pred_check_branch
      %46 = sbr.rel (0) target = $region21
    $region20: #{net4group4_forward.1} parent=1 // pred_region
      %s48 = ssub.s32 24576, 24576
      %49 = vsyncadd [#allocation5], %s48
      %s50 = sshll.u32 [#allocation6], 4
      %s51 = int_to_ptr.vmem [resolvable:$true] %s50
      %56 = dma.hbm_to_vmem [thread:$0]  %s4, 24576, %s51, [#allocation5], 768, 768, 48
    $region21: #{net4group4_forward.1} parent=1 // pred_fallthru
      _
    // Predicated region
    $region22: #{net4group4_forward.1} parent=1 // pred_check
      _
    $region23: #{net4group4_forward.1} parent=1 // pred_check_branch
      %58 = sbr.rel (0) target = $region25
    $region24: #{net4group4_forward.1} parent=1 // pred_region
      %s60 = ssub.s32 36864, 36864
      %61 = vsyncadd [#allocation8], %s60
      %s62 = sshll.u32 [#allocation7], 4
      %s63 = int_to_ptr.vmem [resolvable:$true] %s62
      %68 = dma.hbm_to_vmem [thread:$0]  %s5, 36864, %s63, [#allocation8], 768, 768, 48
    $region25: #{net4group4_forward.1} parent=1 // pred_fallthru
      _
    // Predicated region
    $region26: #{net4group4_forward.1} parent=1 // pred_check
      _
    $region27: #{net4group4_forward.1} parent=1 // pred_check_branch
      %70 = sbr.rel (0) target = $region29
    $region28: #{net4group4_forward.1} parent=1 // pred_region
      %s72 = ssub.s32 12288, 12288
      %73 = vsyncadd [#allocation8], %s72
      %s74 = sshll.u32 [#allocation9], 4
      %s75 = int_to_ptr.vmem [resolvable:$true] %s74
      %80 = dma.hbm_to_vmem [thread:$0]  %s6, 12288, %s75, [#allocation8], 256, 256, 16
    $region29: #{net4group4_forward.1} parent=1 // pred_fallthru
      _
    // Predicated region
    $region30: #{net4group4_forward.1} parent=1 // pred_check
      _
    $region31: #{net4group4_forward.1} parent=1 // pred_check_branch
      %82 = sbr.rel (0) target = $region33
    $region32: #{net4group4_forward.1} parent=1 // pred_region
      %s84 = ssub.s32 768, 768
      %85 = vsyncadd [#allocation11], %s84
      %s87 = sshll.u32 [#allocation10], 4
      %s88 = int_to_ptr.vmem [resolvable:$true] %s87
      %90 = dma.hbm_to_vmem [thread:$0]  %s7, 768, %s88, [#allocation11]
    $region33: #{net4group4_forward.1} parent=1 // pred_fallthru
      _
    // Predicated region
    $region34: #{net4group4_forward.1} parent=1 // pred_check
      _
    $region35: #{net4group4_forward.1} parent=1 // pred_check_branch
      %92 = sbr.rel (0) target = $region37
    $region36: #{net4group4_forward.1} parent=1 // pred_region
      %93 = dma.done [#allocation3], 4096
    $region37: #{net4group4_forward.1} parent=1 // pred_fallthru
      _
    // Predicated region
    $region38: #{net4group4_forward.1} parent=1 // pred_check
      _
    $region39: #{net4group4_forward.1} parent=1 // pred_check_branch
      %95 = sbr.rel (0) target = $region41
    $region40: #{net4group4_forward.1} parent=1 // pred_region
      %96 = dma.done [#allocation5], 3072
    $region41: #{net4group4_forward.1} parent=1 // pred_fallthru
      _
    // Predicated region
    $region42: #{net4group4_forward.1} parent=1 // pred_check
      _
    $region43: #{net4group4_forward.1} parent=1 // pred_check_branch
      %98 = sbr.rel (0) target = $region45
    $region44: #{net4group4_forward.1} parent=1 // pred_region
      %99 = dma.done [#allocation5], 24576
    $region45: #{net4group4_forward.1} parent=1 // pred_fallthru
      _
    // Predicated region
    $region46: #{net4group4_forward.1} parent=1 // pred_check
      _
    $region47: #{net4group4_forward.1} parent=1 // pred_check_branch
      %101 = sbr.rel (0) target = $region49
    $region48: #{net4group4_forward.1} parent=1 // pred_region
      %102 = dma.done [#allocation8], 36864
    $region49: #{net4group4_forward.1} parent=1 // pred_fallthru
      _
    // Predicated region
    $region50: #{net4group4_forward.1} parent=1 // pred_check
      _
    $region51: #{net4group4_forward.1} parent=1 // pred_check_branch
      %104 = sbr.rel (0) target = $region53
    $region52: #{net4group4_forward.1} parent=1 // pred_region
      %105 = dma.done [#allocation8], 12288
    $region53: #{net4group4_forward.1} parent=1 // pred_fallthru
      _
    // Predicated region
    $region54: #{net4group4_forward.1} parent=1 // pred_check
      _
    $region55: #{net4group4_forward.1} parent=1 // pred_check_branch
      %107 = sbr.rel (0) target = $region57
    $region56: #{net4group4_forward.1} parent=1 // pred_region
      %108 = dma.done [#allocation11], 768
    $region57: #{net4group4_forward.1} parent=1 // pred_fallthru
      _
    %v109 = vlaneseq
    %v110 = vshrl.u32 %v109, 7
    %vm111 = vcmp.lt.s32.totalorder %v110, 0
    %v112 = vsub.s32 0, %v110
    %v113 = vsel %vm111, %v112, %v110
    %v114 = vshrl.u32 %v113, 2
    %v115 = vand.u32 %v113, 3
    %v116 = vsub.s32 0, %v115
    %v117 = vsel %vm111, %v116, %v115
    %vm118 = vcmp.ne.s32.totalorder %v117, 0
    %vm119 = vcmp.lt.s32.totalorder %v117, 0
    %vm120 = vmand %vm119, %vm118
    %v121 = vadd.s32 %v117, 4
    %v122 = vsel %vm120, %v121, %v117
    %vm123 = vcmp.eq.s32.totalorder %v122, 0
    %vm124 = vcmp.eq.s32.totalorder %v122, 3
    %v125 = vld [vmem:[%s0] sm:$0xff]
    %v126 = vld [vmem:[#allocation2] sm:$0xff]
    %v127 = vld [vmem:[#allocation2 + $0x8] sm:$0xff]
    %v128 = vld [vmem:[#allocation2 + $0x10] sm:$0xff]
    %v129 = vld [vmem:[#allocation2 + $0x18] sm:$0xff]
    %v130 = vld [vmem:[#allocation2 + $0x20] sm:$0xff]
    %v131 = vld [vmem:[#allocation2 + $0x28] sm:$0xff]
    %v132 = vld [vmem:[#allocation2 + $0x30] sm:$0xff]
    %v133 = vld [vmem:[#allocation2 + $0x38] sm:$0xff]
    %v134 = vld [vmem:[#allocation2 + $0x40] sm:$0xff]
    %v135 = vld [vmem:[#allocation2 + $0x48] sm:$0xff]
    %v136 = vld [vmem:[#allocation2 + $0x50] sm:$0xff]
    %v137 = vld [vmem:[#allocation2 + $0x58] sm:$0xff]
    %v138 = vld [vmem:[#allocation2 + $0x60] sm:$0xff]
    %v139 = vld [vmem:[#allocation2 + $0x68] sm:$0xff]
    %v140 = vld [vmem:[#allocation2 + $0x70] sm:$0xff]
    %v141 = vld [vmem:[#allocation2 + $0x78] sm:$0xff]
    %v142 = vld [vmem:[#allocation2 + $0x80] sm:$0xff]
    %v143 = vld [vmem:[#allocation2 + $0x88] sm:$0xff]
    %v144 = vld [vmem:[#allocation2 + $0x90] sm:$0xff]
    %v145 = vld [vmem:[#allocation2 + $0x98] sm:$0xff]
    %v146 = vld [vmem:[#allocation2 + $0xa0] sm:$0xff]
    %v147 = vld [vmem:[#allocation2 + $0xa8] sm:$0xff]
    %v148 = vld [vmem:[#allocation2 + $0xb0] sm:$0xff]
    %v149 = vld [vmem:[#allocation2 + $0xb8] sm:$0xff]
    %v150 = vld [vmem:[#allocation2 + $0xc0] sm:$0xff]
    %v151 = vld [vmem:[#allocation2 + $0xc8] sm:$0xff]
    %v152 = vld [vmem:[#allocation2 + $0xd0] sm:$0xff]
    %v153 = vld [vmem:[#allocation2 + $0xd8] sm:$0xff]
    %v154 = vld [vmem:[#allocation2 + $0xe0] sm:$0xff]
    %v155 = vld [vmem:[#allocation2 + $0xe8] sm:$0xff]
    %v156 = vld [vmem:[#allocation2 + $0xf0] sm:$0xff]
    %v157 = vld [vmem:[#allocation2 + $0xf8] sm:$0xff]
    %158 = vmatprep.subr.mxu0 %v127
    %159 = vmatpush1.msra.mxu0 %v126
    %160 = vmatprep.subr.mxu0 %v129
    %161 = vmatpush1.msra.mxu0 %v128
    %162 = vmatprep.subr.mxu0 %v131
    %163 = vmatpush1.msra.mxu0 %v130
    %164 = vmatprep.subr.mxu0 %v133
    %165 = vmatpush1.msra.mxu0 %v132
    %166 = vmatprep.subr.mxu0 %v135
    %167 = vmatpush1.msra.mxu0 %v134
    %168 = vmatprep.subr.mxu0 %v137
    %169 = vmatpush1.msra.mxu0 %v136
    %170 = vmatprep.subr.mxu0 %v139
    %171 = vmatpush1.msra.mxu0 %v138
    %172 = vmatprep.subr.mxu0 %v141
    %173 = vmatpush1.msra.mxu0 %v140
    %174 = vmatprep.subr.mxu0 %v143
    %175 = vmatpush1.msra.mxu0 %v142
    %176 = vmatprep.subr.mxu0 %v145
    %177 = vmatpush1.msra.mxu0 %v144
    %178 = vmatprep.subr.mxu0 %v147
    %179 = vmatpush1.msra.mxu0 %v146
    %180 = vmatprep.subr.mxu0 %v149
    %181 = vmatpush1.msra.mxu0 %v148
    %182 = vmatprep.subr.mxu0 %v151
    %183 = vmatpush1.msra.mxu0 %v150
    %184 = vmatprep.subr.mxu0 %v153
    %185 = vmatpush1.msra.mxu0 %v152
    %186 = vmatprep.subr.mxu0 %v155
    %187 = vmatpush1.msra.mxu0 %v154
    %188 = vmatprep.subr.mxu0 %v157
    %189 = vmatpush1.msra.mxu0 %v156
    %190 = vmatprep.subr.mxu0 0.0
    %191 = vmatpush1.msra.mxu0 0.0
    %192 = vmatprep.subr.mxu0 0.0
    %193 = vmatpush1.msra.mxu0 0.0
    %194 = vmatprep.subr.mxu0 0.0
    %195 = vmatpush1.msra.mxu0 0.0
    %196 = vmatprep.subr.mxu0 0.0
    %197 = vmatpush1.msra.mxu0 0.0
    %198 = vmatprep.subr.mxu0 0.0
    %199 = vmatpush1.msra.mxu0 0.0
    %200 = vmatprep.subr.mxu0 0.0
    %201 = vmatpush1.msra.mxu0 0.0
    %202 = vmatprep.subr.mxu0 0.0
    %203 = vmatpush1.msra.mxu0 0.0
    %204 = vmatprep.subr.mxu0 0.0
    %205 = vmatpush1.msra.mxu0 0.0
    %206 = vmatprep.subr.mxu0 0.0
    %207 = vmatpush1.msra.mxu0 0.0
    %208 = vmatprep.subr.mxu0 0.0
    %209 = vmatpush1.msra.mxu0 0.0
    %210 = vmatprep.subr.mxu0 0.0
    %211 = vmatpush1.msra.mxu0 0.0
    %212 = vmatprep.subr.mxu0 0.0
    %213 = vmatpush1.msra.mxu0 0.0
    %214 = vmatprep.subr.mxu0 0.0
    %215 = vmatpush1.msra.mxu0 0.0
    %216 = vmatprep.subr.mxu0 0.0
    %217 = vmatpush1.msra.mxu0 0.0
    %218 = vmatprep.subr.mxu0 0.0
    %219 = vmatpush1.msra.mxu0 0.0
    %220 = vmatprep.subr.mxu0 0.0
    %221 = vmatpush1.msra.mxu0 0.0
    %222 = vmatprep.mubr.f32.mxu0 0.0
    %223 = vmatmul.mubr.f32.gmra.mrb[0].mxu0 %v125
    %v224 = vpop.f32.mrb[0].mxu0
    %v225 = vadd.f32 0.0, %v224
    %v226 = vpop.f32.mrb[0].mxu0
    %v227 = vadd.f32 0.0, %v226
    %228 = vdwg.mxu0
    %v229 = vmax.f32 %v225, %v227
    %231 = vrot.lane.b32.xlu0 %v229, 64
    %v232 = vpop.permute.xlu0 %231
    %v234 = vmax.f32 %v229, %v232
    %v235 = vld [vmem:[#allocation10] ss:$0 sm:$0xff]
    %v236 = vadd.f32 %v234, %v235
    %v237 = vmax.f32 %v236, 0.0
    %v238 = vld [vmem:[#allocation4] sm:$0xff]
    %v239 = vld [vmem:[#allocation4 + $0x8] sm:$0xff]
    %v240 = vld [vmem:[#allocation4 + $0x10] sm:$0xff]
    %v241 = vld [vmem:[#allocation4 + $0x18] sm:$0xff]
    %v242 = vld [vmem:[#allocation4 + $0x20] sm:$0xff]
    %v243 = vld [vmem:[#allocation4 + $0x28] sm:$0xff]
    %v244 = vld [vmem:[#allocation4 + $0x30] sm:$0xff]
    %v245 = vld [vmem:[#allocation4 + $0x38] sm:$0xff]
    %v246 = vld [vmem:[#allocation4 + $0x40] sm:$0xff]
    %v247 = vld [vmem:[#allocation4 + $0x48] sm:$0xff]
    %v248 = vld [vmem:[#allocation4 + $0x50] sm:$0xff]
    %v249 = vld [vmem:[#allocation4 + $0x58] sm:$0xff]
    %v250 = vld [vmem:[#allocation4 + $0x60] sm:$0xff]
    %v251 = vld [vmem:[#allocation4 + $0x68] sm:$0xff]
    %v252 = vld [vmem:[#allocation4 + $0x70] sm:$0xff]
    %v253 = vld [vmem:[#allocation4 + $0x78] sm:$0xff]
    %v254 = vld [vmem:[#allocation4 + $0x80] sm:$0xff]
    %v255 = vld [vmem:[#allocation4 + $0x88] sm:$0xff]
    %v256 = vld [vmem:[#allocation4 + $0x90] sm:$0xff]
    %v257 = vld [vmem:[#allocation4 + $0x98] sm:$0xff]
    %v258 = vld [vmem:[#allocation4 + $0xa0] sm:$0xff]
    %v259 = vld [vmem:[#allocation4 + $0xa8] sm:$0xff]
    %v260 = vld [vmem:[#allocation4 + $0xb0] sm:$0xff]
    %v261 = vld [vmem:[#allocation4 + $0xb8] sm:$0xff]
    %vm262 = vcmask 523264
    %v264 = vsel %vm262, %v237, 0
    %266 = vmatprep.subr.mxu0 %v239
    %267 = vmatpush1.msra.mxu0 %v238
    %268 = vmatprep.subr.mxu0 %v242
    %269 = vmatpush1.msra.mxu0 %v241
    %270 = vmatprep.subr.mxu0 %v245
    %271 = vmatpush1.msra.mxu0 %v244
    %272 = vmatprep.subr.mxu0 %v248
    %273 = vmatpush1.msra.mxu0 %v247
    %274 = vmatprep.subr.mxu0 %v251
    %275 = vmatpush1.msra.mxu0 %v250
    %276 = vmatprep.subr.mxu0 %v254
    %277 = vmatpush1.msra.mxu0 %v253
    %278 = vmatprep.subr.mxu0 %v257
    %279 = vmatpush1.msra.mxu0 %v256
    %280 = vmatprep.subr.mxu0 %v260
    %281 = vmatpush1.msra.mxu0 %v259
    %282 = vmatprep.subr.mxu0 0.0
    %283 = vmatpush1.msra.mxu0 0.0
    %284 = vmatprep.subr.mxu0 0.0
    %285 = vmatpush1.msra.mxu0 0.0
    %286 = vmatprep.subr.mxu0 0.0
    %287 = vmatpush1.msra.mxu0 0.0
    %288 = vmatprep.subr.mxu0 0.0
    %289 = vmatpush1.msra.mxu0 0.0
    %290 = vmatprep.subr.mxu0 0.0
    %291 = vmatpush1.msra.mxu0 0.0
    %292 = vmatprep.subr.mxu0 0.0
    %293 = vmatpush1.msra.mxu0 0.0
    %294 = vmatprep.subr.mxu0 0.0
    %295 = vmatpush1.msra.mxu0 0.0
    %296 = vmatprep.subr.mxu0 0.0
    %297 = vmatpush1.msra.mxu0 0.0
    %298 = vmatprep.subr.mxu0 0.0
    %299 = vmatpush1.msra.mxu0 0.0
    %300 = vmatprep.subr.mxu0 0.0
    %301 = vmatpush1.msra.mxu0 0.0
    %302 = vmatprep.subr.mxu0 0.0
    %303 = vmatpush1.msra.mxu0 0.0
    %304 = vmatprep.subr.mxu0 0.0
    %305 = vmatpush1.msra.mxu0 0.0
    %306 = vmatprep.subr.mxu0 0.0
    %307 = vmatpush1.msra.mxu0 0.0
    %308 = vmatprep.subr.mxu0 0.0
    %309 = vmatpush1.msra.mxu0 0.0
    %310 = vmatprep.subr.mxu0 0.0
    %311 = vmatpush1.msra.mxu0 0.0
    %312 = vmatprep.subr.mxu0 0.0
    %313 = vmatpush1.msra.mxu0 0.0
    %314 = vmatprep.subr.mxu0 0.0
    %315 = vmatpush1.msra.mxu0 0.0
    %316 = vmatprep.subr.mxu0 0.0
    %317 = vmatpush1.msra.mxu0 0.0
    %318 = vmatprep.subr.mxu0 0.0
    %319 = vmatpush1.msra.mxu0 0.0
    %320 = vmatprep.subr.mxu0 0.0
    %321 = vmatpush1.msra.mxu0 0.0
    %322 = vmatprep.subr.mxu0 0.0
    %323 = vmatpush1.msra.mxu0 0.0
    %324 = vmatprep.subr.mxu0 0.0
    %325 = vmatpush1.msra.mxu0 0.0
    %326 = vmatprep.subr.mxu0 0.0
    %327 = vmatpush1.msra.mxu0 0.0
    %328 = vmatprep.subr.mxu0 0.0
    %329 = vmatpush1.msra.mxu0 0.0
    %330 = vmatprep.mubr.f32.mxu0 0.0
    %331 = vmatmul.mubr.f32.gmra.mrb[0].mxu0 %v264
    %v332 = vpop.f32.mrb[0].mxu0
    %v333 = vadd.f32 0.0, %v332
    %v334 = vpop.f32.mrb[0].mxu0
    %v335 = vadd.f32 0.0, %v334
    %336 = vdwg.mxu0
    %337 = vmatprep.subr.mxu0 0.0
    %338 = vmatpush1.msra.mxu0 %v240
    %339 = vmatprep.subr.mxu0 0.0
    %340 = vmatpush1.msra.mxu0 %v243
    %341 = vmatprep.subr.mxu0 0.0
    %342 = vmatpush1.msra.mxu0 %v246
    %343 = vmatprep.subr.mxu0 0.0
    %344 = vmatpush1.msra.mxu0 %v249
    %345 = vmatprep.subr.mxu0 0.0
    %346 = vmatpush1.msra.mxu0 %v252
    %347 = vmatprep.subr.mxu0 0.0
    %348 = vmatpush1.msra.mxu0 %v255
    %349 = vmatprep.subr.mxu0 0.0
    %350 = vmatpush1.msra.mxu0 %v258
    %351 = vmatprep.subr.mxu0 0.0
    %352 = vmatpush1.msra.mxu0 %v261
    %353 = vmatprep.subr.mxu0 0.0
    %354 = vmatpush1.msra.mxu0 0.0
    %355 = vmatprep.subr.mxu0 0.0
    %356 = vmatpush1.msra.mxu0 0.0
    %357 = vmatprep.subr.mxu0 0.0
    %358 = vmatpush1.msra.mxu0 0.0
    %359 = vmatprep.subr.mxu0 0.0
    %360 = vmatpush1.msra.mxu0 0.0
    %361 = vmatprep.subr.mxu0 0.0
    %362 = vmatpush1.msra.mxu0 0.0
    %363 = vmatprep.subr.mxu0 0.0
    %364 = vmatpush1.msra.mxu0 0.0
    %365 = vmatprep.subr.mxu0 0.0
    %366 = vmatpush1.msra.mxu0 0.0
    %367 = vmatprep.subr.mxu0 0.0
    %368 = vmatpush1.msra.mxu0 0.0
    %369 = vmatprep.subr.mxu0 0.0
    %370 = vmatpush1.msra.mxu0 0.0
    %371 = vmatprep.subr.mxu0 0.0
    %372 = vmatpush1.msra.mxu0 0.0
    %373 = vmatprep.subr.mxu0 0.0
    %374 = vmatpush1.msra.mxu0 0.0
    %375 = vmatprep.subr.mxu0 0.0
    %376 = vmatpush1.msra.mxu0 0.0
    %377 = vmatprep.subr.mxu0 0.0
    %378 = vmatpush1.msra.mxu0 0.0
    %379 = vmatprep.subr.mxu0 0.0
    %380 = vmatpush1.msra.mxu0 0.0
    %381 = vmatprep.subr.mxu0 0.0
    %382 = vmatpush1.msra.mxu0 0.0
    %383 = vmatprep.subr.mxu0 0.0
    %384 = vmatpush1.msra.mxu0 0.0
    %385 = vmatprep.subr.mxu0 0.0
    %386 = vmatpush1.msra.mxu0 0.0
    %387 = vmatprep.subr.mxu0 0.0
    %388 = vmatpush1.msra.mxu0 0.0
    %389 = vmatprep.subr.mxu0 0.0
    %390 = vmatpush1.msra.mxu0 0.0
    %391 = vmatprep.subr.mxu0 0.0
    %392 = vmatpush1.msra.mxu0 0.0
    %393 = vmatprep.subr.mxu0 0.0
    %394 = vmatpush1.msra.mxu0 0.0
    %395 = vmatprep.subr.mxu0 0.0
    %396 = vmatpush1.msra.mxu0 0.0
    %397 = vmatprep.subr.mxu0 0.0
    %398 = vmatpush1.msra.mxu0 0.0
    %399 = vmatprep.subr.mxu0 0.0
    %400 = vmatpush1.msra.mxu0 0.0
    %401 = vmatprep.mubr.f32.mxu0 0.0
    %402 = vmatmul.mubr.f32.gmra.mrb[0].mxu0 %v264
    %v403 = vpop.f32.mrb[0].mxu0
    %v404 = vadd.f32 0.0, %v403
    %v405 = vpop.f32.mrb[0].mxu0
    %406 = vdwg.mxu0
    %v407 = vrot.slane %v333, 7
    %v408 = vsel %vm123, 0.0, %v407
    %v409 = vrot.slane %v404, 1
    %v410 = vsel %vm124, 0.0, %v409
    %v411 = vadd.f32 %v335, %v408
    %v412 = vadd.f32 %v411, %v410
    %v413 = vld [vmem:[#allocation10 + $0x1] ss:$0 sm:$0xff]
    %v414 = vadd.f32 %v412, %v413
    %v415 = vmax.f32 %v414, 0.0
    %v416 = vld [vmem:[%s1] sm:$0xff]
    %v417 = vld [vmem:[#allocation6] sm:$0xff]
    %v418 = vld [vmem:[#allocation6 + $0x8] sm:$0xff]
    %v419 = vld [vmem:[#allocation6 + $0x10] sm:$0xff]
    %v420 = vld [vmem:[#allocation6 + $0x18] sm:$0xff]
    %v421 = vld [vmem:[#allocation6 + $0x20] sm:$0xff]
    %v422 = vld [vmem:[#allocation6 + $0x28] sm:$0xff]
    %v423 = vld [vmem:[#allocation6 + $0x30] sm:$0xff]
    %v424 = vld [vmem:[#allocation6 + $0x38] sm:$0xff]
    %v425 = vld [vmem:[#allocation6 + $0x40] sm:$0xff]
    %v426 = vld [vmem:[#allocation6 + $0x48] sm:$0xff]
    %v427 = vld [vmem:[#allocation6 + $0x50] sm:$0xff]
    %v428 = vld [vmem:[#allocation6 + $0x58] sm:$0xff]
    %v429 = vld [vmem:[#allocation6 + $0x60] sm:$0xff]
    %v430 = vld [vmem:[#allocation6 + $0x68] sm:$0xff]
    %v431 = vld [vmem:[#allocation6 + $0x70] sm:$0xff]
    %v432 = vld [vmem:[#allocation6 + $0x78] sm:$0xff]
    %v433 = vld [vmem:[#allocation6 + $0x80] sm:$0xff]
    %v434 = vld [vmem:[#allocation6 + $0x88] sm:$0xff]
    %v435 = vld [vmem:[#allocation6 + $0x90] sm:$0xff]
    %v436 = vld [vmem:[#allocation6 + $0x98] sm:$0xff]
    %v437 = vld [vmem:[#allocation6 + $0xa0] sm:$0xff]
    %v438 = vld [vmem:[#allocation6 + $0xa8] sm:$0xff]
    %v439 = vld [vmem:[#allocation6 + $0xb0] sm:$0xff]
    %v440 = vld [vmem:[#allocation6 + $0xb8] sm:$0xff]
    %v441 = vld [vmem:[#allocation6 + $0xc0] sm:$0xff]
    %v442 = vld [vmem:[#allocation6 + $0xc8] sm:$0xff]
    %v443 = vld [vmem:[#allocation6 + $0xd0] sm:$0xff]
    %v444 = vld [vmem:[#allocation6 + $0xd8] sm:$0xff]
    %v445 = vld [vmem:[#allocation6 + $0xe0] sm:$0xff]
    %v446 = vld [vmem:[#allocation6 + $0xe8] sm:$0xff]
    %v447 = vld [vmem:[#allocation6 + $0xf0] sm:$0xff]
    %v448 = vld [vmem:[#allocation6 + $0xf8] sm:$0xff]
    %v449 = vld [vmem:[#allocation6 + $0x100] sm:$0xff]
    %v450 = vld [vmem:[#allocation6 + $0x108] sm:$0xff]
    %v451 = vld [vmem:[#allocation6 + $0x110] sm:$0xff]
    %v452 = vld [vmem:[#allocation6 + $0x118] sm:$0xff]
    %v453 = vld [vmem:[#allocation6 + $0x120] sm:$0xff]
    %v454 = vld [vmem:[#allocation6 + $0x128] sm:$0xff]
    %v455 = vld [vmem:[#allocation6 + $0x130] sm:$0xff]
    %v456 = vld [vmem:[#allocation6 + $0x138] sm:$0xff]
    %v457 = vld [vmem:[#allocation6 + $0x140] sm:$0xff]
    %v458 = vld [vmem:[#allocation6 + $0x148] sm:$0xff]
    %v459 = vld [vmem:[#allocation6 + $0x150] sm:$0xff]
    %v460 = vld [vmem:[#allocation6 + $0x158] sm:$0xff]
    %v461 = vld [vmem:[#allocation6 + $0x160] sm:$0xff]
    %v462 = vld [vmem:[#allocation6 + $0x168] sm:$0xff]
    %v463 = vld [vmem:[#allocation6 + $0x170] sm:$0xff]
    %v464 = vld [vmem:[#allocation6 + $0x178] sm:$0xff]
    %v465 = vld [vmem:[#allocation6 + $0x180] sm:$0xff]
    %v466 = vld [vmem:[#allocation6 + $0x188] sm:$0xff]
    %v467 = vld [vmem:[#allocation6 + $0x190] sm:$0xff]
    %v468 = vld [vmem:[#allocation6 + $0x198] sm:$0xff]
    %v469 = vld [vmem:[#allocation6 + $0x1a0] sm:$0xff]
    %v470 = vld [vmem:[#allocation6 + $0x1a8] sm:$0xff]
    %v471 = vld [vmem:[#allocation6 + $0x1b0] sm:$0xff]
    %v472 = vld [vmem:[#allocation6 + $0x1b8] sm:$0xff]
    %v473 = vld [vmem:[#allocation6 + $0x1c0] sm:$0xff]
    %v474 = vld [vmem:[#allocation6 + $0x1c8] sm:$0xff]
    %v475 = vld [vmem:[#allocation6 + $0x1d0] sm:$0xff]
    %v476 = vld [vmem:[#allocation6 + $0x1d8] sm:$0xff]
    %v477 = vld [vmem:[#allocation6 + $0x1e0] sm:$0xff]
    %v478 = vld [vmem:[#allocation6 + $0x1e8] sm:$0xff]
    %v479 = vld [vmem:[#allocation6 + $0x1f0] sm:$0xff]
    %v480 = vld [vmem:[#allocation6 + $0x1f8] sm:$0xff]
    %v481 = vld [vmem:[#allocation6 + $0x200] sm:$0xff]
    %v482 = vld [vmem:[#allocation6 + $0x208] sm:$0xff]
    %v483 = vld [vmem:[#allocation6 + $0x210] sm:$0xff]
    %v484 = vld [vmem:[#allocation6 + $0x218] sm:$0xff]
    %v485 = vld [vmem:[#allocation6 + $0x220] sm:$0xff]
    %v486 = vld [vmem:[#allocation6 + $0x228] sm:$0xff]
    %v487 = vld [vmem:[#allocation6 + $0x230] sm:$0xff]
    %v488 = vld [vmem:[#allocation6 + $0x238] sm:$0xff]
    %v489 = vld [vmem:[#allocation6 + $0x240] sm:$0xff]
    %v490 = vld [vmem:[#allocation6 + $0x248] sm:$0xff]
    %v491 = vld [vmem:[#allocation6 + $0x250] sm:$0xff]
    %v492 = vld [vmem:[#allocation6 + $0x258] sm:$0xff]
    %v493 = vld [vmem:[#allocation6 + $0x260] sm:$0xff]
    %v494 = vld [vmem:[#allocation6 + $0x268] sm:$0xff]
    %v495 = vld [vmem:[#allocation6 + $0x270] sm:$0xff]
    %v496 = vld [vmem:[#allocation6 + $0x278] sm:$0xff]
    %v497 = vld [vmem:[#allocation6 + $0x280] sm:$0xff]
    %v498 = vld [vmem:[#allocation6 + $0x288] sm:$0xff]
    %v499 = vld [vmem:[#allocation6 + $0x290] sm:$0xff]
    %v500 = vld [vmem:[#allocation6 + $0x298] sm:$0xff]
    %v501 = vld [vmem:[#allocation6 + $0x2a0] sm:$0xff]
    %v502 = vld [vmem:[#allocation6 + $0x2a8] sm:$0xff]
    %v503 = vld [vmem:[#allocation6 + $0x2b0] sm:$0xff]
    %v504 = vld [vmem:[#allocation6 + $0x2b8] sm:$0xff]
    %v505 = vld [vmem:[#allocation6 + $0x2c0] sm:$0xff]
    %v506 = vld [vmem:[#allocation6 + $0x2c8] sm:$0xff]
    %v507 = vld [vmem:[#allocation6 + $0x2d0] sm:$0xff]
    %v508 = vld [vmem:[#allocation6 + $0x2d8] sm:$0xff]
    %v509 = vld [vmem:[#allocation6 + $0x2e0] sm:$0xff]
    %v510 = vld [vmem:[#allocation6 + $0x2e8] sm:$0xff]
    %v511 = vld [vmem:[#allocation6 + $0x2f0] sm:$0xff]
    %v512 = vld [vmem:[#allocation6 + $0x2f8] sm:$0xff]
    %v513 = vld [vmem:[#allocation6 + $0x300] sm:$0xff]
    %v514 = vld [vmem:[#allocation6 + $0x308] sm:$0xff]
    %v515 = vld [vmem:[#allocation6 + $0x310] sm:$0xff]
    %v516 = vld [vmem:[#allocation6 + $0x318] sm:$0xff]
    %v517 = vld [vmem:[#allocation6 + $0x320] sm:$0xff]
    %v518 = vld [vmem:[#allocation6 + $0x328] sm:$0xff]
    %v519 = vld [vmem:[#allocation6 + $0x330] sm:$0xff]
    %v520 = vld [vmem:[#allocation6 + $0x338] sm:$0xff]
    %v521 = vld [vmem:[#allocation6 + $0x340] sm:$0xff]
    %v522 = vld [vmem:[#allocation6 + $0x348] sm:$0xff]
    %v523 = vld [vmem:[#allocation6 + $0x350] sm:$0xff]
    %v524 = vld [vmem:[#allocation6 + $0x358] sm:$0xff]
    %v525 = vld [vmem:[#allocation6 + $0x360] sm:$0xff]
    %v526 = vld [vmem:[#allocation6 + $0x368] sm:$0xff]
    %v527 = vld [vmem:[#allocation6 + $0x370] sm:$0xff]
    %v528 = vld [vmem:[#allocation6 + $0x378] sm:$0xff]
    %v529 = vld [vmem:[#allocation6 + $0x380] sm:$0xff]
    %v530 = vld [vmem:[#allocation6 + $0x388] sm:$0xff]
    %v531 = vld [vmem:[#allocation6 + $0x390] sm:$0xff]
    %v532 = vld [vmem:[#allocation6 + $0x398] sm:$0xff]
    %v533 = vld [vmem:[#allocation6 + $0x3a0] sm:$0xff]
    %v534 = vld [vmem:[#allocation6 + $0x3a8] sm:$0xff]
    %v535 = vld [vmem:[#allocation6 + $0x3b0] sm:$0xff]
    %v536 = vld [vmem:[#allocation6 + $0x3b8] sm:$0xff]
    %v537 = vld [vmem:[#allocation6 + $0x3c0] sm:$0xff]
    %v538 = vld [vmem:[#allocation6 + $0x3c8] sm:$0xff]
    %v539 = vld [vmem:[#allocation6 + $0x3d0] sm:$0xff]
    %v540 = vld [vmem:[#allocation6 + $0x3d8] sm:$0xff]
    %v541 = vld [vmem:[#allocation6 + $0x3e0] sm:$0xff]
    %v542 = vld [vmem:[#allocation6 + $0x3e8] sm:$0xff]
    %v543 = vld [vmem:[#allocation6 + $0x3f0] sm:$0xff]
    %v544 = vld [vmem:[#allocation6 + $0x3f8] sm:$0xff]
    %v545 = vld [vmem:[#allocation6 + $0x400] sm:$0xff]
    %v546 = vld [vmem:[#allocation6 + $0x408] sm:$0xff]
    %v547 = vld [vmem:[#allocation6 + $0x410] sm:$0xff]
    %v548 = vld [vmem:[#allocation6 + $0x418] sm:$0xff]
    %v549 = vld [vmem:[#allocation6 + $0x420] sm:$0xff]
    %v550 = vld [vmem:[#allocation6 + $0x428] sm:$0xff]
    %v551 = vld [vmem:[#allocation6 + $0x430] sm:$0xff]
    %v552 = vld [vmem:[#allocation6 + $0x438] sm:$0xff]
    %v553 = vld [vmem:[#allocation6 + $0x440] sm:$0xff]
    %v554 = vld [vmem:[#allocation6 + $0x448] sm:$0xff]
    %v555 = vld [vmem:[#allocation6 + $0x450] sm:$0xff]
    %v556 = vld [vmem:[#allocation6 + $0x458] sm:$0xff]
    %v557 = vld [vmem:[#allocation6 + $0x460] sm:$0xff]
    %v558 = vld [vmem:[#allocation6 + $0x468] sm:$0xff]
    %v559 = vld [vmem:[#allocation6 + $0x470] sm:$0xff]
    %v560 = vld [vmem:[#allocation6 + $0x478] sm:$0xff]
    %v561 = vld [vmem:[#allocation6 + $0x480] sm:$0xff]
    %v562 = vld [vmem:[#allocation6 + $0x488] sm:$0xff]
    %v563 = vld [vmem:[#allocation6 + $0x490] sm:$0xff]
    %v564 = vld [vmem:[#allocation6 + $0x498] sm:$0xff]
    %v565 = vld [vmem:[#allocation6 + $0x4a0] sm:$0xff]
    %v566 = vld [vmem:[#allocation6 + $0x4a8] sm:$0xff]
    %v567 = vld [vmem:[#allocation6 + $0x4b0] sm:$0xff]
    %v568 = vld [vmem:[#allocation6 + $0x4b8] sm:$0xff]
    %v569 = vld [vmem:[#allocation6 + $0x4c0] sm:$0xff]
    %v570 = vld [vmem:[#allocation6 + $0x4c8] sm:$0xff]
    %v571 = vld [vmem:[#allocation6 + $0x4d0] sm:$0xff]
    %v572 = vld [vmem:[#allocation6 + $0x4d8] sm:$0xff]
    %v573 = vld [vmem:[#allocation6 + $0x4e0] sm:$0xff]
    %v574 = vld [vmem:[#allocation6 + $0x4e8] sm:$0xff]
    %v575 = vld [vmem:[#allocation6 + $0x4f0] sm:$0xff]
    %v576 = vld [vmem:[#allocation6 + $0x4f8] sm:$0xff]
    %v577 = vld [vmem:[#allocation6 + $0x500] sm:$0xff]
    %v578 = vld [vmem:[#allocation6 + $0x508] sm:$0xff]
    %v579 = vld [vmem:[#allocation6 + $0x510] sm:$0xff]
    %v580 = vld [vmem:[#allocation6 + $0x518] sm:$0xff]
    %v581 = vld [vmem:[#allocation6 + $0x520] sm:$0xff]
    %v582 = vld [vmem:[#allocation6 + $0x528] sm:$0xff]
    %v583 = vld [vmem:[#allocation6 + $0x530] sm:$0xff]
    %v584 = vld [vmem:[#allocation6 + $0x538] sm:$0xff]
    %v585 = vld [vmem:[#allocation6 + $0x540] sm:$0xff]
    %v586 = vld [vmem:[#allocation6 + $0x548] sm:$0xff]
    %v587 = vld [vmem:[#allocation6 + $0x550] sm:$0xff]
    %v588 = vld [vmem:[#allocation6 + $0x558] sm:$0xff]
    %v589 = vld [vmem:[#allocation6 + $0x560] sm:$0xff]
    %v590 = vld [vmem:[#allocation6 + $0x568] sm:$0xff]
    %v591 = vld [vmem:[#allocation6 + $0x570] sm:$0xff]
    %v592 = vld [vmem:[#allocation6 + $0x578] sm:$0xff]
    %v593 = vld [vmem:[#allocation6 + $0x580] sm:$0xff]
    %v594 = vld [vmem:[#allocation6 + $0x588] sm:$0xff]
    %v595 = vld [vmem:[#allocation6 + $0x590] sm:$0xff]
    %v596 = vld [vmem:[#allocation6 + $0x598] sm:$0xff]
    %v597 = vld [vmem:[#allocation6 + $0x5a0] sm:$0xff]
    %v598 = vld [vmem:[#allocation6 + $0x5a8] sm:$0xff]
    %v599 = vld [vmem:[#allocation6 + $0x5b0] sm:$0xff]
    %v600 = vld [vmem:[#allocation6 + $0x5b8] sm:$0xff]
    %v601 = vld [vmem:[#allocation6 + $0x5c0] sm:$0xff]
    %v602 = vld [vmem:[#allocation6 + $0x5c8] sm:$0xff]
    %v603 = vld [vmem:[#allocation6 + $0x5d0] sm:$0xff]
    %v604 = vld [vmem:[#allocation6 + $0x5d8] sm:$0xff]
    %v605 = vld [vmem:[#allocation6 + $0x5e0] sm:$0xff]
    %v606 = vld [vmem:[#allocation6 + $0x5e8] sm:$0xff]
    %v607 = vld [vmem:[#allocation6 + $0x5f0] sm:$0xff]
    %v608 = vld [vmem:[#allocation6 + $0x5f8] sm:$0xff]
    %s609 = scalar_lea.vmem [#allocation10], 2
    %v610 = vld [vmem:[%s609] ss:$8 sm:$0xf]
    %v611 = vld [vmem:[%s609] ss:$8 sm:$0x30]
    %v612 = vor.u32 %v610, %v611
    %v614 = vlaneseq
    %v615 = vshrl.u32 %v614, 7
    %v616 = vsub.s32 0, %v615
    %v617 = vrot.slane %v612, %v616
    %v618 = vlaneseq
    %v619 = vshrl.u32 %v618, 7
    %v620 = vsub.s32 1, %v619
    %v621 = vrot.slane %v612, %v620
    %v622 = vlaneseq
    %v623 = vshrl.u32 %v622, 7
    %v624 = vsub.s32 2, %v623
    %v625 = vrot.slane %v612, %v624
    %v626 = vlaneseq
    %v627 = vshrl.u32 %v626, 7
    %v628 = vsub.s32 3, %v627
    %v629 = vrot.slane %v612, %v628
    %v630 = vlaneseq
    %v631 = vshrl.u32 %v630, 7
    %v632 = vsub.s32 4, %v631
    %v633 = vrot.slane %v612, %v632
    %v634 = vlaneseq
    %v635 = vshrl.u32 %v634, 7
    %v636 = vsub.s32 5, %v635
    %v637 = vrot.slane %v612, %v636
    %644 = vmatprep.subr.mxu0 %v418
    %645 = vmatpush1.msra.mxu0 %v417
    %646 = vmatprep.subr.mxu0 %v424
    %647 = vmatpush1.msra.mxu0 %v423
    %648 = vmatprep.subr.mxu0 %v430
    %649 = vmatpush1.msra.mxu0 %v429
    %650 = vmatprep.subr.mxu0 %v436
    %651 = vmatpush1.msra.mxu0 %v435
    %652 = vmatprep.subr.mxu0 %v442
    %653 = vmatpush1.msra.mxu0 %v441
    %654 = vmatprep.subr.mxu0 %v448
    %655 = vmatpush1.msra.mxu0 %v447
    %656 = vmatprep.subr.mxu0 %v454
    %657 = vmatpush1.msra.mxu0 %v453
    %658 = vmatprep.subr.mxu0 %v460
    %659 = vmatpush1.msra.mxu0 %v459
    %660 = vmatprep.subr.mxu0 %v466
    %661 = vmatpush1.msra.mxu0 %v465
    %662 = vmatprep.subr.mxu0 %v472
    %663 = vmatpush1.msra.mxu0 %v471
    %664 = vmatprep.subr.mxu0 %v478
    %665 = vmatpush1.msra.mxu0 %v477
    %666 = vmatprep.subr.mxu0 %v484
    %667 = vmatpush1.msra.mxu0 %v483
    %668 = vmatprep.subr.mxu0 %v490
    %669 = vmatpush1.msra.mxu0 %v489
    %670 = vmatprep.subr.mxu0 %v496
    %671 = vmatpush1.msra.mxu0 %v495
    %672 = vmatprep.subr.mxu0 %v502
    %673 = vmatpush1.msra.mxu0 %v501
    %674 = vmatprep.subr.mxu0 %v508
    %675 = vmatpush1.msra.mxu0 %v507
    %676 = vmatprep.subr.mxu0 %v514
    %677 = vmatpush1.msra.mxu0 %v513
    %678 = vmatprep.subr.mxu0 %v520
    %679 = vmatpush1.msra.mxu0 %v519
    %680 = vmatprep.subr.mxu0 %v526
    %681 = vmatpush1.msra.mxu0 %v525
    %682 = vmatprep.subr.mxu0 %v532
    %683 = vmatpush1.msra.mxu0 %v531
    %684 = vmatprep.subr.mxu0 %v538
    %685 = vmatpush1.msra.mxu0 %v537
    %686 = vmatprep.subr.mxu0 %v544
    %687 = vmatpush1.msra.mxu0 %v543
    %688 = vmatprep.subr.mxu0 %v550
    %689 = vmatpush1.msra.mxu0 %v549
    %690 = vmatprep.subr.mxu0 %v556
    %691 = vmatpush1.msra.mxu0 %v555
    %692 = vmatprep.subr.mxu0 %v562
    %693 = vmatpush1.msra.mxu0 %v561
    %694 = vmatprep.subr.mxu0 %v568
    %695 = vmatpush1.msra.mxu0 %v567
    %696 = vmatprep.subr.mxu0 %v574
    %697 = vmatpush1.msra.mxu0 %v573
    %698 = vmatprep.subr.mxu0 %v580
    %699 = vmatpush1.msra.mxu0 %v579
    %700 = vmatprep.subr.mxu0 %v586
    %701 = vmatpush1.msra.mxu0 %v585
    %702 = vmatprep.subr.mxu0 %v592
    %703 = vmatpush1.msra.mxu0 %v591
    %704 = vmatprep.subr.mxu0 %v598
    %705 = vmatpush1.msra.mxu0 %v597
    %706 = vmatprep.subr.mxu0 %v604
    %707 = vmatpush1.msra.mxu0 %v603
    %708 = vmatprep.mubr.f32.mxu0 %v416
    %709 = vmatmul.mubr.f32.gmra.mrb[0].mxu0 %v415
    %v710 = vpop.f32.mrb[0].mxu0
    %v711 = vadd.f32 %v617, %v710
    %v712 = vpop.f32.mrb[0].mxu0
    %v713 = vadd.f32 %v621, %v712
    %714 = vdwg.mxu0
    %715 = vmatprep.subr.mxu0 %v420
    %716 = vmatpush1.msra.mxu0 %v419
    %717 = vmatprep.subr.mxu0 %v426
    %718 = vmatpush1.msra.mxu0 %v425
    %719 = vmatprep.subr.mxu0 %v432
    %720 = vmatpush1.msra.mxu0 %v431
    %721 = vmatprep.subr.mxu0 %v438
    %722 = vmatpush1.msra.mxu0 %v437
    %723 = vmatprep.subr.mxu0 %v444
    %724 = vmatpush1.msra.mxu0 %v443
    %725 = vmatprep.subr.mxu0 %v450
    %726 = vmatpush1.msra.mxu0 %v449
    %727 = vmatprep.subr.mxu0 %v456
    %728 = vmatpush1.msra.mxu0 %v455
    %729 = vmatprep.subr.mxu0 %v462
    %730 = vmatpush1.msra.mxu0 %v461
    %731 = vmatprep.subr.mxu0 %v468
    %732 = vmatpush1.msra.mxu0 %v467
    %733 = vmatprep.subr.mxu0 %v474
    %734 = vmatpush1.msra.mxu0 %v473
    %735 = vmatprep.subr.mxu0 %v480
    %736 = vmatpush1.msra.mxu0 %v479
    %737 = vmatprep.subr.mxu0 %v486
    %738 = vmatpush1.msra.mxu0 %v485
    %739 = vmatprep.subr.mxu0 %v492
    %740 = vmatpush1.msra.mxu0 %v491
    %741 = vmatprep.subr.mxu0 %v498
    %742 = vmatpush1.msra.mxu0 %v497
    %743 = vmatprep.subr.mxu0 %v504
    %744 = vmatpush1.msra.mxu0 %v503
    %745 = vmatprep.subr.mxu0 %v510
    %746 = vmatpush1.msra.mxu0 %v509
    %747 = vmatprep.subr.mxu0 %v516
    %748 = vmatpush1.msra.mxu0 %v515
    %749 = vmatprep.subr.mxu0 %v522
    %750 = vmatpush1.msra.mxu0 %v521
    %751 = vmatprep.subr.mxu0 %v528
    %752 = vmatpush1.msra.mxu0 %v527
    %753 = vmatprep.subr.mxu0 %v534
    %754 = vmatpush1.msra.mxu0 %v533
    %755 = vmatprep.subr.mxu0 %v540
    %756 = vmatpush1.msra.mxu0 %v539
    %757 = vmatprep.subr.mxu0 %v546
    %758 = vmatpush1.msra.mxu0 %v545
    %759 = vmatprep.subr.mxu0 %v552
    %760 = vmatpush1.msra.mxu0 %v551
    %761 = vmatprep.subr.mxu0 %v558
    %762 = vmatpush1.msra.mxu0 %v557
    %763 = vmatprep.subr.mxu0 %v564
    %764 = vmatpush1.msra.mxu0 %v563
    %765 = vmatprep.subr.mxu0 %v570
    %766 = vmatpush1.msra.mxu0 %v569
    %767 = vmatprep.subr.mxu0 %v576
    %768 = vmatpush1.msra.mxu0 %v575
    %769 = vmatprep.subr.mxu0 %v582
    %770 = vmatpush1.msra.mxu0 %v581
    %771 = vmatprep.subr.mxu0 %v588
    %772 = vmatpush1.msra.mxu0 %v587
    %773 = vmatprep.subr.mxu0 %v594
    %774 = vmatpush1.msra.mxu0 %v593
    %775 = vmatprep.subr.mxu0 %v600
    %776 = vmatpush1.msra.mxu0 %v599
    %777 = vmatprep.subr.mxu0 %v606
    %778 = vmatpush1.msra.mxu0 %v605
    %779 = vmatprep.mubr.f32.mxu0 %v416
    %780 = vmatmul.mubr.f32.gmra.mrb[0].mxu0 %v415
    %v781 = vpop.f32.mrb[0].mxu0
    %v782 = vadd.f32 %v625, %v781
    %v783 = vpop.f32.mrb[0].mxu0
    %v784 = vadd.f32 %v629, %v783
    %785 = vdwg.mxu0
    %786 = vmatprep.subr.mxu0 %v422
    %787 = vmatpush1.msra.mxu0 %v421
    %788 = vmatprep.subr.mxu0 %v428
    %789 = vmatpush1.msra.mxu0 %v427
    %790 = vmatprep.subr.mxu0 %v434
    %791 = vmatpush1.msra.mxu0 %v433
    %792 = vmatprep.subr.mxu0 %v440
    %793 = vmatpush1.msra.mxu0 %v439
    %794 = vmatprep.subr.mxu0 %v446
    %795 = vmatpush1.msra.mxu0 %v445
    %796 = vmatprep.subr.mxu0 %v452
    %797 = vmatpush1.msra.mxu0 %v451
    %798 = vmatprep.subr.mxu0 %v458
    %799 = vmatpush1.msra.mxu0 %v457
    %800 = vmatprep.subr.mxu0 %v464
    %801 = vmatpush1.msra.mxu0 %v463
    %802 = vmatprep.subr.mxu0 %v470
    %803 = vmatpush1.msra.mxu0 %v469
    %804 = vmatprep.subr.mxu0 %v476
    %805 = vmatpush1.msra.mxu0 %v475
    %806 = vmatprep.subr.mxu0 %v482
    %807 = vmatpush1.msra.mxu0 %v481
    %808 = vmatprep.subr.mxu0 %v488
    %809 = vmatpush1.msra.mxu0 %v487
    %810 = vmatprep.subr.mxu0 %v494
    %811 = vmatpush1.msra.mxu0 %v493
    %812 = vmatprep.subr.mxu0 %v500
    %813 = vmatpush1.msra.mxu0 %v499
    %814 = vmatprep.subr.mxu0 %v506
    %815 = vmatpush1.msra.mxu0 %v505
    %816 = vmatprep.subr.mxu0 %v512
    %817 = vmatpush1.msra.mxu0 %v511
    %818 = vmatprep.subr.mxu0 %v518
    %819 = vmatpush1.msra.mxu0 %v517
    %820 = vmatprep.subr.mxu0 %v524
    %821 = vmatpush1.msra.mxu0 %v523
    %822 = vmatprep.subr.mxu0 %v530
    %823 = vmatpush1.msra.mxu0 %v529
    %824 = vmatprep.subr.mxu0 %v536
    %825 = vmatpush1.msra.mxu0 %v535
    %826 = vmatprep.subr.mxu0 %v542
    %827 = vmatpush1.msra.mxu0 %v541
    %828 = vmatprep.subr.mxu0 %v548
    %829 = vmatpush1.msra.mxu0 %v547
    %830 = vmatprep.subr.mxu0 %v554
    %831 = vmatpush1.msra.mxu0 %v553
    %832 = vmatprep.subr.mxu0 %v560
    %833 = vmatpush1.msra.mxu0 %v559
    %834 = vmatprep.subr.mxu0 %v566
    %835 = vmatpush1.msra.mxu0 %v565
    %836 = vmatprep.subr.mxu0 %v572
    %837 = vmatpush1.msra.mxu0 %v571
    %838 = vmatprep.subr.mxu0 %v578
    %839 = vmatpush1.msra.mxu0 %v577
    %840 = vmatprep.subr.mxu0 %v584
    %841 = vmatpush1.msra.mxu0 %v583
    %842 = vmatprep.subr.mxu0 %v590
    %843 = vmatpush1.msra.mxu0 %v589
    %844 = vmatprep.subr.mxu0 %v596
    %845 = vmatpush1.msra.mxu0 %v595
    %846 = vmatprep.subr.mxu0 %v602
    %847 = vmatpush1.msra.mxu0 %v601
    %848 = vmatprep.subr.mxu0 %v608
    %849 = vmatpush1.msra.mxu0 %v607
    %850 = vmatprep.mubr.f32.mxu0 %v416
    %851 = vmatmul.mubr.f32.gmra.mrb[0].mxu0 %v415
    %v852 = vpop.f32.mrb[0].mxu0
    %v853 = vadd.f32 %v633, %v852
    %v854 = vpop.f32.mrb[0].mxu0
    %v855 = vadd.f32 %v637, %v854
    %856 = vdwg.mxu0
    %v857 = vmax.f32 %v711, 0.0
    %v858 = vmax.f32 %v713, 0.0
    %v859 = vmax.f32 %v782, 0.0
    %v860 = vmax.f32 %v784, 0.0
    %v861 = vmax.f32 %v853, 0.0
    %v862 = vmax.f32 %v855, 0.0
    %v863 = vld [vmem:[#allocation7] sm:$0xff]
    %v864 = vld [vmem:[#allocation7 + $0x8] sm:$0xff]
    %v865 = vld [vmem:[#allocation7 + $0x10] sm:$0xff]
    %v866 = vld [vmem:[#allocation7 + $0x18] sm:$0xff]
    %v867 = vld [vmem:[#allocation7 + $0x20] sm:$0xff]
    %v868 = vld [vmem:[#allocation7 + $0x28] sm:$0xff]
    %v869 = vld [vmem:[#allocation7 + $0x30] sm:$0xff]
    %v870 = vld [vmem:[#allocation7 + $0x38] sm:$0xff]
    %v871 = vld [vmem:[#allocation7 + $0x40] sm:$0xff]
    %v872 = vld [vmem:[#allocation7 + $0x48] sm:$0xff]
    %v873 = vld [vmem:[#allocation7 + $0x50] sm:$0xff]
    %v874 = vld [vmem:[#allocation7 + $0x58] sm:$0xff]
    %v875 = vld [vmem:[#allocation7 + $0x60] sm:$0xff]
    %v876 = vld [vmem:[#allocation7 + $0x68] sm:$0xff]
    %v877 = vld [vmem:[#allocation7 + $0x70] sm:$0xff]
    %v878 = vld [vmem:[#allocation7 + $0x78] sm:$0xff]
    %v879 = vld [vmem:[#allocation7 + $0x80] sm:$0xff]
    %v880 = vld [vmem:[#allocation7 + $0x88] sm:$0xff]
    %v881 = vld [vmem:[#allocation7 + $0x90] sm:$0xff]
    %v882 = vld [vmem:[#allocation7 + $0x98] sm:$0xff]
    %v883 = vld [vmem:[#allocation7 + $0xa0] sm:$0xff]
    %v884 = vld [vmem:[#allocation7 + $0xa8] sm:$0xff]
    %v885 = vld [vmem:[#allocation7 + $0xb0] sm:$0xff]
    %v886 = vld [vmem:[#allocation7 + $0xb8] sm:$0xff]
    %v887 = vld [vmem:[#allocation7 + $0xc0] sm:$0xff]
    %v888 = vld [vmem:[#allocation7 + $0xc8] sm:$0xff]
    %v889 = vld [vmem:[#allocation7 + $0xd0] sm:$0xff]
    %v890 = vld [vmem:[#allocation7 + $0xd8] sm:$0xff]
    %v891 = vld [vmem:[#allocation7 + $0xe0] sm:$0xff]
    %v892 = vld [vmem:[#allocation7 + $0xe8] sm:$0xff]
    %v893 = vld [vmem:[#allocation7 + $0xf0] sm:$0xff]
    %v894 = vld [vmem:[#allocation7 + $0xf8] sm:$0xff]
    %v895 = vld [vmem:[#allocation7 + $0x100] sm:$0xff]
    %v896 = vld [vmem:[#allocation7 + $0x108] sm:$0xff]
    %v897 = vld [vmem:[#allocation7 + $0x110] sm:$0xff]
    %v898 = vld [vmem:[#allocation7 + $0x118] sm:$0xff]
    %v899 = vld [vmem:[#allocation7 + $0x120] sm:$0xff]
    %v900 = vld [vmem:[#allocation7 + $0x128] sm:$0xff]
    %v901 = vld [vmem:[#allocation7 + $0x130] sm:$0xff]
    %v902 = vld [vmem:[#allocation7 + $0x138] sm:$0xff]
    %v903 = vld [vmem:[#allocation7 + $0x140] sm:$0xff]
    %v904 = vld [vmem:[#allocation7 + $0x148] sm:$0xff]
    %v905 = vld [vmem:[#allocation7 + $0x150] sm:$0xff]
    %v906 = vld [vmem:[#allocation7 + $0x158] sm:$0xff]
    %v907 = vld [vmem:[#allocation7 + $0x160] sm:$0xff]
    %v908 = vld [vmem:[#allocation7 + $0x168] sm:$0xff]
    %v909 = vld [vmem:[#allocation7 + $0x170] sm:$0xff]
    %v910 = vld [vmem:[#allocation7 + $0x178] sm:$0xff]
    %v911 = vld [vmem:[#allocation7 + $0x180] sm:$0xff]
    %v912 = vld [vmem:[#allocation7 + $0x188] sm:$0xff]
    %v913 = vld [vmem:[#allocation7 + $0x190] sm:$0xff]
    %v914 = vld [vmem:[#allocation7 + $0x198] sm:$0xff]
    %v915 = vld [vmem:[#allocation7 + $0x1a0] sm:$0xff]
    %v916 = vld [vmem:[#allocation7 + $0x1a8] sm:$0xff]
    %v917 = vld [vmem:[#allocation7 + $0x1b0] sm:$0xff]
    %v918 = vld [vmem:[#allocation7 + $0x1b8] sm:$0xff]
    %v919 = vld [vmem:[#allocation7 + $0x1c0] sm:$0xff]
    %v920 = vld [vmem:[#allocation7 + $0x1c8] sm:$0xff]
    %v921 = vld [vmem:[#allocation7 + $0x1d0] sm:$0xff]
    %v922 = vld [vmem:[#allocation7 + $0x1d8] sm:$0xff]
    %v923 = vld [vmem:[#allocation7 + $0x1e0] sm:$0xff]
    %v924 = vld [vmem:[#allocation7 + $0x1e8] sm:$0xff]
    %v925 = vld [vmem:[#allocation7 + $0x1f0] sm:$0xff]
    %v926 = vld [vmem:[#allocation7 + $0x1f8] sm:$0xff]
    %v927 = vld [vmem:[#allocation7 + $0x200] sm:$0xff]
    %v928 = vld [vmem:[#allocation7 + $0x208] sm:$0xff]
    %v929 = vld [vmem:[#allocation7 + $0x210] sm:$0xff]
    %v930 = vld [vmem:[#allocation7 + $0x218] sm:$0xff]
    %v931 = vld [vmem:[#allocation7 + $0x220] sm:$0xff]
    %v932 = vld [vmem:[#allocation7 + $0x228] sm:$0xff]
    %v933 = vld [vmem:[#allocation7 + $0x230] sm:$0xff]
    %v934 = vld [vmem:[#allocation7 + $0x238] sm:$0xff]
    %v935 = vld [vmem:[#allocation7 + $0x240] sm:$0xff]
    %v936 = vld [vmem:[#allocation7 + $0x248] sm:$0xff]
    %v937 = vld [vmem:[#allocation7 + $0x250] sm:$0xff]
    %v938 = vld [vmem:[#allocation7 + $0x258] sm:$0xff]
    %v939 = vld [vmem:[#allocation7 + $0x260] sm:$0xff]
    %v940 = vld [vmem:[#allocation7 + $0x268] sm:$0xff]
    %v941 = vld [vmem:[#allocation7 + $0x270] sm:$0xff]
    %v942 = vld [vmem:[#allocation7 + $0x278] sm:$0xff]
    %v943 = vld [vmem:[#allocation7 + $0x280] sm:$0xff]
    %v944 = vld [vmem:[#allocation7 + $0x288] sm:$0xff]
    %v945 = vld [vmem:[#allocation7 + $0x290] sm:$0xff]
    %v946 = vld [vmem:[#allocation7 + $0x298] sm:$0xff]
    %v947 = vld [vmem:[#allocation7 + $0x2a0] sm:$0xff]
    %v948 = vld [vmem:[#allocation7 + $0x2a8] sm:$0xff]
    %v949 = vld [vmem:[#allocation7 + $0x2b0] sm:$0xff]
    %v950 = vld [vmem:[#allocation7 + $0x2b8] sm:$0xff]
    %v951 = vld [vmem:[#allocation7 + $0x2c0] sm:$0xff]
    %v952 = vld [vmem:[#allocation7 + $0x2c8] sm:$0xff]
    %v953 = vld [vmem:[#allocation7 + $0x2d0] sm:$0xff]
    %v954 = vld [vmem:[#allocation7 + $0x2d8] sm:$0xff]
    %v955 = vld [vmem:[#allocation7 + $0x2e0] sm:$0xff]
    %v956 = vld [vmem:[#allocation7 + $0x2e8] sm:$0xff]
    %v957 = vld [vmem:[#allocation7 + $0x2f0] sm:$0xff]
    %v958 = vld [vmem:[#allocation7 + $0x2f8] sm:$0xff]
    %v959 = vld [vmem:[#allocation7 + $0x300] sm:$0xff]
    %v960 = vld [vmem:[#allocation7 + $0x308] sm:$0xff]
    %v961 = vld [vmem:[#allocation7 + $0x310] sm:$0xff]
    %v962 = vld [vmem:[#allocation7 + $0x318] sm:$0xff]
    %v963 = vld [vmem:[#allocation7 + $0x320] sm:$0xff]
    %v964 = vld [vmem:[#allocation7 + $0x328] sm:$0xff]
    %v965 = vld [vmem:[#allocation7 + $0x330] sm:$0xff]
    %v966 = vld [vmem:[#allocation7 + $0x338] sm:$0xff]
    %v967 = vld [vmem:[#allocation7 + $0x340] sm:$0xff]
    %v968 = vld [vmem:[#allocation7 + $0x348] sm:$0xff]
    %v969 = vld [vmem:[#allocation7 + $0x350] sm:$0xff]
    %v970 = vld [vmem:[#allocation7 + $0x358] sm:$0xff]
    %v971 = vld [vmem:[#allocation7 + $0x360] sm:$0xff]
    %v972 = vld [vmem:[#allocation7 + $0x368] sm:$0xff]
    %v973 = vld [vmem:[#allocation7 + $0x370] sm:$0xff]
    %v974 = vld [vmem:[#allocation7 + $0x378] sm:$0xff]
    %v975 = vld [vmem:[#allocation7 + $0x380] sm:$0xff]
    %v976 = vld [vmem:[#allocation7 + $0x388] sm:$0xff]
    %v977 = vld [vmem:[#allocation7 + $0x390] sm:$0xff]
    %v978 = vld [vmem:[#allocation7 + $0x398] sm:$0xff]
    %v979 = vld [vmem:[#allocation7 + $0x3a0] sm:$0xff]
    %v980 = vld [vmem:[#allocation7 + $0x3a8] sm:$0xff]
    %v981 = vld [vmem:[#allocation7 + $0x3b0] sm:$0xff]
    %v982 = vld [vmem:[#allocation7 + $0x3b8] sm:$0xff]
    %v983 = vld [vmem:[#allocation7 + $0x3c0] sm:$0xff]
    %v984 = vld [vmem:[#allocation7 + $0x3c8] sm:$0xff]
    %v985 = vld [vmem:[#allocation7 + $0x3d0] sm:$0xff]
    %v986 = vld [vmem:[#allocation7 + $0x3d8] sm:$0xff]
    %v987 = vld [vmem:[#allocation7 + $0x3e0] sm:$0xff]
    %v988 = vld [vmem:[#allocation7 + $0x3e8] sm:$0xff]
    %v989 = vld [vmem:[#allocation7 + $0x3f0] sm:$0xff]
    %v990 = vld [vmem:[#allocation7 + $0x3f8] sm:$0xff]
    %v991 = vld [vmem:[#allocation7 + $0x400] sm:$0xff]
    %v992 = vld [vmem:[#allocation7 + $0x408] sm:$0xff]
    %v993 = vld [vmem:[#allocation7 + $0x410] sm:$0xff]
    %v994 = vld [vmem:[#allocation7 + $0x418] sm:$0xff]
    %v995 = vld [vmem:[#allocation7 + $0x420] sm:$0xff]
    %v996 = vld [vmem:[#allocation7 + $0x428] sm:$0xff]
    %v997 = vld [vmem:[#allocation7 + $0x430] sm:$0xff]
    %v998 = vld [vmem:[#allocation7 + $0x438] sm:$0xff]
    %v999 = vld [vmem:[#allocation7 + $0x440] sm:$0xff]
    %v1000 = vld [vmem:[#allocation7 + $0x448] sm:$0xff]
    %v1001 = vld [vmem:[#allocation7 + $0x450] sm:$0xff]
    %v1002 = vld [vmem:[#allocation7 + $0x458] sm:$0xff]
    %v1003 = vld [vmem:[#allocation7 + $0x460] sm:$0xff]
    %v1004 = vld [vmem:[#allocation7 + $0x468] sm:$0xff]
    %v1005 = vld [vmem:[#allocation7 + $0x470] sm:$0xff]
    %v1006 = vld [vmem:[#allocation7 + $0x478] sm:$0xff]
    %v1007 = vld [vmem:[#allocation7 + $0x480] sm:$0xff]
    %v1008 = vld [vmem:[#allocation7 + $0x488] sm:$0xff]
    %v1009 = vld [vmem:[#allocation7 + $0x490] sm:$0xff]
    %v1010 = vld [vmem:[#allocation7 + $0x498] sm:$0xff]
    %v1011 = vld [vmem:[#allocation7 + $0x4a0] sm:$0xff]
    %v1012 = vld [vmem:[#allocation7 + $0x4a8] sm:$0xff]
    %v1013 = vld [vmem:[#allocation7 + $0x4b0] sm:$0xff]
    %v1014 = vld [vmem:[#allocation7 + $0x4b8] sm:$0xff]
    %v1015 = vld [vmem:[#allocation7 + $0x4c0] sm:$0xff]
    %v1016 = vld [vmem:[#allocation7 + $0x4c8] sm:$0xff]
    %v1017 = vld [vmem:[#allocation7 + $0x4d0] sm:$0xff]
    %v1018 = vld [vmem:[#allocation7 + $0x4d8] sm:$0xff]
    %v1019 = vld [vmem:[#allocation7 + $0x4e0] sm:$0xff]
    %v1020 = vld [vmem:[#allocation7 + $0x4e8] sm:$0xff]
    %v1021 = vld [vmem:[#allocation7 + $0x4f0] sm:$0xff]
    %v1022 = vld [vmem:[#allocation7 + $0x4f8] sm:$0xff]
    %v1023 = vld [vmem:[#allocation7 + $0x500] sm:$0xff]
    %v1024 = vld [vmem:[#allocation7 + $0x508] sm:$0xff]
    %v1025 = vld [vmem:[#allocation7 + $0x510] sm:$0xff]
    %v1026 = vld [vmem:[#allocation7 + $0x518] sm:$0xff]
    %v1027 = vld [vmem:[#allocation7 + $0x520] sm:$0xff]
    %v1028 = vld [vmem:[#allocation7 + $0x528] sm:$0xff]
    %v1029 = vld [vmem:[#allocation7 + $0x530] sm:$0xff]
    %v1030 = vld [vmem:[#allocation7 + $0x538] sm:$0xff]
    %v1031 = vld [vmem:[#allocation7 + $0x540] sm:$0xff]
    %v1032 = vld [vmem:[#allocation7 + $0x548] sm:$0xff]
    %v1033 = vld [vmem:[#allocation7 + $0x550] sm:$0xff]
    %v1034 = vld [vmem:[#allocation7 + $0x558] sm:$0xff]
    %v1035 = vld [vmem:[#allocation7 + $0x560] sm:$0xff]
    %v1036 = vld [vmem:[#allocation7 + $0x568] sm:$0xff]
    %v1037 = vld [vmem:[#allocation7 + $0x570] sm:$0xff]
    %v1038 = vld [vmem:[#allocation7 + $0x578] sm:$0xff]
    %v1039 = vld [vmem:[#allocation7 + $0x580] sm:$0xff]
    %v1040 = vld [vmem:[#allocation7 + $0x588] sm:$0xff]
    %v1041 = vld [vmem:[#allocation7 + $0x590] sm:$0xff]
    %v1042 = vld [vmem:[#allocation7 + $0x598] sm:$0xff]
    %v1043 = vld [vmem:[#allocation7 + $0x5a0] sm:$0xff]
    %v1044 = vld [vmem:[#allocation7 + $0x5a8] sm:$0xff]
    %v1045 = vld [vmem:[#allocation7 + $0x5b0] sm:$0xff]
    %v1046 = vld [vmem:[#allocation7 + $0x5b8] sm:$0xff]
    %v1047 = vld [vmem:[#allocation7 + $0x5c0] sm:$0xff]
    %v1048 = vld [vmem:[#allocation7 + $0x5c8] sm:$0xff]
    %v1049 = vld [vmem:[#allocation7 + $0x5d0] sm:$0xff]
    %v1050 = vld [vmem:[#allocation7 + $0x5d8] sm:$0xff]
    %v1051 = vld [vmem:[#allocation7 + $0x5e0] sm:$0xff]
    %v1052 = vld [vmem:[#allocation7 + $0x5e8] sm:$0xff]
    %v1053 = vld [vmem:[#allocation7 + $0x5f0] sm:$0xff]
    %v1054 = vld [vmem:[#allocation7 + $0x5f8] sm:$0xff]
    %v1055 = vld [vmem:[#allocation7 + $0x600] sm:$0xff]
    %v1056 = vld [vmem:[#allocation7 + $0x608] sm:$0xff]
    %v1057 = vld [vmem:[#allocation7 + $0x610] sm:$0xff]
    %v1058 = vld [vmem:[#allocation7 + $0x618] sm:$0xff]
    %v1059 = vld [vmem:[#allocation7 + $0x620] sm:$0xff]
    %v1060 = vld [vmem:[#allocation7 + $0x628] sm:$0xff]
    %v1061 = vld [vmem:[#allocation7 + $0x630] sm:$0xff]
    %v1062 = vld [vmem:[#allocation7 + $0x638] sm:$0xff]
    %v1063 = vld [vmem:[#allocation7 + $0x640] sm:$0xff]
    %v1064 = vld [vmem:[#allocation7 + $0x648] sm:$0xff]
    %v1065 = vld [vmem:[#allocation7 + $0x650] sm:$0xff]
    %v1066 = vld [vmem:[#allocation7 + $0x658] sm:$0xff]
    %v1067 = vld [vmem:[#allocation7 + $0x660] sm:$0xff]
    %v1068 = vld [vmem:[#allocation7 + $0x668] sm:$0xff]
    %v1069 = vld [vmem:[#allocation7 + $0x670] sm:$0xff]
    %v1070 = vld [vmem:[#allocation7 + $0x678] sm:$0xff]
    %v1071 = vld [vmem:[#allocation7 + $0x680] sm:$0xff]
    %v1072 = vld [vmem:[#allocation7 + $0x688] sm:$0xff]
    %v1073 = vld [vmem:[#allocation7 + $0x690] sm:$0xff]
    %v1074 = vld [vmem:[#allocation7 + $0x698] sm:$0xff]
    %v1075 = vld [vmem:[#allocation7 + $0x6a0] sm:$0xff]
    %v1076 = vld [vmem:[#allocation7 + $0x6a8] sm:$0xff]
    %v1077 = vld [vmem:[#allocation7 + $0x6b0] sm:$0xff]
    %v1078 = vld [vmem:[#allocation7 + $0x6b8] sm:$0xff]
    %v1079 = vld [vmem:[#allocation7 + $0x6c0] sm:$0xff]
    %v1080 = vld [vmem:[#allocation7 + $0x6c8] sm:$0xff]
    %v1081 = vld [vmem:[#allocation7 + $0x6d0] sm:$0xff]
    %v1082 = vld [vmem:[#allocation7 + $0x6d8] sm:$0xff]
    %v1083 = vld [vmem:[#allocation7 + $0x6e0] sm:$0xff]
    %v1084 = vld [vmem:[#allocation7 + $0x6e8] sm:$0xff]
    %v1085 = vld [vmem:[#allocation7 + $0x6f0] sm:$0xff]
    %v1086 = vld [vmem:[#allocation7 + $0x6f8] sm:$0xff]
    %v1087 = vld [vmem:[#allocation7 + $0x700] sm:$0xff]
    %v1088 = vld [vmem:[#allocation7 + $0x708] sm:$0xff]
    %v1089 = vld [vmem:[#allocation7 + $0x710] sm:$0xff]
    %v1090 = vld [vmem:[#allocation7 + $0x718] sm:$0xff]
    %v1091 = vld [vmem:[#allocation7 + $0x720] sm:$0xff]
    %v1092 = vld [vmem:[#allocation7 + $0x728] sm:$0xff]
    %v1093 = vld [vmem:[#allocation7 + $0x730] sm:$0xff]
    %v1094 = vld [vmem:[#allocation7 + $0x738] sm:$0xff]
    %v1095 = vld [vmem:[#allocation7 + $0x740] sm:$0xff]
    %v1096 = vld [vmem:[#allocation7 + $0x748] sm:$0xff]
    %v1097 = vld [vmem:[#allocation7 + $0x750] sm:$0xff]
    %v1098 = vld [vmem:[#allocation7 + $0x758] sm:$0xff]
    %v1099 = vld [vmem:[#allocation7 + $0x760] sm:$0xff]
    %v1100 = vld [vmem:[#allocation7 + $0x768] sm:$0xff]
    %v1101 = vld [vmem:[#allocation7 + $0x770] sm:$0xff]
    %v1102 = vld [vmem:[#allocation7 + $0x778] sm:$0xff]
    %v1103 = vld [vmem:[#allocation7 + $0x780] sm:$0xff]
    %v1104 = vld [vmem:[#allocation7 + $0x788] sm:$0xff]
    %v1105 = vld [vmem:[#allocation7 + $0x790] sm:$0xff]
    %v1106 = vld [vmem:[#allocation7 + $0x798] sm:$0xff]
    %v1107 = vld [vmem:[#allocation7 + $0x7a0] sm:$0xff]
    %v1108 = vld [vmem:[#allocation7 + $0x7a8] sm:$0xff]
    %v1109 = vld [vmem:[#allocation7 + $0x7b0] sm:$0xff]
    %v1110 = vld [vmem:[#allocation7 + $0x7b8] sm:$0xff]
    %v1111 = vld [vmem:[#allocation7 + $0x7c0] sm:$0xff]
    %v1112 = vld [vmem:[#allocation7 + $0x7c8] sm:$0xff]
    %v1113 = vld [vmem:[#allocation7 + $0x7d0] sm:$0xff]
    %v1114 = vld [vmem:[#allocation7 + $0x7d8] sm:$0xff]
    %v1115 = vld [vmem:[#allocation7 + $0x7e0] sm:$0xff]
    %v1116 = vld [vmem:[#allocation7 + $0x7e8] sm:$0xff]
    %v1117 = vld [vmem:[#allocation7 + $0x7f0] sm:$0xff]
    %v1118 = vld [vmem:[#allocation7 + $0x7f8] sm:$0xff]
    %v1119 = vld [vmem:[#allocation7 + $0x800] sm:$0xff]
    %v1120 = vld [vmem:[#allocation7 + $0x808] sm:$0xff]
    %v1121 = vld [vmem:[#allocation7 + $0x810] sm:$0xff]
    %v1122 = vld [vmem:[#allocation7 + $0x818] sm:$0xff]
    %v1123 = vld [vmem:[#allocation7 + $0x820] sm:$0xff]
    %v1124 = vld [vmem:[#allocation7 + $0x828] sm:$0xff]
    %v1125 = vld [vmem:[#allocation7 + $0x830] sm:$0xff]
    %v1126 = vld [vmem:[#allocation7 + $0x838] sm:$0xff]
    %v1127 = vld [vmem:[#allocation7 + $0x840] sm:$0xff]
    %v1128 = vld [vmem:[#allocation7 + $0x848] sm:$0xff]
    %v1129 = vld [vmem:[#allocation7 + $0x850] sm:$0xff]
    %v1130 = vld [vmem:[#allocation7 + $0x858] sm:$0xff]
    %v1131 = vld [vmem:[#allocation7 + $0x860] sm:$0xff]
    %v1132 = vld [vmem:[#allocation7 + $0x868] sm:$0xff]
    %v1133 = vld [vmem:[#allocation7 + $0x870] sm:$0xff]
    %v1134 = vld [vmem:[#allocation7 + $0x878] sm:$0xff]
    %v1135 = vld [vmem:[#allocation7 + $0x880] sm:$0xff]
    %v1136 = vld [vmem:[#allocation7 + $0x888] sm:$0xff]
    %v1137 = vld [vmem:[#allocation7 + $0x890] sm:$0xff]
    %v1138 = vld [vmem:[#allocation7 + $0x898] sm:$0xff]
    %v1139 = vld [vmem:[#allocation7 + $0x8a0] sm:$0xff]
    %v1140 = vld [vmem:[#allocation7 + $0x8a8] sm:$0xff]
    %v1141 = vld [vmem:[#allocation7 + $0x8b0] sm:$0xff]
    %v1142 = vld [vmem:[#allocation7 + $0x8b8] sm:$0xff]
    %v1143 = vld [vmem:[#allocation7 + $0x8c0] sm:$0xff]
    %v1144 = vld [vmem:[#allocation7 + $0x8c8] sm:$0xff]
    %v1145 = vld [vmem:[#allocation7 + $0x8d0] sm:$0xff]
    %v1146 = vld [vmem:[#allocation7 + $0x8d8] sm:$0xff]
    %v1147 = vld [vmem:[#allocation7 + $0x8e0] sm:$0xff]
    %v1148 = vld [vmem:[#allocation7 + $0x8e8] sm:$0xff]
    %v1149 = vld [vmem:[#allocation7 + $0x8f0] sm:$0xff]
    %v1150 = vld [vmem:[#allocation7 + $0x8f8] sm:$0xff]
    %1151 = vmatprep.subr.mxu0 %v864
    %1152 = vmatpush1.msra.mxu0 %v863
    %1153 = vmatprep.subr.mxu0 %v870
    %1154 = vmatpush1.msra.mxu0 %v869
    %1155 = vmatprep.subr.mxu0 %v876
    %1156 = vmatpush1.msra.mxu0 %v875
    %1157 = vmatprep.subr.mxu0 %v882
    %1158 = vmatpush1.msra.mxu0 %v881
    %1159 = vmatprep.subr.mxu0 %v888
    %1160 = vmatpush1.msra.mxu0 %v887
    %1161 = vmatprep.subr.mxu0 %v894
    %1162 = vmatpush1.msra.mxu0 %v893
    %1163 = vmatprep.subr.mxu0 %v900
    %1164 = vmatpush1.msra.mxu0 %v899
    %1165 = vmatprep.subr.mxu0 %v906
    %1166 = vmatpush1.msra.mxu0 %v905
    %1167 = vmatprep.subr.mxu0 %v912
    %1168 = vmatpush1.msra.mxu0 %v911
    %1169 = vmatprep.subr.mxu0 %v918
    %1170 = vmatpush1.msra.mxu0 %v917
    %1171 = vmatprep.subr.mxu0 %v924
    %1172 = vmatpush1.msra.mxu0 %v923
    %1173 = vmatprep.subr.mxu0 %v930
    %1174 = vmatpush1.msra.mxu0 %v929
    %1175 = vmatprep.subr.mxu0 %v936
    %1176 = vmatpush1.msra.mxu0 %v935
    %1177 = vmatprep.subr.mxu0 %v942
    %1178 = vmatpush1.msra.mxu0 %v941
    %1179 = vmatprep.subr.mxu0 %v948
    %1180 = vmatpush1.msra.mxu0 %v947
    %1181 = vmatprep.subr.mxu0 %v954
    %1182 = vmatpush1.msra.mxu0 %v953
    %1183 = vmatprep.subr.mxu0 %v960
    %1184 = vmatpush1.msra.mxu0 %v959
    %1185 = vmatprep.subr.mxu0 %v966
    %1186 = vmatpush1.msra.mxu0 %v965
    %1187 = vmatprep.subr.mxu0 %v972
    %1188 = vmatpush1.msra.mxu0 %v971
    %1189 = vmatprep.subr.mxu0 %v978
    %1190 = vmatpush1.msra.mxu0 %v977
    %1191 = vmatprep.subr.mxu0 %v984
    %1192 = vmatpush1.msra.mxu0 %v983
    %1193 = vmatprep.subr.mxu0 %v990
    %1194 = vmatpush1.msra.mxu0 %v989
    %1195 = vmatprep.subr.mxu0 %v996
    %1196 = vmatpush1.msra.mxu0 %v995
    %1197 = vmatprep.subr.mxu0 %v1002
    %1198 = vmatpush1.msra.mxu0 %v1001
    %1199 = vmatprep.subr.mxu0 %v1008
    %1200 = vmatpush1.msra.mxu0 %v1007
    %1201 = vmatprep.subr.mxu0 %v1014
    %1202 = vmatpush1.msra.mxu0 %v1013
    %1203 = vmatprep.subr.mxu0 %v1020
    %1204 = vmatpush1.msra.mxu0 %v1019
    %1205 = vmatprep.subr.mxu0 %v1026
    %1206 = vmatpush1.msra.mxu0 %v1025
    %1207 = vmatprep.subr.mxu0 %v1032
    %1208 = vmatpush1.msra.mxu0 %v1031
    %1209 = vmatprep.subr.mxu0 %v1038
    %1210 = vmatpush1.msra.mxu0 %v1037
    %1211 = vmatprep.subr.mxu0 %v1044
    %1212 = vmatpush1.msra.mxu0 %v1043
    %1213 = vmatprep.subr.mxu0 %v1050
    %1214 = vmatpush1.msra.mxu0 %v1049
    %1215 = vmatprep.mubr.f32.mxu0 %v858
    %1216 = vmatmul.mubr.f32.gmra.mrb[0].mxu0 %v857
    %v1217 = vpop.f32.mrb[0].mxu0
    %v1218 = vadd.f32 0.0, %v1217
    %v1219 = vpop.f32.mrb[0].mxu0
    %v1220 = vadd.f32 0.0, %v1219
    %1221 = vdwg.mxu0
    %1222 = vmatprep.subr.mxu0 %v1056
    %1223 = vmatpush1.msra.mxu0 %v1055
    %1224 = vmatprep.subr.mxu0 %v1062
    %1225 = vmatpush1.msra.mxu0 %v1061
    %1226 = vmatprep.subr.mxu0 %v1068
    %1227 = vmatpush1.msra.mxu0 %v1067
    %1228 = vmatprep.subr.mxu0 %v1074
    %1229 = vmatpush1.msra.mxu0 %v1073
    %1230 = vmatprep.subr.mxu0 %v1080
    %1231 = vmatpush1.msra.mxu0 %v1079
    %1232 = vmatprep.subr.mxu0 %v1086
    %1233 = vmatpush1.msra.mxu0 %v1085
    %1234 = vmatprep.subr.mxu0 %v1092
    %1235 = vmatpush1.msra.mxu0 %v1091
    %1236 = vmatprep.subr.mxu0 %v1098
    %1237 = vmatpush1.msra.mxu0 %v1097
    %1238 = vmatprep.subr.mxu0 %v1104
    %1239 = vmatpush1.msra.mxu0 %v1103
    %1240 = vmatprep.subr.mxu0 %v1110
    %1241 = vmatpush1.msra.mxu0 %v1109
    %1242 = vmatprep.subr.mxu0 %v1116
    %1243 = vmatpush1.msra.mxu0 %v1115
    %1244 = vmatprep.subr.mxu0 %v1122
    %1245 = vmatpush1.msra.mxu0 %v1121
    %1246 = vmatprep.subr.mxu0 %v1128
    %1247 = vmatpush1.msra.mxu0 %v1127
    %1248 = vmatprep.subr.mxu0 %v1134
    %1249 = vmatpush1.msra.mxu0 %v1133
    %1250 = vmatprep.subr.mxu0 %v1140
    %1251 = vmatpush1.msra.mxu0 %v1139
    %1252 = vmatprep.subr.mxu0 %v1146
    %1253 = vmatpush1.msra.mxu0 %v1145
    %1254 = vmatprep.subr.mxu0 0.0
    %1255 = vmatpush1.msra.mxu0 0.0
    %1256 = vmatprep.subr.mxu0 0.0
    %1257 = vmatpush1.msra.mxu0 0.0
    %1258 = vmatprep.subr.mxu0 0.0
    %1259 = vmatpush1.msra.mxu0 0.0
    %1260 = vmatprep.subr.mxu0 0.0
    %1261 = vmatpush1.msra.mxu0 0.0
    %1262 = vmatprep.subr.mxu0 0.0
    %1263 = vmatpush1.msra.mxu0 0.0
    %1264 = vmatprep.subr.mxu0 0.0
    %1265 = vmatpush1.msra.mxu0 0.0
    %1266 = vmatprep.subr.mxu0 0.0
    %1267 = vmatpush1.msra.mxu0 0.0
    %1268 = vmatprep.subr.mxu0 0.0
    %1269 = vmatpush1.msra.mxu0 0.0
    %1270 = vmatprep.subr.mxu0 0.0
    %1271 = vmatpush1.msra.mxu0 0.0
    %1272 = vmatprep.subr.mxu0 0.0
    %1273 = vmatpush1.msra.mxu0 0.0
    %1274 = vmatprep.subr.mxu0 0.0
    %1275 = vmatpush1.msra.mxu0 0.0
    %1276 = vmatprep.subr.mxu0 0.0
    %1277 = vmatpush1.msra.mxu0 0.0
    %1278 = vmatprep.subr.mxu0 0.0
    %1279 = vmatpush1.msra.mxu0 0.0
    %1280 = vmatprep.subr.mxu0 0.0
    %1281 = vmatpush1.msra.mxu0 0.0
    %1282 = vmatprep.subr.mxu0 0.0
    %1283 = vmatpush1.msra.mxu0 0.0
    %1284 = vmatprep.subr.mxu0 0.0
    %1285 = vmatpush1.msra.mxu0 0.0
    %1286 = vmatprep.mubr.f32.mxu0 0.0
    %1287 = vmatmul.mubr.f32.gmra.mrb[0].mxu0 %v859
    %v1288 = vpop.f32.mrb[0].mxu0
    %v1289 = vadd.f32 %v1218, %v1288
    %v1290 = vpop.f32.mrb[0].mxu0
    %v1291 = vadd.f32 %v1220, %v1290
    %1292 = vdwg.mxu0
    %1293 = vmatprep.subr.mxu0 %v866
    %1294 = vmatpush1.msra.mxu0 %v865
    %1295 = vmatprep.subr.mxu0 %v872
    %1296 = vmatpush1.msra.mxu0 %v871
    %1297 = vmatprep.subr.mxu0 %v878
    %1298 = vmatpush1.msra.mxu0 %v877
    %1299 = vmatprep.subr.mxu0 %v884
    %1300 = vmatpush1.msra.mxu0 %v883
    %1301 = vmatprep.subr.mxu0 %v890
    %1302 = vmatpush1.msra.mxu0 %v889
    %1303 = vmatprep.subr.mxu0 %v896
    %1304 = vmatpush1.msra.mxu0 %v895
    %1305 = vmatprep.subr.mxu0 %v902
    %1306 = vmatpush1.msra.mxu0 %v901
    %1307 = vmatprep.subr.mxu0 %v908
    %1308 = vmatpush1.msra.mxu0 %v907
    %1309 = vmatprep.subr.mxu0 %v914
    %1310 = vmatpush1.msra.mxu0 %v913
    %1311 = vmatprep.subr.mxu0 %v920
    %1312 = vmatpush1.msra.mxu0 %v919
    %1313 = vmatprep.subr.mxu0 %v926
    %1314 = vmatpush1.msra.mxu0 %v925
    %1315 = vmatprep.subr.mxu0 %v932
    %1316 = vmatpush1.msra.mxu0 %v931
    %1317 = vmatprep.subr.mxu0 %v938
    %1318 = vmatpush1.msra.mxu0 %v937
    %1319 = vmatprep.subr.mxu0 %v944
    %1320 = vmatpush1.msra.mxu0 %v943
    %1321 = vmatprep.subr.mxu0 %v950
    %1322 = vmatpush1.msra.mxu0 %v949
    %1323 = vmatprep.subr.mxu0 %v956
    %1324 = vmatpush1.msra.mxu0 %v955
    %1325 = vmatprep.subr.mxu0 %v962
    %1326 = vmatpush1.msra.mxu0 %v961
    %1327 = vmatprep.subr.mxu0 %v968
    %1328 = vmatpush1.msra.mxu0 %v967
    %1329 = vmatprep.subr.mxu0 %v974
    %1330 = vmatpush1.msra.mxu0 %v973
    %1331 = vmatprep.subr.mxu0 %v980
    %1332 = vmatpush1.msra.mxu0 %v979
    %1333 = vmatprep.subr.mxu0 %v986
    %1334 = vmatpush1.msra.mxu0 %v985
    %1335 = vmatprep.subr.mxu0 %v992
    %1336 = vmatpush1.msra.mxu0 %v991
    %1337 = vmatprep.subr.mxu0 %v998
    %1338 = vmatpush1.msra.mxu0 %v997
    %1339 = vmatprep.subr.mxu0 %v1004
    %1340 = vmatpush1.msra.mxu0 %v1003
    %1341 = vmatprep.subr.mxu0 %v1010
    %1342 = vmatpush1.msra.mxu0 %v1009
    %1343 = vmatprep.subr.mxu0 %v1016
    %1344 = vmatpush1.msra.mxu0 %v1015
    %1345 = vmatprep.subr.mxu0 %v1022
    %1346 = vmatpush1.msra.mxu0 %v1021
    %1347 = vmatprep.subr.mxu0 %v1028
    %1348 = vmatpush1.msra.mxu0 %v1027
    %1349 = vmatprep.subr.mxu0 %v1034
    %1350 = vmatpush1.msra.mxu0 %v1033
    %1351 = vmatprep.subr.mxu0 %v1040
    %1352 = vmatpush1.msra.mxu0 %v1039
    %1353 = vmatprep.subr.mxu0 %v1046
    %1354 = vmatpush1.msra.mxu0 %v1045
    %1355 = vmatprep.subr.mxu0 %v1052
    %1356 = vmatpush1.msra.mxu0 %v1051
    %1357 = vmatprep.mubr.f32.mxu0 %v858
    %1358 = vmatmul.mubr.f32.gmra.mrb[0].mxu0 %v857
    %v1359 = vpop.f32.mrb[0].mxu0
    %v1360 = vadd.f32 0.0, %v1359
    %v1361 = vpop.f32.mrb[0].mxu0
    %v1362 = vadd.f32 0.0, %v1361
    %1363 = vdwg.mxu0
    %1364 = vmatprep.subr.mxu0 %v1058
    %1365 = vmatpush1.msra.mxu0 %v1057
    %1366 = vmatprep.subr.mxu0 %v1064
    %1367 = vmatpush1.msra.mxu0 %v1063
    %1368 = vmatprep.subr.mxu0 %v1070
    %1369 = vmatpush1.msra.mxu0 %v1069
    %1370 = vmatprep.subr.mxu0 %v1076
    %1371 = vmatpush1.msra.mxu0 %v1075
    %1372 = vmatprep.subr.mxu0 %v1082
    %1373 = vmatpush1.msra.mxu0 %v1081
    %1374 = vmatprep.subr.mxu0 %v1088
    %1375 = vmatpush1.msra.mxu0 %v1087
    %1376 = vmatprep.subr.mxu0 %v1094
    %1377 = vmatpush1.msra.mxu0 %v1093
    %1378 = vmatprep.subr.mxu0 %v1100
    %1379 = vmatpush1.msra.mxu0 %v1099
    %1380 = vmatprep.subr.mxu0 %v1106
    %1381 = vmatpush1.msra.mxu0 %v1105
    %1382 = vmatprep.subr.mxu0 %v1112
    %1383 = vmatpush1.msra.mxu0 %v1111
    %1384 = vmatprep.subr.mxu0 %v1118
    %1385 = vmatpush1.msra.mxu0 %v1117
    %1386 = vmatprep.subr.mxu0 %v1124
    %1387 = vmatpush1.msra.mxu0 %v1123
    %1388 = vmatprep.subr.mxu0 %v1130
    %1389 = vmatpush1.msra.mxu0 %v1129
    %1390 = vmatprep.subr.mxu0 %v1136
    %1391 = vmatpush1.msra.mxu0 %v1135
    %1392 = vmatprep.subr.mxu0 %v1142
    %1393 = vmatpush1.msra.mxu0 %v1141
    %1394 = vmatprep.subr.mxu0 %v1148
    %1395 = vmatpush1.msra.mxu0 %v1147
    %1396 = vmatprep.subr.mxu0 0.0
    %1397 = vmatpush1.msra.mxu0 0.0
    %1398 = vmatprep.subr.mxu0 0.0
    %1399 = vmatpush1.msra.mxu0 0.0
    %1400 = vmatprep.subr.mxu0 0.0
    %1401 = vmatpush1.msra.mxu0 0.0
    %1402 = vmatprep.subr.mxu0 0.0
    %1403 = vmatpush1.msra.mxu0 0.0
    %1404 = vmatprep.subr.mxu0 0.0
    %1405 = vmatpush1.msra.mxu0 0.0
    %1406 = vmatprep.subr.mxu0 0.0
    %1407 = vmatpush1.msra.mxu0 0.0
    %1408 = vmatprep.subr.mxu0 0.0
    %1409 = vmatpush1.msra.mxu0 0.0
    %1410 = vmatprep.subr.mxu0 0.0
    %1411 = vmatpush1.msra.mxu0 0.0
    %1412 = vmatprep.subr.mxu0 0.0
    %1413 = vmatpush1.msra.mxu0 0.0
    %1414 = vmatprep.subr.mxu0 0.0
    %1415 = vmatpush1.msra.mxu0 0.0
    %1416 = vmatprep.subr.mxu0 0.0
    %1417 = vmatpush1.msra.mxu0 0.0
    %1418 = vmatprep.subr.mxu0 0.0
    %1419 = vmatpush1.msra.mxu0 0.0
    %1420 = vmatprep.subr.mxu0 0.0
    %1421 = vmatpush1.msra.mxu0 0.0
    %1422 = vmatprep.subr.mxu0 0.0
    %1423 = vmatpush1.msra.mxu0 0.0
    %1424 = vmatprep.subr.mxu0 0.0
    %1425 = vmatpush1.msra.mxu0 0.0
    %1426 = vmatprep.subr.mxu0 0.0
    %1427 = vmatpush1.msra.mxu0 0.0
    %1428 = vmatprep.mubr.f32.mxu0 0.0
    %1429 = vmatmul.mubr.f32.gmra.mrb[0].mxu0 %v859
    %v1430 = vpop.f32.mrb[0].mxu0
    %v1431 = vadd.f32 %v1360, %v1430
    %v1432 = vpop.f32.mrb[0].mxu0
    %v1433 = vadd.f32 %v1362, %v1432
    %1434 = vdwg.mxu0
    %1435 = vmatprep.subr.mxu0 %v868
    %1436 = vmatpush1.msra.mxu0 %v867
    %1437 = vmatprep.subr.mxu0 %v874
    %1438 = vmatpush1.msra.mxu0 %v873
    %1439 = vmatprep.subr.mxu0 %v880
    %1440 = vmatpush1.msra.mxu0 %v879
    %1441 = vmatprep.subr.mxu0 %v886
    %1442 = vmatpush1.msra.mxu0 %v885
    %1443 = vmatprep.subr.mxu0 %v892
    %1444 = vmatpush1.msra.mxu0 %v891
    %1445 = vmatprep.subr.mxu0 %v898
    %1446 = vmatpush1.msra.mxu0 %v897
    %1447 = vmatprep.subr.mxu0 %v904
    %1448 = vmatpush1.msra.mxu0 %v903
    %1449 = vmatprep.subr.mxu0 %v910
    %1450 = vmatpush1.msra.mxu0 %v909
    %1451 = vmatprep.subr.mxu0 %v916
    %1452 = vmatpush1.msra.mxu0 %v915
    %1453 = vmatprep.subr.mxu0 %v922
    %1454 = vmatpush1.msra.mxu0 %v921
    %1455 = vmatprep.subr.mxu0 %v928
    %1456 = vmatpush1.msra.mxu0 %v927
    %1457 = vmatprep.subr.mxu0 %v934
    %1458 = vmatpush1.msra.mxu0 %v933
    %1459 = vmatprep.subr.mxu0 %v940
    %1460 = vmatpush1.msra.mxu0 %v939
    %1461 = vmatprep.subr.mxu0 %v946
    %1462 = vmatpush1.msra.mxu0 %v945
    %1463 = vmatprep.subr.mxu0 %v952
    %1464 = vmatpush1.msra.mxu0 %v951
    %1465 = vmatprep.subr.mxu0 %v958
    %1466 = vmatpush1.msra.mxu0 %v957
    %1467 = vmatprep.subr.mxu0 %v964
    %1468 = vmatpush1.msra.mxu0 %v963
    %1469 = vmatprep.subr.mxu0 %v970
    %1470 = vmatpush1.msra.mxu0 %v969
    %1471 = vmatprep.subr.mxu0 %v976
    %1472 = vmatpush1.msra.mxu0 %v975
    %1473 = vmatprep.subr.mxu0 %v982
    %1474 = vmatpush1.msra.mxu0 %v981
    %1475 = vmatprep.subr.mxu0 %v988
    %1476 = vmatpush1.msra.mxu0 %v987
    %1477 = vmatprep.subr.mxu0 %v994
    %1478 = vmatpush1.msra.mxu0 %v993
    %1479 = vmatprep.subr.mxu0 %v1000
    %1480 = vmatpush1.msra.mxu0 %v999
    %1481 = vmatprep.subr.mxu0 %v1006
    %1482 = vmatpush1.msra.mxu0 %v1005
    %1483 = vmatprep.subr.mxu0 %v1012
    %1484 = vmatpush1.msra.mxu0 %v1011
    %1485 = vmatprep.subr.mxu0 %v1018
    %1486 = vmatpush1.msra.mxu0 %v1017
    %1487 = vmatprep.subr.mxu0 %v1024
    %1488 = vmatpush1.msra.mxu0 %v1023
    %1489 = vmatprep.subr.mxu0 %v1030
    %1490 = vmatpush1.msra.mxu0 %v1029
    %1491 = vmatprep.subr.mxu0 %v1036
    %1492 = vmatpush1.msra.mxu0 %v1035
    %1493 = vmatprep.subr.mxu0 %v1042
    %1494 = vmatpush1.msra.mxu0 %v1041
    %1495 = vmatprep.subr.mxu0 %v1048
    %1496 = vmatpush1.msra.mxu0 %v1047
    %1497 = vmatprep.subr.mxu0 %v1054
    %1498 = vmatpush1.msra.mxu0 %v1053
    %1499 = vmatprep.mubr.f32.mxu0 %v858
    %1500 = vmatmul.mubr.f32.gmra.mrb[0].mxu0 %v857
    %v1501 = vpop.f32.mrb[0].mxu0
    %v1502 = vadd.f32 0.0, %v1501
    %v1503 = vpop.f32.mrb[0].mxu0
    %v1504 = vadd.f32 0.0, %v1503
    %1505 = vdwg.mxu0
    %1506 = vmatprep.subr.mxu0 %v1060
    %1507 = vmatpush1.msra.mxu0 %v1059
    %1508 = vmatprep.subr.mxu0 %v1066
    %1509 = vmatpush1.msra.mxu0 %v1065
    %1510 = vmatprep.subr.mxu0 %v1072
    %1511 = vmatpush1.msra.mxu0 %v1071
    %1512 = vmatprep.subr.mxu0 %v1078
    %1513 = vmatpush1.msra.mxu0 %v1077
    %1514 = vmatprep.subr.mxu0 %v1084
    %1515 = vmatpush1.msra.mxu0 %v1083
    %1516 = vmatprep.subr.mxu0 %v1090
    %1517 = vmatpush1.msra.mxu0 %v1089
    %1518 = vmatprep.subr.mxu0 %v1096
    %1519 = vmatpush1.msra.mxu0 %v1095
    %1520 = vmatprep.subr.mxu0 %v1102
    %1521 = vmatpush1.msra.mxu0 %v1101
    %1522 = vmatprep.subr.mxu0 %v1108
    %1523 = vmatpush1.msra.mxu0 %v1107
    %1524 = vmatprep.subr.mxu0 %v1114
    %1525 = vmatpush1.msra.mxu0 %v1113
    %1526 = vmatprep.subr.mxu0 %v1120
    %1527 = vmatpush1.msra.mxu0 %v1119
    %1528 = vmatprep.subr.mxu0 %v1126
    %1529 = vmatpush1.msra.mxu0 %v1125
    %1530 = vmatprep.subr.mxu0 %v1132
    %1531 = vmatpush1.msra.mxu0 %v1131
    %1532 = vmatprep.subr.mxu0 %v1138
    %1533 = vmatpush1.msra.mxu0 %v1137
    %1534 = vmatprep.subr.mxu0 %v1144
    %1535 = vmatpush1.msra.mxu0 %v1143
    %1536 = vmatprep.subr.mxu0 %v1150
    %1537 = vmatpush1.msra.mxu0 %v1149
    %1538 = vmatprep.subr.mxu0 0.0
    %1539 = vmatpush1.msra.mxu0 0.0
    %1540 = vmatprep.subr.mxu0 0.0
    %1541 = vmatpush1.msra.mxu0 0.0
    %1542 = vmatprep.subr.mxu0 0.0
    %1543 = vmatpush1.msra.mxu0 0.0
    %1544 = vmatprep.subr.mxu0 0.0
    %1545 = vmatpush1.msra.mxu0 0.0
    %1546 = vmatprep.subr.mxu0 0.0
    %1547 = vmatpush1.msra.mxu0 0.0
    %1548 = vmatprep.subr.mxu0 0.0
    %1549 = vmatpush1.msra.mxu0 0.0
    %1550 = vmatprep.subr.mxu0 0.0
    %1551 = vmatpush1.msra.mxu0 0.0
    %1552 = vmatprep.subr.mxu0 0.0
    %1553 = vmatpush1.msra.mxu0 0.0
    %1554 = vmatprep.subr.mxu0 0.0
    %1555 = vmatpush1.msra.mxu0 0.0
    %1556 = vmatprep.subr.mxu0 0.0
    %1557 = vmatpush1.msra.mxu0 0.0
    %1558 = vmatprep.subr.mxu0 0.0
    %1559 = vmatpush1.msra.mxu0 0.0
    %1560 = vmatprep.subr.mxu0 0.0
    %1561 = vmatpush1.msra.mxu0 0.0
    %1562 = vmatprep.subr.mxu0 0.0
    %1563 = vmatpush1.msra.mxu0 0.0
    %1564 = vmatprep.subr.mxu0 0.0
    %1565 = vmatpush1.msra.mxu0 0.0
    %1566 = vmatprep.subr.mxu0 0.0
    %1567 = vmatpush1.msra.mxu0 0.0
    %1568 = vmatprep.subr.mxu0 0.0
    %1569 = vmatpush1.msra.mxu0 0.0
    %1570 = vmatprep.mubr.f32.mxu0 0.0
    %1571 = vmatmul.mubr.f32.gmra.mrb[0].mxu0 %v859
    %v1572 = vpop.f32.mrb[0].mxu0
    %v1573 = vadd.f32 %v1502, %v1572
    %v1574 = vpop.f32.mrb[0].mxu0
    %v1575 = vadd.f32 %v1504, %v1574
    %1576 = vdwg.mxu0
    %1577 = vmatprep.subr.mxu0 %v864
    %1578 = vmatpush1.msra.mxu0 %v863
    %1579 = vmatprep.subr.mxu0 %v870
    %1580 = vmatpush1.msra.mxu0 %v869
    %1581 = vmatprep.subr.mxu0 %v876
    %1582 = vmatpush1.msra.mxu0 %v875
    %1583 = vmatprep.subr.mxu0 %v882
    %1584 = vmatpush1.msra.mxu0 %v881
    %1585 = vmatprep.subr.mxu0 %v888
    %1586 = vmatpush1.msra.mxu0 %v887
    %1587 = vmatprep.subr.mxu0 %v894
    %1588 = vmatpush1.msra.mxu0 %v893
    %1589 = vmatprep.subr.mxu0 %v900
    %1590 = vmatpush1.msra.mxu0 %v899
    %1591 = vmatprep.subr.mxu0 %v906
    %1592 = vmatpush1.msra.mxu0 %v905
    %1593 = vmatprep.subr.mxu0 %v912
    %1594 = vmatpush1.msra.mxu0 %v911
    %1595 = vmatprep.subr.mxu0 %v918
    %1596 = vmatpush1.msra.mxu0 %v917
    %1597 = vmatprep.subr.mxu0 %v924
    %1598 = vmatpush1.msra.mxu0 %v923
    %1599 = vmatprep.subr.mxu0 %v930
    %1600 = vmatpush1.msra.mxu0 %v929
    %1601 = vmatprep.subr.mxu0 %v936
    %1602 = vmatpush1.msra.mxu0 %v935
    %1603 = vmatprep.subr.mxu0 %v942
    %1604 = vmatpush1.msra.mxu0 %v941
    %1605 = vmatprep.subr.mxu0 %v948
    %1606 = vmatpush1.msra.mxu0 %v947
    %1607 = vmatprep.subr.mxu0 %v954
    %1608 = vmatpush1.msra.mxu0 %v953
    %1609 = vmatprep.subr.mxu0 %v960
    %1610 = vmatpush1.msra.mxu0 %v959
    %1611 = vmatprep.subr.mxu0 %v966
    %1612 = vmatpush1.msra.mxu0 %v965
    %1613 = vmatprep.subr.mxu0 %v972
    %1614 = vmatpush1.msra.mxu0 %v971
    %1615 = vmatprep.subr.mxu0 %v978
    %1616 = vmatpush1.msra.mxu0 %v977
    %1617 = vmatprep.subr.mxu0 %v984
    %1618 = vmatpush1.msra.mxu0 %v983
    %1619 = vmatprep.subr.mxu0 %v990
    %1620 = vmatpush1.msra.mxu0 %v989
    %1621 = vmatprep.subr.mxu0 %v996
    %1622 = vmatpush1.msra.mxu0 %v995
    %1623 = vmatprep.subr.mxu0 %v1002
    %1624 = vmatpush1.msra.mxu0 %v1001
    %1625 = vmatprep.subr.mxu0 %v1008
    %1626 = vmatpush1.msra.mxu0 %v1007
    %1627 = vmatprep.subr.mxu0 %v1014
    %1628 = vmatpush1.msra.mxu0 %v1013
    %1629 = vmatprep.subr.mxu0 %v1020
    %1630 = vmatpush1.msra.mxu0 %v1019
    %1631 = vmatprep.subr.mxu0 %v1026
    %1632 = vmatpush1.msra.mxu0 %v1025
    %1633 = vmatprep.subr.mxu0 %v1032
    %1634 = vmatpush1.msra.mxu0 %v1031
    %1635 = vmatprep.subr.mxu0 %v1038
    %1636 = vmatpush1.msra.mxu0 %v1037
    %1637 = vmatprep.subr.mxu0 %v1044
    %1638 = vmatpush1.msra.mxu0 %v1043
    %1639 = vmatprep.subr.mxu0 %v1050
    %1640 = vmatpush1.msra.mxu0 %v1049
    %1641 = vmatprep.mubr.f32.mxu0 %v861
    %1642 = vmatmul.mubr.f32.gmra.mrb[0].mxu0 %v860
    %v1643 = vpop.f32.mrb[0].mxu0
    %v1644 = vadd.f32 0.0, %v1643
    %v1645 = vpop.f32.mrb[0].mxu0
    %v1646 = vadd.f32 0.0, %v1645
    %1647 = vdwg.mxu0
    %1648 = vmatprep.subr.mxu0 %v1056
    %1649 = vmatpush1.msra.mxu0 %v1055
    %1650 = vmatprep.subr.mxu0 %v1062
    %1651 = vmatpush1.msra.mxu0 %v1061
    %1652 = vmatprep.subr.mxu0 %v1068
    %1653 = vmatpush1.msra.mxu0 %v1067
    %1654 = vmatprep.subr.mxu0 %v1074
    %1655 = vmatpush1.msra.mxu0 %v1073
    %1656 = vmatprep.subr.mxu0 %v1080
    %1657 = vmatpush1.msra.mxu0 %v1079
    %1658 = vmatprep.subr.mxu0 %v1086
    %1659 = vmatpush1.msra.mxu0 %v1085
    %1660 = vmatprep.subr.mxu0 %v1092
    %1661 = vmatpush1.msra.mxu0 %v1091
    %1662 = vmatprep.subr.mxu0 %v1098
    %1663 = vmatpush1.msra.mxu0 %v1097
    %1664 = vmatprep.subr.mxu0 %v1104
    %1665 = vmatpush1.msra.mxu0 %v1103
    %1666 = vmatprep.subr.mxu0 %v1110
    %1667 = vmatpush1.msra.mxu0 %v1109
    %1668 = vmatprep.subr.mxu0 %v1116
    %1669 = vmatpush1.msra.mxu0 %v1115
    %1670 = vmatprep.subr.mxu0 %v1122
    %1671 = vmatpush1.msra.mxu0 %v1121
    %1672 = vmatprep.subr.mxu0 %v1128
    %1673 = vmatpush1.msra.mxu0 %v1127
    %1674 = vmatprep.subr.mxu0 %v1134
    %1675 = vmatpush1.msra.mxu0 %v1133
    %1676 = vmatprep.subr.mxu0 %v1140
    %1677 = vmatpush1.msra.mxu0 %v1139
    %1678 = vmatprep.subr.mxu0 %v1146
    %1679 = vmatpush1.msra.mxu0 %v1145
    %1680 = vmatprep.subr.mxu0 0.0
    %1681 = vmatpush1.msra.mxu0 0.0
    %1682 = vmatprep.subr.mxu0 0.0
    %1683 = vmatpush1.msra.mxu0 0.0
    %1684 = vmatprep.subr.mxu0 0.0
    %1685 = vmatpush1.msra.mxu0 0.0
    %1686 = vmatprep.subr.mxu0 0.0
    %1687 = vmatpush1.msra.mxu0 0.0
    %1688 = vmatprep.subr.mxu0 0.0
    %1689 = vmatpush1.msra.mxu0 0.0
    %1690 = vmatprep.subr.mxu0 0.0
    %1691 = vmatpush1.msra.mxu0 0.0
    %1692 = vmatprep.subr.mxu0 0.0
    %1693 = vmatpush1.msra.mxu0 0.0
    %1694 = vmatprep.subr.mxu0 0.0
    %1695 = vmatpush1.msra.mxu0 0.0
    %1696 = vmatprep.subr.mxu0 0.0
    %1697 = vmatpush1.msra.mxu0 0.0
    %1698 = vmatprep.subr.mxu0 0.0
    %1699 = vmatpush1.msra.mxu0 0.0
    %1700 = vmatprep.subr.mxu0 0.0
    %1701 = vmatpush1.msra.mxu0 0.0
    %1702 = vmatprep.subr.mxu0 0.0
    %1703 = vmatpush1.msra.mxu0 0.0
    %1704 = vmatprep.subr.mxu0 0.0
    %1705 = vmatpush1.msra.mxu0 0.0
    %1706 = vmatprep.subr.mxu0 0.0
    %1707 = vmatpush1.msra.mxu0 0.0
    %1708 = vmatprep.subr.mxu0 0.0
    %1709 = vmatpush1.msra.mxu0 0.0
    %1710 = vmatprep.subr.mxu0 0.0
    %1711 = vmatpush1.msra.mxu0 0.0
    %1712 = vmatprep.mubr.f32.mxu0 0.0
    %1713 = vmatmul.mubr.f32.gmra.mrb[0].mxu0 %v862
    %v1714 = vpop.f32.mrb[0].mxu0
    %v1715 = vadd.f32 %v1644, %v1714
    %v1716 = vpop.f32.mrb[0].mxu0
    %v1717 = vadd.f32 %v1646, %v1716
    %1718 = vdwg.mxu0
    %1719 = vmatprep.subr.mxu0 %v866
    %1720 = vmatpush1.msra.mxu0 %v865
    %1721 = vmatprep.subr.mxu0 %v872
    %1722 = vmatpush1.msra.mxu0 %v871
    %1723 = vmatprep.subr.mxu0 %v878
    %1724 = vmatpush1.msra.mxu0 %v877
    %1725 = vmatprep.subr.mxu0 %v884
    %1726 = vmatpush1.msra.mxu0 %v883
    %1727 = vmatprep.subr.mxu0 %v890
    %1728 = vmatpush1.msra.mxu0 %v889
    %1729 = vmatprep.subr.mxu0 %v896
    %1730 = vmatpush1.msra.mxu0 %v895
    %1731 = vmatprep.subr.mxu0 %v902
    %1732 = vmatpush1.msra.mxu0 %v901
    %1733 = vmatprep.subr.mxu0 %v908
    %1734 = vmatpush1.msra.mxu0 %v907
    %1735 = vmatprep.subr.mxu0 %v914
    %1736 = vmatpush1.msra.mxu0 %v913
    %1737 = vmatprep.subr.mxu0 %v920
    %1738 = vmatpush1.msra.mxu0 %v919
    %1739 = vmatprep.subr.mxu0 %v926
    %1740 = vmatpush1.msra.mxu0 %v925
    %1741 = vmatprep.subr.mxu0 %v932
    %1742 = vmatpush1.msra.mxu0 %v931
    %1743 = vmatprep.subr.mxu0 %v938
    %1744 = vmatpush1.msra.mxu0 %v937
    %1745 = vmatprep.subr.mxu0 %v944
    %1746 = vmatpush1.msra.mxu0 %v943
    %1747 = vmatprep.subr.mxu0 %v950
    %1748 = vmatpush1.msra.mxu0 %v949
    %1749 = vmatprep.subr.mxu0 %v956
    %1750 = vmatpush1.msra.mxu0 %v955
    %1751 = vmatprep.subr.mxu0 %v962
    %1752 = vmatpush1.msra.mxu0 %v961
    %1753 = vmatprep.subr.mxu0 %v968
    %1754 = vmatpush1.msra.mxu0 %v967
    %1755 = vmatprep.subr.mxu0 %v974
    %1756 = vmatpush1.msra.mxu0 %v973
    %1757 = vmatprep.subr.mxu0 %v980
    %1758 = vmatpush1.msra.mxu0 %v979
    %1759 = vmatprep.subr.mxu0 %v986
    %1760 = vmatpush1.msra.mxu0 %v985
    %1761 = vmatprep.subr.mxu0 %v992
    %1762 = vmatpush1.msra.mxu0 %v991
    %1763 = vmatprep.subr.mxu0 %v998
    %1764 = vmatpush1.msra.mxu0 %v997
    %1765 = vmatprep.subr.mxu0 %v1004
    %1766 = vmatpush1.msra.mxu0 %v1003
    %1767 = vmatprep.subr.mxu0 %v1010
    %1768 = vmatpush1.msra.mxu0 %v1009
    %1769 = vmatprep.subr.mxu0 %v1016
    %1770 = vmatpush1.msra.mxu0 %v1015
    %1771 = vmatprep.subr.mxu0 %v1022
    %1772 = vmatpush1.msra.mxu0 %v1021
    %1773 = vmatprep.subr.mxu0 %v1028
    %1774 = vmatpush1.msra.mxu0 %v1027
    %1775 = vmatprep.subr.mxu0 %v1034
    %1776 = vmatpush1.msra.mxu0 %v1033
    %1777 = vmatprep.subr.mxu0 %v1040
    %1778 = vmatpush1.msra.mxu0 %v1039
    %1779 = vmatprep.subr.mxu0 %v1046
    %1780 = vmatpush1.msra.mxu0 %v1045
    %1781 = vmatprep.subr.mxu0 %v1052
    %1782 = vmatpush1.msra.mxu0 %v1051
    %1783 = vmatprep.mubr.f32.mxu0 %v861
    %1784 = vmatmul.mubr.f32.gmra.mrb[0].mxu0 %v860
    %v1785 = vpop.f32.mrb[0].mxu0
    %v1786 = vadd.f32 0.0, %v1785
    %v1787 = vpop.f32.mrb[0].mxu0
    %v1788 = vadd.f32 0.0, %v1787
    %1789 = vdwg.mxu0
    %1790 = vmatprep.subr.mxu0 %v1058
    %1791 = vmatpush1.msra.mxu0 %v1057
    %1792 = vmatprep.subr.mxu0 %v1064
    %1793 = vmatpush1.msra.mxu0 %v1063
    %1794 = vmatprep.subr.mxu0 %v1070
    %1795 = vmatpush1.msra.mxu0 %v1069
    %1796 = vmatprep.subr.mxu0 %v1076
    %1797 = vmatpush1.msra.mxu0 %v1075
    %1798 = vmatprep.subr.mxu0 %v1082
    %1799 = vmatpush1.msra.mxu0 %v1081
    %1800 = vmatprep.subr.mxu0 %v1088
    %1801 = vmatpush1.msra.mxu0 %v1087
    %1802 = vmatprep.subr.mxu0 %v1094
    %1803 = vmatpush1.msra.mxu0 %v1093
    %1804 = vmatprep.subr.mxu0 %v1100
    %1805 = vmatpush1.msra.mxu0 %v1099
    %1806 = vmatprep.subr.mxu0 %v1106
    %1807 = vmatpush1.msra.mxu0 %v1105
    %1808 = vmatprep.subr.mxu0 %v1112
    %1809 = vmatpush1.msra.mxu0 %v1111
    %1810 = vmatprep.subr.mxu0 %v1118
    %1811 = vmatpush1.msra.mxu0 %v1117
    %1812 = vmatprep.subr.mxu0 %v1124
    %1813 = vmatpush1.msra.mxu0 %v1123
    %1814 = vmatprep.subr.mxu0 %v1130
    %1815 = vmatpush1.msra.mxu0 %v1129
    %1816 = vmatprep.subr.mxu0 %v1136
    %1817 = vmatpush1.msra.mxu0 %v1135
    %1818 = vmatprep.subr.mxu0 %v1142
    %1819 = vmatpush1.msra.mxu0 %v1141
    %1820 = vmatprep.subr.mxu0 %v1148
    %1821 = vmatpush1.msra.mxu0 %v1147
    %1822 = vmatprep.subr.mxu0 0.0
    %1823 = vmatpush1.msra.mxu0 0.0
    %1824 = vmatprep.subr.mxu0 0.0
    %1825 = vmatpush1.msra.mxu0 0.0
    %1826 = vmatprep.subr.mxu0 0.0
    %1827 = vmatpush1.msra.mxu0 0.0
    %1828 = vmatprep.subr.mxu0 0.0
    %1829 = vmatpush1.msra.mxu0 0.0
    %1830 = vmatprep.subr.mxu0 0.0
    %1831 = vmatpush1.msra.mxu0 0.0
    %1832 = vmatprep.subr.mxu0 0.0
    %1833 = vmatpush1.msra.mxu0 0.0
    %1834 = vmatprep.subr.mxu0 0.0
    %1835 = vmatpush1.msra.mxu0 0.0
    %1836 = vmatprep.subr.mxu0 0.0
    %1837 = vmatpush1.msra.mxu0 0.0
    %1838 = vmatprep.subr.mxu0 0.0
    %1839 = vmatpush1.msra.mxu0 0.0
    %1840 = vmatprep.subr.mxu0 0.0
    %1841 = vmatpush1.msra.mxu0 0.0
    %1842 = vmatprep.subr.mxu0 0.0
    %1843 = vmatpush1.msra.mxu0 0.0
    %1844 = vmatprep.subr.mxu0 0.0
    %1845 = vmatpush1.msra.mxu0 0.0
    %1846 = vmatprep.subr.mxu0 0.0
    %1847 = vmatpush1.msra.mxu0 0.0
    %1848 = vmatprep.subr.mxu0 0.0
    %1849 = vmatpush1.msra.mxu0 0.0
    %1850 = vmatprep.subr.mxu0 0.0
    %1851 = vmatpush1.msra.mxu0 0.0
    %1852 = vmatprep.subr.mxu0 0.0
    %1853 = vmatpush1.msra.mxu0 0.0
    %1854 = vmatprep.mubr.f32.mxu0 0.0
    %1855 = vmatmul.mubr.f32.gmra.mrb[0].mxu0 %v862
    %v1856 = vpop.f32.mrb[0].mxu0
    %v1857 = vadd.f32 %v1786, %v1856
    %v1858 = vpop.f32.mrb[0].mxu0
    %v1859 = vadd.f32 %v1788, %v1858
    %1860 = vdwg.mxu0
    %1861 = vmatprep.subr.mxu0 %v868
    %1862 = vmatpush1.msra.mxu0 %v867
    %1863 = vmatprep.subr.mxu0 %v874
    %1864 = vmatpush1.msra.mxu0 %v873
    %1865 = vmatprep.subr.mxu0 %v880
    %1866 = vmatpush1.msra.mxu0 %v879
    %1867 = vmatprep.subr.mxu0 %v886
    %1868 = vmatpush1.msra.mxu0 %v885
    %1869 = vmatprep.subr.mxu0 %v892
    %1870 = vmatpush1.msra.mxu0 %v891
    %1871 = vmatprep.subr.mxu0 %v898
    %1872 = vmatpush1.msra.mxu0 %v897
    %1873 = vmatprep.subr.mxu0 %v904
    %1874 = vmatpush1.msra.mxu0 %v903
    %1875 = vmatprep.subr.mxu0 %v910
    %1876 = vmatpush1.msra.mxu0 %v909
    %1877 = vmatprep.subr.mxu0 %v916
    %1878 = vmatpush1.msra.mxu0 %v915
    %1879 = vmatprep.subr.mxu0 %v922
    %1880 = vmatpush1.msra.mxu0 %v921
    %1881 = vmatprep.subr.mxu0 %v928
    %1882 = vmatpush1.msra.mxu0 %v927
    %1883 = vmatprep.subr.mxu0 %v934
    %1884 = vmatpush1.msra.mxu0 %v933
    %1885 = vmatprep.subr.mxu0 %v940
    %1886 = vmatpush1.msra.mxu0 %v939
    %1887 = vmatprep.subr.mxu0 %v946
    %1888 = vmatpush1.msra.mxu0 %v945
    %1889 = vmatprep.subr.mxu0 %v952
    %1890 = vmatpush1.msra.mxu0 %v951
    %1891 = vmatprep.subr.mxu0 %v958
    %1892 = vmatpush1.msra.mxu0 %v957
    %1893 = vmatprep.subr.mxu0 %v964
    %1894 = vmatpush1.msra.mxu0 %v963
    %1895 = vmatprep.subr.mxu0 %v970
    %1896 = vmatpush1.msra.mxu0 %v969
    %1897 = vmatprep.subr.mxu0 %v976
    %1898 = vmatpush1.msra.mxu0 %v975
    %1899 = vmatprep.subr.mxu0 %v982
    %1900 = vmatpush1.msra.mxu0 %v981
    %1901 = vmatprep.subr.mxu0 %v988
    %1902 = vmatpush1.msra.mxu0 %v987
    %1903 = vmatprep.subr.mxu0 %v994
    %1904 = vmatpush1.msra.mxu0 %v993
    %1905 = vmatprep.subr.mxu0 %v1000
    %1906 = vmatpush1.msra.mxu0 %v999
    %1907 = vmatprep.subr.mxu0 %v1006
    %1908 = vmatpush1.msra.mxu0 %v1005
    %1909 = vmatprep.subr.mxu0 %v1012
    %1910 = vmatpush1.msra.mxu0 %v1011
    %1911 = vmatprep.subr.mxu0 %v1018
    %1912 = vmatpush1.msra.mxu0 %v1017
    %1913 = vmatprep.subr.mxu0 %v1024
    %1914 = vmatpush1.msra.mxu0 %v1023
    %1915 = vmatprep.subr.mxu0 %v1030
    %1916 = vmatpush1.msra.mxu0 %v1029
    %1917 = vmatprep.subr.mxu0 %v1036
    %1918 = vmatpush1.msra.mxu0 %v1035
    %1919 = vmatprep.subr.mxu0 %v1042
    %1920 = vmatpush1.msra.mxu0 %v1041
    %1921 = vmatprep.subr.mxu0 %v1048
    %1922 = vmatpush1.msra.mxu0 %v1047
    %1923 = vmatprep.subr.mxu0 %v1054
    %1924 = vmatpush1.msra.mxu0 %v1053
    %1925 = vmatprep.mubr.f32.mxu0 %v861
    %1926 = vmatmul.mubr.f32.gmra.mrb[0].mxu0 %v860
    %v1927 = vpop.f32.mrb[0].mxu0
    %v1928 = vadd.f32 0.0, %v1927
    %v1929 = vpop.f32.mrb[0].mxu0
    %v1930 = vadd.f32 0.0, %v1929
    %1931 = vdwg.mxu0
    %1932 = vmatprep.subr.mxu0 %v1060
    %1933 = vmatpush1.msra.mxu0 %v1059
    %1934 = vmatprep.subr.mxu0 %v1066
    %1935 = vmatpush1.msra.mxu0 %v1065
    %1936 = vmatprep.subr.mxu0 %v1072
    %1937 = vmatpush1.msra.mxu0 %v1071
    %1938 = vmatprep.subr.mxu0 %v1078
    %1939 = vmatpush1.msra.mxu0 %v1077
    %1940 = vmatprep.subr.mxu0 %v1084
    %1941 = vmatpush1.msra.mxu0 %v1083
    %1942 = vmatprep.subr.mxu0 %v1090
    %1943 = vmatpush1.msra.mxu0 %v1089
    %1944 = vmatprep.subr.mxu0 %v1096
    %1945 = vmatpush1.msra.mxu0 %v1095
    %1946 = vmatprep.subr.mxu0 %v1102
    %1947 = vmatpush1.msra.mxu0 %v1101
    %1948 = vmatprep.subr.mxu0 %v1108
    %1949 = vmatpush1.msra.mxu0 %v1107
    %1950 = vmatprep.subr.mxu0 %v1114
    %1951 = vmatpush1.msra.mxu0 %v1113
    %1952 = vmatprep.subr.mxu0 %v1120
    %1953 = vmatpush1.msra.mxu0 %v1119
    %1954 = vmatprep.subr.mxu0 %v1126
    %1955 = vmatpush1.msra.mxu0 %v1125
    %1956 = vmatprep.subr.mxu0 %v1132
    %1957 = vmatpush1.msra.mxu0 %v1131
    %1958 = vmatprep.subr.mxu0 %v1138
    %1959 = vmatpush1.msra.mxu0 %v1137
    %1960 = vmatprep.subr.mxu0 %v1144
    %1961 = vmatpush1.msra.mxu0 %v1143
    %1962 = vmatprep.subr.mxu0 %v1150
    %1963 = vmatpush1.msra.mxu0 %v1149
    %1964 = vmatprep.subr.mxu0 0.0
    %1965 = vmatpush1.msra.mxu0 0.0
    %1966 = vmatprep.subr.mxu0 0.0
    %1967 = vmatpush1.msra.mxu0 0.0
    %1968 = vmatprep.subr.mxu0 0.0
    %1969 = vmatpush1.msra.mxu0 0.0
    %1970 = vmatprep.subr.mxu0 0.0
    %1971 = vmatpush1.msra.mxu0 0.0
    %1972 = vmatprep.subr.mxu0 0.0
    %1973 = vmatpush1.msra.mxu0 0.0
    %1974 = vmatprep.subr.mxu0 0.0
    %1975 = vmatpush1.msra.mxu0 0.0
    %1976 = vmatprep.subr.mxu0 0.0
    %1977 = vmatpush1.msra.mxu0 0.0
    %1978 = vmatprep.subr.mxu0 0.0
    %1979 = vmatpush1.msra.mxu0 0.0
    %1980 = vmatprep.subr.mxu0 0.0
    %1981 = vmatpush1.msra.mxu0 0.0
    %1982 = vmatprep.subr.mxu0 0.0
    %1983 = vmatpush1.msra.mxu0 0.0
    %1984 = vmatprep.subr.mxu0 0.0
    %1985 = vmatpush1.msra.mxu0 0.0
    %1986 = vmatprep.subr.mxu0 0.0
    %1987 = vmatpush1.msra.mxu0 0.0
    %1988 = vmatprep.subr.mxu0 0.0
    %1989 = vmatpush1.msra.mxu0 0.0
    %1990 = vmatprep.subr.mxu0 0.0
    %1991 = vmatpush1.msra.mxu0 0.0
    %1992 = vmatprep.subr.mxu0 0.0
    %1993 = vmatpush1.msra.mxu0 0.0
    %1994 = vmatprep.subr.mxu0 0.0
    %1995 = vmatpush1.msra.mxu0 0.0
    %1996 = vmatprep.mubr.f32.mxu0 0.0
    %1997 = vmatmul.mubr.f32.gmra.mrb[0].mxu0 %v862
    %v1998 = vpop.f32.mrb[0].mxu0
    %v1999 = vadd.f32 %v1928, %v1998
    %v2000 = vpop.f32.mrb[0].mxu0
    %v2001 = vadd.f32 %v1930, %v2000
    %2002 = vdwg.mxu0
    %s2003 = scalar_lea.vmem [#allocation10], 3
    %v2004 = vld [vmem:[%s2003] ss:$8 sm:$0x7]
    %v2005 = vrot.slane %v1859, 1
    %v2006 = vrot.slane %v1999, 1
    %v2007 = vrot.slane %v2001, 1
    %v2008 = vadd.f32 %v1289, %v2005
    %v2009 = vadd.f32 %v1291, %v2006
    %v2010 = vadd.f32 %v1431, %v2007
    %v2012 = vlaneseq
    %v2013 = vshrl.u32 %v2012, 7
    %v2014 = vsub.s32 0, %v2013
    %v2015 = vrot.slane %v2004, %v2014
    %v2016 = vlaneseq
    %v2017 = vshrl.u32 %v2016, 7
    %v2018 = vsub.s32 1, %v2017
    %v2019 = vrot.slane %v2004, %v2018
    %v2020 = vlaneseq
    %v2021 = vshrl.u32 %v2020, 7
    %v2022 = vsub.s32 2, %v2021
    %v2023 = vrot.slane %v2004, %v2022
    %v2027 = vadd.f32 %v2008, %v2015
    %v2028 = vadd.f32 %v2009, %v2019
    %v2029 = vadd.f32 %v2010, %v2023
    %v2030 = vmax.f32 %v2027, 0.0
    %v2031 = vmax.f32 %v2028, 0.0
    %v2032 = vmax.f32 %v2029, 0.0
    %v2033 = vadd.f32 %v1715, %v1433
    %v2034 = vadd.f32 %v1717, %v1573
    %v2035 = vadd.f32 %v1857, %v1575
    %v2036 = vadd.f32 %v2033, %v2015
    %v2037 = vadd.f32 %v2034, %v2019
    %v2038 = vadd.f32 %v2035, %v2023
    %v2039 = vmax.f32 %v2036, 0.0
    %v2040 = vmax.f32 %v2037, 0.0
    %v2041 = vmax.f32 %v2038, 0.0
    %v2042 = vld [vmem:[#allocation9] sm:$0xff]
    %v2043 = vld [vmem:[#allocation9 + $0x8] sm:$0xff]
    %v2044 = vld [vmem:[#allocation9 + $0x10] sm:$0xff]
    %v2045 = vld [vmem:[#allocation9 + $0x18] sm:$0xff]
    %v2046 = vld [vmem:[#allocation9 + $0x20] sm:$0xff]
    %v2047 = vld [vmem:[#allocation9 + $0x28] sm:$0xff]
    %v2048 = vld [vmem:[#allocation9 + $0x30] sm:$0xff]
    %v2049 = vld [vmem:[#allocation9 + $0x38] sm:$0xff]
    %v2050 = vld [vmem:[#allocation9 + $0x40] sm:$0xff]
    %v2051 = vld [vmem:[#allocation9 + $0x48] sm:$0xff]
    %v2052 = vld [vmem:[#allocation9 + $0x50] sm:$0xff]
    %v2053 = vld [vmem:[#allocation9 + $0x58] sm:$0xff]
    %v2054 = vld [vmem:[#allocation9 + $0x60] sm:$0xff]
    %v2055 = vld [vmem:[#allocation9 + $0x68] sm:$0xff]
    %v2056 = vld [vmem:[#allocation9 + $0x70] sm:$0xff]
    %v2057 = vld [vmem:[#allocation9 + $0x78] sm:$0xff]
    %v2058 = vld [vmem:[#allocation9 + $0x80] sm:$0xff]
    %v2059 = vld [vmem:[#allocation9 + $0x88] sm:$0xff]
    %v2060 = vld [vmem:[#allocation9 + $0x90] sm:$0xff]
    %v2061 = vld [vmem:[#allocation9 + $0x98] sm:$0xff]
    %v2062 = vld [vmem:[#allocation9 + $0xa0] sm:$0xff]
    %v2063 = vld [vmem:[#allocation9 + $0xa8] sm:$0xff]
    %v2064 = vld [vmem:[#allocation9 + $0xb0] sm:$0xff]
    %v2065 = vld [vmem:[#allocation9 + $0xb8] sm:$0xff]
    %v2066 = vld [vmem:[#allocation9 + $0xc0] sm:$0xff]
    %v2067 = vld [vmem:[#allocation9 + $0xc8] sm:$0xff]
    %v2068 = vld [vmem:[#allocation9 + $0xd0] sm:$0xff]
    %v2069 = vld [vmem:[#allocation9 + $0xd8] sm:$0xff]
    %v2070 = vld [vmem:[#allocation9 + $0xe0] sm:$0xff]
    %v2071 = vld [vmem:[#allocation9 + $0xe8] sm:$0xff]
    %v2072 = vld [vmem:[#allocation9 + $0xf0] sm:$0xff]
    %v2073 = vld [vmem:[#allocation9 + $0xf8] sm:$0xff]
    %v2074 = vld [vmem:[#allocation9 + $0x100] sm:$0xff]
    %v2075 = vld [vmem:[#allocation9 + $0x108] sm:$0xff]
    %v2076 = vld [vmem:[#allocation9 + $0x110] sm:$0xff]
    %v2077 = vld [vmem:[#allocation9 + $0x118] sm:$0xff]
    %v2078 = vld [vmem:[#allocation9 + $0x120] sm:$0xff]
    %v2079 = vld [vmem:[#allocation9 + $0x128] sm:$0xff]
    %v2080 = vld [vmem:[#allocation9 + $0x130] sm:$0xff]
    %v2081 = vld [vmem:[#allocation9 + $0x138] sm:$0xff]
    %v2082 = vld [vmem:[#allocation9 + $0x140] sm:$0xff]
    %v2083 = vld [vmem:[#allocation9 + $0x148] sm:$0xff]
    %v2084 = vld [vmem:[#allocation9 + $0x150] sm:$0xff]
    %v2085 = vld [vmem:[#allocation9 + $0x158] sm:$0xff]
    %v2086 = vld [vmem:[#allocation9 + $0x160] sm:$0xff]
    %v2087 = vld [vmem:[#allocation9 + $0x168] sm:$0xff]
    %v2088 = vld [vmem:[#allocation9 + $0x170] sm:$0xff]
    %v2089 = vld [vmem:[#allocation9 + $0x178] sm:$0xff]
    %v2090 = vld [vmem:[#allocation9 + $0x180] sm:$0xff]
    %v2091 = vld [vmem:[#allocation9 + $0x188] sm:$0xff]
    %v2092 = vld [vmem:[#allocation9 + $0x190] sm:$0xff]
    %v2093 = vld [vmem:[#allocation9 + $0x198] sm:$0xff]
    %v2094 = vld [vmem:[#allocation9 + $0x1a0] sm:$0xff]
    %v2095 = vld [vmem:[#allocation9 + $0x1a8] sm:$0xff]
    %v2096 = vld [vmem:[#allocation9 + $0x1b0] sm:$0xff]
    %v2097 = vld [vmem:[#allocation9 + $0x1b8] sm:$0xff]
    %v2098 = vld [vmem:[#allocation9 + $0x1c0] sm:$0xff]
    %v2099 = vld [vmem:[#allocation9 + $0x1c8] sm:$0xff]
    %v2100 = vld [vmem:[#allocation9 + $0x1d0] sm:$0xff]
    %v2101 = vld [vmem:[#allocation9 + $0x1d8] sm:$0xff]
    %v2102 = vld [vmem:[#allocation9 + $0x1e0] sm:$0xff]
    %v2103 = vld [vmem:[#allocation9 + $0x1e8] sm:$0xff]
    %v2104 = vld [vmem:[#allocation9 + $0x1f0] sm:$0xff]
    %v2105 = vld [vmem:[#allocation9 + $0x1f8] sm:$0xff]
    %v2106 = vld [vmem:[#allocation9 + $0x200] sm:$0xff]
    %v2107 = vld [vmem:[#allocation9 + $0x208] sm:$0xff]
    %v2108 = vld [vmem:[#allocation9 + $0x210] sm:$0xff]
    %v2109 = vld [vmem:[#allocation9 + $0x218] sm:$0xff]
    %v2110 = vld [vmem:[#allocation9 + $0x220] sm:$0xff]
    %v2111 = vld [vmem:[#allocation9 + $0x228] sm:$0xff]
    %v2112 = vld [vmem:[#allocation9 + $0x230] sm:$0xff]
    %v2113 = vld [vmem:[#allocation9 + $0x238] sm:$0xff]
    %v2114 = vld [vmem:[#allocation9 + $0x240] sm:$0xff]
    %v2115 = vld [vmem:[#allocation9 + $0x248] sm:$0xff]
    %v2116 = vld [vmem:[#allocation9 + $0x250] sm:$0xff]
    %v2117 = vld [vmem:[#allocation9 + $0x258] sm:$0xff]
    %v2118 = vld [vmem:[#allocation9 + $0x260] sm:$0xff]
    %v2119 = vld [vmem:[#allocation9 + $0x268] sm:$0xff]
    %v2120 = vld [vmem:[#allocation9 + $0x270] sm:$0xff]
    %v2121 = vld [vmem:[#allocation9 + $0x278] sm:$0xff]
    %v2122 = vld [vmem:[#allocation9 + $0x280] sm:$0xff]
    %v2123 = vld [vmem:[#allocation9 + $0x288] sm:$0xff]
    %v2124 = vld [vmem:[#allocation9 + $0x290] sm:$0xff]
    %v2125 = vld [vmem:[#allocation9 + $0x298] sm:$0xff]
    %v2126 = vld [vmem:[#allocation9 + $0x2a0] sm:$0xff]
    %v2127 = vld [vmem:[#allocation9 + $0x2a8] sm:$0xff]
    %v2128 = vld [vmem:[#allocation9 + $0x2b0] sm:$0xff]
    %v2129 = vld [vmem:[#allocation9 + $0x2b8] sm:$0xff]
    %v2130 = vld [vmem:[#allocation9 + $0x2c0] sm:$0xff]
    %v2131 = vld [vmem:[#allocation9 + $0x2c8] sm:$0xff]
    %v2132 = vld [vmem:[#allocation9 + $0x2d0] sm:$0xff]
    %v2133 = vld [vmem:[#allocation9 + $0x2d8] sm:$0xff]
    %v2134 = vld [vmem:[#allocation9 + $0x2e0] sm:$0xff]
    %v2135 = vld [vmem:[#allocation9 + $0x2e8] sm:$0xff]
    %v2136 = vld [vmem:[#allocation9 + $0x2f0] sm:$0xff]
    %v2137 = vld [vmem:[#allocation9 + $0x2f8] sm:$0xff]
    %2138 = vmatprep.subr.mxu0 %v2043
    %2139 = vmatpush1.msra.mxu0 %v2042
    %2140 = vmatprep.subr.mxu0 %v2045
    %2141 = vmatpush1.msra.mxu0 %v2044
    %2142 = vmatprep.subr.mxu0 %v2047
    %2143 = vmatpush1.msra.mxu0 %v2046
    %2144 = vmatprep.subr.mxu0 %v2049
    %2145 = vmatpush1.msra.mxu0 %v2048
    %2146 = vmatprep.subr.mxu0 %v2051
    %2147 = vmatpush1.msra.mxu0 %v2050
    %2148 = vmatprep.subr.mxu0 %v2053
    %2149 = vmatpush1.msra.mxu0 %v2052
    %2150 = vmatprep.subr.mxu0 %v2055
    %2151 = vmatpush1.msra.mxu0 %v2054
    %2152 = vmatprep.subr.mxu0 %v2057
    %2153 = vmatpush1.msra.mxu0 %v2056
    %2154 = vmatprep.subr.mxu0 %v2059
    %2155 = vmatpush1.msra.mxu0 %v2058
    %2156 = vmatprep.subr.mxu0 %v2061
    %2157 = vmatpush1.msra.mxu0 %v2060
    %2158 = vmatprep.subr.mxu0 %v2063
    %2159 = vmatpush1.msra.mxu0 %v2062
    %2160 = vmatprep.subr.mxu0 %v2065
    %2161 = vmatpush1.msra.mxu0 %v2064
    %2162 = vmatprep.subr.mxu0 %v2067
    %2163 = vmatpush1.msra.mxu0 %v2066
    %2164 = vmatprep.subr.mxu0 %v2069
    %2165 = vmatpush1.msra.mxu0 %v2068
    %2166 = vmatprep.subr.mxu0 %v2071
    %2167 = vmatpush1.msra.mxu0 %v2070
    %2168 = vmatprep.subr.mxu0 %v2073
    %2169 = vmatpush1.msra.mxu0 %v2072
    %2170 = vmatprep.subr.mxu0 %v2075
    %2171 = vmatpush1.msra.mxu0 %v2074
    %2172 = vmatprep.subr.mxu0 %v2077
    %2173 = vmatpush1.msra.mxu0 %v2076
    %2174 = vmatprep.subr.mxu0 %v2079
    %2175 = vmatpush1.msra.mxu0 %v2078
    %2176 = vmatprep.subr.mxu0 %v2081
    %2177 = vmatpush1.msra.mxu0 %v2080
    %2178 = vmatprep.subr.mxu0 %v2083
    %2179 = vmatpush1.msra.mxu0 %v2082
    %2180 = vmatprep.subr.mxu0 %v2085
    %2181 = vmatpush1.msra.mxu0 %v2084
    %2182 = vmatprep.subr.mxu0 %v2087
    %2183 = vmatpush1.msra.mxu0 %v2086
    %2184 = vmatprep.subr.mxu0 %v2089
    %2185 = vmatpush1.msra.mxu0 %v2088
    %2186 = vmatprep.subr.mxu0 %v2091
    %2187 = vmatpush1.msra.mxu0 %v2090
    %2188 = vmatprep.subr.mxu0 %v2093
    %2189 = vmatpush1.msra.mxu0 %v2092
    %2190 = vmatprep.subr.mxu0 %v2095
    %2191 = vmatpush1.msra.mxu0 %v2094
    %2192 = vmatprep.subr.mxu0 %v2097
    %2193 = vmatpush1.msra.mxu0 %v2096
    %2194 = vmatprep.subr.mxu0 %v2099
    %2195 = vmatpush1.msra.mxu0 %v2098
    %2196 = vmatprep.subr.mxu0 %v2101
    %2197 = vmatpush1.msra.mxu0 %v2100
    %2198 = vmatprep.subr.mxu0 %v2103
    %2199 = vmatpush1.msra.mxu0 %v2102
    %2200 = vmatprep.subr.mxu0 %v2105
    %2201 = vmatpush1.msra.mxu0 %v2104
    %2202 = vmatprep.mubr.f32.mxu0 %v2031
    %2203 = vmatmul.mubr.f32.gmra.mrb[0].mxu0 %v2030
    %v2204 = vpop.f32.mrb[0].mxu0
    %v2205 = vadd.f32 0.0, %v2204
    %v2206 = vpop.f32.mrb[0].mxu0
    %v2207 = vadd.f32 0.0, %v2206
    %2208 = vdwg.mxu0
    %2209 = vmatprep.subr.mxu0 %v2107
    %2210 = vmatpush1.msra.mxu0 %v2106
    %2211 = vmatprep.subr.mxu0 %v2109
    %2212 = vmatpush1.msra.mxu0 %v2108
    %2213 = vmatprep.subr.mxu0 %v2111
    %2214 = vmatpush1.msra.mxu0 %v2110
    %2215 = vmatprep.subr.mxu0 %v2113
    %2216 = vmatpush1.msra.mxu0 %v2112
    %2217 = vmatprep.subr.mxu0 %v2115
    %2218 = vmatpush1.msra.mxu0 %v2114
    %2219 = vmatprep.subr.mxu0 %v2117
    %2220 = vmatpush1.msra.mxu0 %v2116
    %2221 = vmatprep.subr.mxu0 %v2119
    %2222 = vmatpush1.msra.mxu0 %v2118
    %2223 = vmatprep.subr.mxu0 %v2121
    %2224 = vmatpush1.msra.mxu0 %v2120
    %2225 = vmatprep.subr.mxu0 %v2123
    %2226 = vmatpush1.msra.mxu0 %v2122
    %2227 = vmatprep.subr.mxu0 %v2125
    %2228 = vmatpush1.msra.mxu0 %v2124
    %2229 = vmatprep.subr.mxu0 %v2127
    %2230 = vmatpush1.msra.mxu0 %v2126
    %2231 = vmatprep.subr.mxu0 %v2129
    %2232 = vmatpush1.msra.mxu0 %v2128
    %2233 = vmatprep.subr.mxu0 %v2131
    %2234 = vmatpush1.msra.mxu0 %v2130
    %2235 = vmatprep.subr.mxu0 %v2133
    %2236 = vmatpush1.msra.mxu0 %v2132
    %2237 = vmatprep.subr.mxu0 %v2135
    %2238 = vmatpush1.msra.mxu0 %v2134
    %2239 = vmatprep.subr.mxu0 %v2137
    %2240 = vmatpush1.msra.mxu0 %v2136
    %2241 = vmatprep.subr.mxu0 0.0
    %2242 = vmatpush1.msra.mxu0 0.0
    %2243 = vmatprep.subr.mxu0 0.0
    %2244 = vmatpush1.msra.mxu0 0.0
    %2245 = vmatprep.subr.mxu0 0.0
    %2246 = vmatpush1.msra.mxu0 0.0
    %2247 = vmatprep.subr.mxu0 0.0
    %2248 = vmatpush1.msra.mxu0 0.0
    %2249 = vmatprep.subr.mxu0 0.0
    %2250 = vmatpush1.msra.mxu0 0.0
    %2251 = vmatprep.subr.mxu0 0.0
    %2252 = vmatpush1.msra.mxu0 0.0
    %2253 = vmatprep.subr.mxu0 0.0
    %2254 = vmatpush1.msra.mxu0 0.0
    %2255 = vmatprep.subr.mxu0 0.0
    %2256 = vmatpush1.msra.mxu0 0.0
    %2257 = vmatprep.subr.mxu0 0.0
    %2258 = vmatpush1.msra.mxu0 0.0
    %2259 = vmatprep.subr.mxu0 0.0
    %2260 = vmatpush1.msra.mxu0 0.0
    %2261 = vmatprep.subr.mxu0 0.0
    %2262 = vmatpush1.msra.mxu0 0.0
    %2263 = vmatprep.subr.mxu0 0.0
    %2264 = vmatpush1.msra.mxu0 0.0
    %2265 = vmatprep.subr.mxu0 0.0
    %2266 = vmatpush1.msra.mxu0 0.0
    %2267 = vmatprep.subr.mxu0 0.0
    %2268 = vmatpush1.msra.mxu0 0.0
    %2269 = vmatprep.subr.mxu0 0.0
    %2270 = vmatpush1.msra.mxu0 0.0
    %2271 = vmatprep.subr.mxu0 0.0
    %2272 = vmatpush1.msra.mxu0 0.0
    %2273 = vmatprep.mubr.f32.mxu0 0.0
    %2274 = vmatmul.mubr.f32.gmra.mrb[0].mxu0 %v2032
    %v2275 = vpop.f32.mrb[0].mxu0
    %v2276 = vadd.f32 %v2205, %v2275
    %v2277 = vpop.f32.mrb[0].mxu0
    %v2278 = vadd.f32 %v2207, %v2277
    %2279 = vdwg.mxu0
    %2280 = vmatprep.subr.mxu0 %v2043
    %2281 = vmatpush1.msra.mxu0 %v2042
    %2282 = vmatprep.subr.mxu0 %v2045
    %2283 = vmatpush1.msra.mxu0 %v2044
    %2284 = vmatprep.subr.mxu0 %v2047
    %2285 = vmatpush1.msra.mxu0 %v2046
    %2286 = vmatprep.subr.mxu0 %v2049
    %2287 = vmatpush1.msra.mxu0 %v2048
    %2288 = vmatprep.subr.mxu0 %v2051
    %2289 = vmatpush1.msra.mxu0 %v2050
    %2290 = vmatprep.subr.mxu0 %v2053
    %2291 = vmatpush1.msra.mxu0 %v2052
    %2292 = vmatprep.subr.mxu0 %v2055
    %2293 = vmatpush1.msra.mxu0 %v2054
    %2294 = vmatprep.subr.mxu0 %v2057
    %2295 = vmatpush1.msra.mxu0 %v2056
    %2296 = vmatprep.subr.mxu0 %v2059
    %2297 = vmatpush1.msra.mxu0 %v2058
    %2298 = vmatprep.subr.mxu0 %v2061
    %2299 = vmatpush1.msra.mxu0 %v2060
    %2300 = vmatprep.subr.mxu0 %v2063
    %2301 = vmatpush1.msra.mxu0 %v2062
    %2302 = vmatprep.subr.mxu0 %v2065
    %2303 = vmatpush1.msra.mxu0 %v2064
    %2304 = vmatprep.subr.mxu0 %v2067
    %2305 = vmatpush1.msra.mxu0 %v2066
    %2306 = vmatprep.subr.mxu0 %v2069
    %2307 = vmatpush1.msra.mxu0 %v2068
    %2308 = vmatprep.subr.mxu0 %v2071
    %2309 = vmatpush1.msra.mxu0 %v2070
    %2310 = vmatprep.subr.mxu0 %v2073
    %2311 = vmatpush1.msra.mxu0 %v2072
    %2312 = vmatprep.subr.mxu0 %v2075
    %2313 = vmatpush1.msra.mxu0 %v2074
    %2314 = vmatprep.subr.mxu0 %v2077
    %2315 = vmatpush1.msra.mxu0 %v2076
    %2316 = vmatprep.subr.mxu0 %v2079
    %2317 = vmatpush1.msra.mxu0 %v2078
    %2318 = vmatprep.subr.mxu0 %v2081
    %2319 = vmatpush1.msra.mxu0 %v2080
    %2320 = vmatprep.subr.mxu0 %v2083
    %2321 = vmatpush1.msra.mxu0 %v2082
    %2322 = vmatprep.subr.mxu0 %v2085
    %2323 = vmatpush1.msra.mxu0 %v2084
    %2324 = vmatprep.subr.mxu0 %v2087
    %2325 = vmatpush1.msra.mxu0 %v2086
    %2326 = vmatprep.subr.mxu0 %v2089
    %2327 = vmatpush1.msra.mxu0 %v2088
    %2328 = vmatprep.subr.mxu0 %v2091
    %2329 = vmatpush1.msra.mxu0 %v2090
    %2330 = vmatprep.subr.mxu0 %v2093
    %2331 = vmatpush1.msra.mxu0 %v2092
    %2332 = vmatprep.subr.mxu0 %v2095
    %2333 = vmatpush1.msra.mxu0 %v2094
    %2334 = vmatprep.subr.mxu0 %v2097
    %2335 = vmatpush1.msra.mxu0 %v2096
    %2336 = vmatprep.subr.mxu0 %v2099
    %2337 = vmatpush1.msra.mxu0 %v2098
    %2338 = vmatprep.subr.mxu0 %v2101
    %2339 = vmatpush1.msra.mxu0 %v2100
    %2340 = vmatprep.subr.mxu0 %v2103
    %2341 = vmatpush1.msra.mxu0 %v2102
    %2342 = vmatprep.subr.mxu0 %v2105
    %2343 = vmatpush1.msra.mxu0 %v2104
    %2344 = vmatprep.mubr.f32.mxu0 %v2040
    %2345 = vmatmul.mubr.f32.gmra.mrb[0].mxu0 %v2039
    %v2346 = vpop.f32.mrb[0].mxu0
    %v2347 = vadd.f32 0.0, %v2346
    %v2348 = vpop.f32.mrb[0].mxu0
    %v2349 = vadd.f32 0.0, %v2348
    %2350 = vdwg.mxu0
    %2351 = vmatprep.subr.mxu0 %v2107
    %2352 = vmatpush1.msra.mxu0 %v2106
    %2353 = vmatprep.subr.mxu0 %v2109
    %2354 = vmatpush1.msra.mxu0 %v2108
    %2355 = vmatprep.subr.mxu0 %v2111
    %2356 = vmatpush1.msra.mxu0 %v2110
    %2357 = vmatprep.subr.mxu0 %v2113
    %2358 = vmatpush1.msra.mxu0 %v2112
    %2359 = vmatprep.subr.mxu0 %v2115
    %2360 = vmatpush1.msra.mxu0 %v2114
    %2361 = vmatprep.subr.mxu0 %v2117
    %2362 = vmatpush1.msra.mxu0 %v2116
    %2363 = vmatprep.subr.mxu0 %v2119
    %2364 = vmatpush1.msra.mxu0 %v2118
    %2365 = vmatprep.subr.mxu0 %v2121
    %2366 = vmatpush1.msra.mxu0 %v2120
    %2367 = vmatprep.subr.mxu0 %v2123
    %2368 = vmatpush1.msra.mxu0 %v2122
    %2369 = vmatprep.subr.mxu0 %v2125
    %2370 = vmatpush1.msra.mxu0 %v2124
    %2371 = vmatprep.subr.mxu0 %v2127
    %2372 = vmatpush1.msra.mxu0 %v2126
    %2373 = vmatprep.subr.mxu0 %v2129
    %2374 = vmatpush1.msra.mxu0 %v2128
    %2375 = vmatprep.subr.mxu0 %v2131
    %2376 = vmatpush1.msra.mxu0 %v2130
    %2377 = vmatprep.subr.mxu0 %v2133
    %2378 = vmatpush1.msra.mxu0 %v2132
    %2379 = vmatprep.subr.mxu0 %v2135
    %2380 = vmatpush1.msra.mxu0 %v2134
    %2381 = vmatprep.subr.mxu0 %v2137
    %2382 = vmatpush1.msra.mxu0 %v2136
    %2383 = vmatprep.subr.mxu0 0.0
    %2384 = vmatpush1.msra.mxu0 0.0
    %2385 = vmatprep.subr.mxu0 0.0
    %2386 = vmatpush1.msra.mxu0 0.0
    %2387 = vmatprep.subr.mxu0 0.0
    %2388 = vmatpush1.msra.mxu0 0.0
    %2389 = vmatprep.subr.mxu0 0.0
    %2390 = vmatpush1.msra.mxu0 0.0
    %2391 = vmatprep.subr.mxu0 0.0
    %2392 = vmatpush1.msra.mxu0 0.0
    %2393 = vmatprep.subr.mxu0 0.0
    %2394 = vmatpush1.msra.mxu0 0.0
    %2395 = vmatprep.subr.mxu0 0.0
    %2396 = vmatpush1.msra.mxu0 0.0
    %2397 = vmatprep.subr.mxu0 0.0
    %2398 = vmatpush1.msra.mxu0 0.0
    %2399 = vmatprep.subr.mxu0 0.0
    %2400 = vmatpush1.msra.mxu0 0.0
    %2401 = vmatprep.subr.mxu0 0.0
    %2402 = vmatpush1.msra.mxu0 0.0
    %2403 = vmatprep.subr.mxu0 0.0
    %2404 = vmatpush1.msra.mxu0 0.0
    %2405 = vmatprep.subr.mxu0 0.0
    %2406 = vmatpush1.msra.mxu0 0.0
    %2407 = vmatprep.subr.mxu0 0.0
    %2408 = vmatpush1.msra.mxu0 0.0
    %2409 = vmatprep.subr.mxu0 0.0
    %2410 = vmatpush1.msra.mxu0 0.0
    %2411 = vmatprep.subr.mxu0 0.0
    %2412 = vmatpush1.msra.mxu0 0.0
    %2413 = vmatprep.subr.mxu0 0.0
    %2414 = vmatpush1.msra.mxu0 0.0
    %2415 = vmatprep.mubr.f32.mxu0 0.0
    %2416 = vmatmul.mubr.f32.gmra.mrb[0].mxu0 %v2041
    %v2417 = vpop.f32.mrb[0].mxu0
    %v2418 = vadd.f32 %v2347, %v2417
    %v2419 = vpop.f32.mrb[0].mxu0
    %v2420 = vadd.f32 %v2349, %v2419
    %2421 = vdwg.mxu0
    %v2422 = vld [vmem:[#allocation10 + $0x4] ss:$0 sm:$0xff]
    %v2423 = vrot.slane %v2420, 1
    %v2424 = vadd.f32 %v2276, %v2423
    %v2425 = vadd.f32 %v2424, %v2422
    %v2426 = vxor.u32 %v2425, 2147483648
    %v2427 = vmul.f32 %v2426, 1.442695
    %v2428 = vpow.pop %v2427
    %v2429 = vadd.f32 %v2428, 1.0
    %v2430 = vrcp.pop %v2429
    %v2431 = vmul.f32 1.0, %v2430
    %2432 = vst [vmem:[%s8] sm:$0xff] %v2431
    %v2433 = vadd.f32 %v2418, %v2278
    %v2434 = vrot.slane %v2433, 1
    %v2435 = vadd.f32 %v2434, %v2422
    %v2436 = vxor.u32 %v2435, 2147483648
    %v2437 = vmul.f32 %v2436, 1.442695
    %v2438 = vpow.pop %v2437
    %v2439 = vadd.f32 %v2438, 1.0
    %v2440 = vrcp.pop %v2439
    %v2441 = vmul.f32 1.0, %v2440
    %2442 = vst [vmem:[%s8 + $0x8] sm:$0xff] %v2441
    // Predicated region
    $region58: #{net4group4_forward.1} parent=1 // pred_check
      _
    $region59: #{net4group4_forward.1} parent=1 // pred_check_branch
      %2444 = sbr.rel (0) target = $region61
    $region60: #{net4group4_forward.1} parent=1 // pred_region
      _
    $region61: #{net4group4_forward.1} parent=1 // pred_fallthru
      _
    // Predicated region
    $region62: #{net4group4_forward.1} parent=1 // pred_check
      _
    $region63: #{net4group4_forward.1} parent=1 // pred_check_branch
      %2446 = sbr.rel (0) target = $region65
    $region64: #{net4group4_forward.1} parent=1 // pred_region
      _
    $region65: #{net4group4_forward.1} parent=1 // pred_fallthru
      _
    %2447 = vsyncpa [#allocation3], 1
    %2448 = vsyncpa [#allocation5], 1
    %2449 = vsyncpa [#allocation8], 1
    %2450 = vsyncpa [#allocation11], 1

</llo_original>
